<compile_context>
chip_gen: v7x
topology: tpu7x:2x2x1
jax: 0.10.0
libtpu: 0.0.40
codegen_flags: <defaults>
</compile_context>

<pallas_src>
import functools

import jax
import jax.numpy as jnp
import numpy as np
from jax.experimental import pallas as pl
from jax.experimental.pallas import tpu as pltpu


# ----------------------------- shared helpers ------------------------------

def _layer_norm(x, gamma, beta, eps=1e-5):
    # torch.nn.LayerNorm: biased variance, eps inside the sqrt.
    mu = jnp.mean(x, axis=-1, keepdims=True)
    var = jnp.mean((x - mu) ** 2, axis=-1, keepdims=True)
    return (x - mu) * jax.lax.rsqrt(var + eps) * gamma + beta


# ----------------------- fused MHA + FFN Pallas kernel ----------------------

def fft_block_kernel(len_ref,                                    # SMEM (B,) int32
                     x_ref,
                     wqkv_ref, bqkv_ref, wfc_ref, bfc_ref,
                     g1_ref, be1_ref,
                     w1_ref, b1_ref, w2_ref, b2_ref, g2_ref, be2_ref,
                     *rest,
                     d_k, d_v, k1, pad1, padup, store_attn):
    if store_attn:
        out_ref, attn_ref, o_acc_ref, xpad_ref = rest
    else:
        out_ref, o_acc_ref, xpad_ref = rest
        attn_ref = None

    f32, bf16 = jnp.float32, jnp.bfloat16
    b = pl.program_id(0)
    h = pl.program_id(1)
    n_head = pl.num_programs(1)

    L = len_ref[b]                                  # true valid length
    Lk = jnp.maximum(L, 1)                          # guard L==0 (all keys masked -> NaN);
                                                    # rows >= L are zeroed by npm below.

    x = x_ref[0]                                    # (SP, D) f32
    SP, D = x.shape
    x16 = x.astype(bf16)

    key_pos = jax.lax.broadcasted_iota(jnp.int32, (SP, SP), 1)
    key_masked = key_pos >= Lk                      # (SP, SP) key-padding mask

    # ---- this head's attention: fused Q|K|V projection (one matmul, N = 2dk+dv) ----
    qkv = jnp.dot(x16, wqkv_ref[0], preferred_element_type=f32) + bqkv_ref[0]
    qh = qkv[:, :d_k]                               # 1/sqrt(d_k) pre-folded into Q cols
    kh = qkv[:, d_k:2 * d_k]
    vh = qkv[:, 2 * d_k:2 * d_k + d_v]

    s = jax.lax.dot_general(qh.astype(bf16), kh.astype(bf16),
                            dimension_numbers=(((1,), (1,)), ((), ())),
                            preferred_element_type=f32)          # (SP, SP)
    s = jnp.where(key_masked, -jnp.inf, s)
    m = jnp.max(s, axis=-1, keepdims=True)
    e = jnp.exp(s - m)
    p = e * pl.reciprocal(jnp.sum(e, axis=-1, keepdims=True), approx=True)
    if store_attn:
        attn_ref[0, 0] = p.astype(attn_ref.dtype)                # bf16 writeback

    head = jnp.dot(p.astype(bf16), vh.astype(bf16),
                   preferred_element_type=f32)                   # (SP, d_v)
    proj = jnp.dot(head.astype(bf16), wfc_ref[0],
                   preferred_element_type=f32)                   # (SP, D)
    # TODO(synk): fold all heads into one K=H*d_v out-projection matmul (needs all
    # head outputs live at once, which conflicts with the head grid axis).

    @pl.when(h == 0)
    def _():
        o_acc_ref[...] = jnp.zeros_like(o_acc_ref)
    o_acc_ref[...] += proj

    # ---- last head: +bias, residual, LayerNorm, non-pad mask, then the FFN ----
    @pl.when(h == n_head - 1)
    def _():
        row_pos = jax.lax.broadcasted_iota(jnp.int32, (SP, 1), 0)
        npm = (row_pos < L).astype(f32)                          # non-pad mask (SP,1)

        o = _layer_norm(o_acc_ref[...] + bfc_ref[0] + x, g1_ref[0], be1_ref[0])
        o = o * npm                                              # *= non_pad_mask

        # conv k1 'same': write o at an 8-aligned row offset into a zero-padded
        # VMEM scratch; taps are accumulated matmuls (no (SP,k1*D) im2col buffer,
        # no k1-way lane concatenate).
        zpad = jnp.zeros((padup, D), f32)
        xpad_ref[0:padup, :] = zpad
        xpad_ref[padup + SP:padup + SP + padup, :] = zpad
        xpad_ref[pl.ds(padup, SP), :] = o

        d_inner = w1_ref.shape[2]
        acc = jnp.zeros((SP, d_inner), f32)
        for t in range(k1):                                      # k1 static taps
            xt = xpad_ref[pl.ds(padup - pad1 + t, SP), :]
            acc = acc + jnp.dot(xt.astype(bf16), w1_ref[t],
                                preferred_element_type=f32)
        h1 = jnp.maximum(acc + b1_ref[0], 0.0)                   # ReLU

        # second conv has kernel_size = 1 (canonical FastSpeech) -> plain matmul.
        # TODO(synk): generalize second conv to kernel_size > 1 (needs extra taps).
        y = jnp.dot(h1.astype(bf16), w2_ref[...], preferred_element_type=f32) + b2_ref[0]
        y = _layer_norm(y + o, g2_ref[0], be2_ref[0])
        out_ref[0] = y * npm                                     # *= non_pad_mask


# ------------------------------ python wrapper ------------------------------

def init_params(key, d_model, d_inner, n_head, d_k, d_v, k1, k2):
    """PyTorch-layout parameters (same layout as the nn.Module weights)."""
    assert k2 == 1, "second conv kernel must be 1 (FastSpeech default)"
    ks = jax.random.split(key, 12)
    n = lambda k, shape, s=0.05: (s * jax.random.normal(k, shape)).astype(jnp.float32)
    return dict(
        wq=n(ks[0], (d_model, n_head * d_k)), bq=n(ks[1], (1, n_head * d_k)),
        wk=n(ks[2], (d_model, n_head * d_k)), bk=n(ks[3], (1, n_head * d_k)),
        wv=n(ks[4], (d_model, n_head * d_v)), bv=n(ks[5], (1, n_head * d_v)),
        wfc=n(ks[6], (n_head * d_v, d_model)), bfc=n(ks[7], (1, d_model)),
        ln1_g=jnp.ones((1, d_model), jnp.float32), ln1_b=jnp.zeros((1, d_model), jnp.float32),
        w1=n(ks[8], (k1, d_model, d_inner)), b1=n(ks[9], (1, d_inner)),
        w2=n(ks[10], (d_inner, d_model)), b2=n(ks[11], (1, d_model)),
        ln2_g=jnp.ones((1, d_model), jnp.float32), ln2_b=jnp.zeros((1, d_model), jnp.float32),
    )


def prepare_params(p, *, n_head, d_k, d_v, k1):
    """Kernel-friendly layout: per-head fused bf16 Q|K|V weights (temperature
    folded into the Q columns), head-major out-projection, per-tap conv weights.
    Pure wrapper-side transform, done once."""
    D = p["wq"].shape[0]
    bf16, f32 = jnp.bfloat16, jnp.float32
    inv_t = jnp.float32(1.0 / np.sqrt(d_k))

    def head_major(w, dh):                       # (D, H*dh) -> (H, D, dh)
        return jnp.transpose(w.reshape(D, n_head, dh), (1, 0, 2))

    wq = head_major(p["wq"], d_k) * inv_t
    wk = head_major(p["wk"], d_k)
    wv = head_major(p["wv"], d_v)
    bq = p["bq"].reshape(n_head, 1, d_k) * inv_t
    bk = p["bk"].reshape(n_head, 1, d_k)
    bv = p["bv"].reshape(n_head, 1, d_v)

    return dict(
        wqkv=jnp.concatenate([wq, wk, wv], axis=-1).astype(bf16),   # (H, D, 2dk+dv)
        bqkv=jnp.concatenate([bq, bk, bv], axis=-1).astype(f32),    # (H, 1, 2dk+dv)
        wfc=p["wfc"].reshape(n_head, d_v, D).astype(bf16),          # (H, d_v, D)
        bfc=p["bfc"].astype(f32),
        ln1_g=p["ln1_g"].astype(f32), ln1_b=p["ln1_b"].astype(f32),
        w1=p["w1"].astype(bf16),                                    # (k1, D, d_inner)
        b1=p["b1"].astype(f32),
        w2=p["w2"].astype(bf16),
        b2=p["b2"].astype(f32),
        ln2_g=p["ln2_g"].astype(f32), ln2_b=p["ln2_b"].astype(f32),
    )


def _vmem_limit_bytes():
    # Re-derive per generation: ~56 MiB on v7x (64 MiB physical), ~112 MiB on
    # v5e/v6e (128 MiB physical).  Fallback keeps us safe on unknown targets.
    try:
        cap = int(pltpu.get_tpu_info().vmem_capacity_bytes)
    except Exception:
        cap = 64 * 1024 * 1024
    return max(32 * 1024 * 1024, min(cap - 8 * 1024 * 1024, 112 * 1024 * 1024))


def fft_block_forward(enc_input, prepared, lengths, *, n_head, d_k, d_v, k1, pad1,
                      return_attn=True):
    B, S, D = enc_input.shape
    H = n_head
    d_inner = prepared["w1"].shape[2]
    qkv_w = 2 * d_k + d_v
    padup = 8                                     # conv pad region rounded to 8 rows
    assert pad1 <= padup

    # Pad sequence dim to a lane-dense multiple of 128 (masked via lengths).
    SP = int(pl.cdiv(S, 128)) * 128
    x_p = jnp.pad(enc_input, ((0, 0), (0, SP - S), (0, 0)))

    def bcast(shape):
        nd = len(shape)
        return pl.BlockSpec(shape, lambda b, h, lens, _nd=nd: (0,) * _nd)

    # NOTE: constant-weight specs would benefit from pipeline_mode=pl.Buffered(1)
    # (they are never refetched); left at the default for lowering safety here.
    in_specs = [
        pl.BlockSpec((1, SP, D), lambda b, h, lens: (b, 0, 0)),       # enc_input
        pl.BlockSpec((1, D, qkv_w), lambda b, h, lens: (h, 0, 0)),    # fused wqkv (per head)
        pl.BlockSpec((1, 1, qkv_w), lambda b, h, lens: (h, 0, 0)),    # fused bqkv
        pl.BlockSpec((1, d_v, D), lambda b, h, lens: (h, 0, 0)),      # wfc (per head)
        bcast((1, D)),                                                # bfc
        bcast((1, D)), bcast((1, D)),                                 # ln1 gamma/beta
        bcast((k1, D, d_inner)), bcast((1, d_inner)),                 # conv1 w/b (per tap)
        bcast((d_inner, D)), bcast((1, D)),                           # conv2 w/b
        bcast((1, D)), bcast((1, D)),                                 # ln2 gamma/beta
    ]

    out_spec_y = pl.BlockSpec((1, SP, D), lambda b, h, lens: (b, 0, 0))
    out_shape_y = jax.ShapeDtypeStruct((B, SP, D), jnp.float32)
    if return_attn:
        out_specs = (out_spec_y,
                     pl.BlockSpec((1, 1, SP, SP), lambda b, h, lens: (h, b, 0, 0)))
        out_shape = (out_shape_y,
                     jax.ShapeDtypeStruct((H, B, SP, SP), jnp.bfloat16))   # bf16 attn
    else:
        out_specs = out_spec_y
        out_shape = out_shape_y

    # TODO(synk): add a query-tile grid axis with online softmax for production
    # SP >= 1024 so the (SP,SP) temporaries fit v7x's 64 MiB VMEM.
    grid_spec = pltpu.PrefetchScalarGridSpec(
        num_scalar_prefetch=1,                    # lengths -> SMEM
        grid=(B, H),
        in_specs=in_specs,
        out_specs=out_specs,
        scratch_shapes=[
            pltpu.VMEM((SP, D), jnp.float32),                # o_acc across heads
            pltpu.VMEM((SP + 2 * padup, D), jnp.float32),    # 8-aligned conv pad buffer
        ],
    )

    call = pl.pallas_call(
        functools.partial(fft_block_kernel, d_k=d_k, d_v=d_v, k1=k1, pad1=pad1,
                          padup=padup, store_attn=return_attn),
        grid_spec=grid_spec,
        out_shape=out_shape,
        compiler_params=pltpu.CompilerParams(
            dimension_semantics=("parallel", "arbitrary"),
            vmem_limit_bytes=_vmem_limit_bytes()),
    )

    args = (lengths.astype(jnp.int32), x_p,
            prepared["wqkv"], prepared["bqkv"], prepared["wfc"], prepared["bfc"],
            prepared["ln1_g"], prepared["ln1_b"],
            prepared["w1"], prepared["b1"], prepared["w2"], prepared["b2"],
            prepared["ln2_g"], prepared["ln2_b"])

    if return_attn:
        enc_out_p, attn_p = call(*args)
        enc_out = enc_out_p[:, :S, :]
        attn = attn_p[:, :, :S, :S].astype(jnp.float32).reshape(H * B, S, S)
        return enc_out, attn
    enc_out_p = call(*args)
    return enc_out_p[:, :S, :], None


# ------------------------- pure-JAX reference (check) -----------------------

def ref_forward(x, p, lengths, *, n_head, d_k, d_v, k1, pad1):
    B, S, D = x.shape
    f32, bf16 = jnp.float32, jnp.bfloat16
    pos = jnp.arange(S)
    key_masked = pos[None, None, :] >= lengths[:, None, None]          # (B,1,S)
    npm = (pos[None, :] < lengths[:, None]).astype(f32)[..., None]     # (B,S,1)
    x16 = x.astype(bf16)

    attn_heads = []
    o_acc = jnp.zeros((B, S, D), f32)
    for h in range(n_head):
        qkv = jnp.einsum("bsd,de->bse", x16, p["wqkv"][h],
                         preferred_element_type=f32) + p["bqkv"][h]
        qh = qkv[..., :d_k]
        kh = qkv[..., d_k:2 * d_k]
        vh = qkv[..., 2 * d_k:2 * d_k + d_v]
        s = jnp.einsum("bqe,bke->bqk", qh.astype(bf16), kh.astype(bf16),
                       preferred_element_type=f32)
        s = jnp.where(key_masked, -jnp.inf, s)
        a = jax.nn.softmax(s, axis=-1)
        attn_heads.append(a)
        head = jnp.einsum("bqk,bke->bqe", a.astype(bf16), vh.astype(bf16),
                          preferred_element_type=f32)
        o_acc = o_acc + jnp.einsum("bqe,ed->bqd", head.astype(bf16), p["wfc"][h],
                                   preferred_element_type=f32)
    o = _layer_norm(o_acc + p["bfc"][0] + x, p["ln1_g"][0], p["ln1_b"][0]) * npm

    xp = jnp.pad(o, ((0, 0), (pad1, pad1), (0, 0)))
    h1 = jnp.zeros((B, S, p["w1"].shape[2]), f32)
    for t in range(k1):
        h1 = h1 + jnp.einsum("bsd,df->bsf", xp[:, t:t + S, :].astype(bf16), p["w1"][t],
                             preferred_element_type=f32)
    h1 = jnp.maximum(h1 + p["b1"][0], 0.0)
    y = jnp.einsum("bsf,fd->bsd", h1.astype(bf16), p["w2"],
                   preferred_element_type=f32) + p["b2"][0]
    y = _layer_norm(y + o, p["ln2_g"][0], p["ln2_b"][0]) * npm

    attn = jnp.stack(attn_heads, axis=0).reshape(n_head * B, S, S)
    return y, attn


# ----------------------------------- main -----------------------------------

if __name__ == "__main__":
    B, S = 2, 8
    d_model, d_inner = 32, 64
    n_head, d_k, d_v = 2, 16, 16
    fft_conv1d_kernel = (9, 1)
    fft_conv1d_padding = (4, 0)
    k1, pad1 = fft_conv1d_kernel[0], fft_conv1d_padding[0]

    key = jax.random.PRNGKey(0)
    k_in, k_par = jax.random.split(key)
    enc_input = jax.random.normal(k_in, (B, S, d_model), jnp.float32)
    raw_params = init_params(k_par, d_model, d_inner, n_head, d_k, d_v,
                             fft_conv1d_kernel[0], fft_conv1d_kernel[1])
    prepared = prepare_params(raw_params, n_head=n_head, d_k=d_k, d_v=d_v, k1=k1)

    # per-batch valid lengths; masks are built from these (no dense masks shipped)
    lengths = jnp.array([S, S - 2], jnp.int32)

    enc_out, attn = fft_block_forward(enc_input, prepared, lengths,
                                      n_head=n_head, d_k=d_k, d_v=d_v,
                                      k1=k1, pad1=pad1, return_attn=True)
    jax.block_until_ready((enc_out, attn))

    ref_out, ref_attn = ref_forward(enc_input, prepared, lengths,
                                    n_head=n_head, d_k=d_k, d_v=d_v, k1=k1, pad1=pad1)

    np.testing.assert_allclose(np.asarray(enc_out), np.asarray(ref_out),
                               atol=5e-3, rtol=5e-3)
    # attn is stored in bf16 (plus approx reciprocal), so slightly looser check.
    np.testing.assert_allclose(np.asarray(attn), np.asarray(ref_attn),
                               atol=1e-2, rtol=1e-2)

    # attn-free fast path: skips the (H, B, SP, SP) writeback entirely.
    enc_out2, _ = fft_block_forward(enc_input, prepared, lengths,
                                    n_head=n_head, d_k=d_k, d_v=d_v,
                                    k1=k1, pad1=pad1, return_attn=False)
    jax.block_until_ready(enc_out2)
    np.testing.assert_allclose(np.asarray(enc_out2), np.asarray(ref_out),
                               atol=5e-3, rtol=5e-3)

    print("KERNEL_OK")
</pallas_src>

<mosaic_0001>
module attributes {stable_mosaic.version = 11 : i64} {
  func.func @fft_block_kernel(%arg0: i32, %arg1: i32, %arg2: memref<2xi32, #tpu.memory_space<smem>>, %arg3: memref<1x128x32xf32, #tpu.memory_space<vmem>>, %arg4: memref<1x32x48xbf16, #tpu.memory_space<vmem>>, %arg5: memref<1x1x48xf32, #tpu.memory_space<vmem>>, %arg6: memref<1x16x32xbf16, #tpu.memory_space<vmem>>, %arg7: memref<1x32xf32, #tpu.memory_space<vmem>>, %arg8: memref<1x32xf32, #tpu.memory_space<vmem>>, %arg9: memref<1x32xf32, #tpu.memory_space<vmem>>, %arg10: memref<9x32x64xbf16, #tpu.memory_space<vmem>>, %arg11: memref<1x64xf32, #tpu.memory_space<vmem>>, %arg12: memref<64x32xbf16, #tpu.memory_space<vmem>>, %arg13: memref<1x32xf32, #tpu.memory_space<vmem>>, %arg14: memref<1x32xf32, #tpu.memory_space<vmem>>, %arg15: memref<1x32xf32, #tpu.memory_space<vmem>>, %arg16: memref<1x128x32xf32, #tpu.memory_space<vmem>>, %arg17: memref<1x1x128x128xbf16, #tpu.memory_space<vmem>>, %arg18: memref<128x32xf32, #tpu.memory_space<vmem>>, %arg19: memref<144x32xf32, #tpu.memory_space<vmem>>) attributes {dimension_semantics = [#tpu.dimension_semantics<parallel>, #tpu.dimension_semantics<arbitrary>], iteration_bounds = array<i64: 2, 2>, scalar_prefetch = 1 : i64, scratch_operands = 2 : i64, tpu.core_type = #tpu.core_type<tc>, window_params = [{transform_indices = @transform_0, window_bounds = array<i64: 1, 128, 32>}, {transform_indices = @transform_1, window_bounds = array<i64: 1, 32, 48>}, {transform_indices = @transform_2, window_bounds = array<i64: 1, 1, 48>}, {transform_indices = @transform_3, window_bounds = array<i64: 1, 16, 32>}, {pipeline_mode = #tpu.pipeline_mode<synchronous>, transform_indices = @transform_4, window_bounds = array<i64: 1, 32>}, {pipeline_mode = #tpu.pipeline_mode<synchronous>, transform_indices = @transform_5, window_bounds = array<i64: 1, 32>}, {pipeline_mode = #tpu.pipeline_mode<synchronous>, transform_indices = @transform_6, window_bounds = array<i64: 1, 32>}, {pipeline_mode = #tpu.pipeline_mode<synchronous>, transform_indices = @transform_7, window_bounds = array<i64: 9, 32, 64>}, {pipeline_mode = #tpu.pipeline_mode<synchronous>, transform_indices = @transform_8, window_bounds = array<i64: 1, 64>}, {pipeline_mode = #tpu.pipeline_mode<synchronous>, transform_indices = @transform_9, window_bounds = array<i64: 64, 32>}, {pipeline_mode = #tpu.pipeline_mode<synchronous>, transform_indices = @transform_10, window_bounds = array<i64: 1, 32>}, {pipeline_mode = #tpu.pipeline_mode<synchronous>, transform_indices = @transform_11, window_bounds = array<i64: 1, 32>}, {pipeline_mode = #tpu.pipeline_mode<synchronous>, transform_indices = @transform_12, window_bounds = array<i64: 1, 32>}, {transform_indices = @transform_13, window_bounds = array<i64: 1, 128, 32>}, {transform_indices = @transform_14, window_bounds = array<i64: 1, 1, 128, 128>}]} {
    %0 = arith.index_cast %arg0 : i32 to index
    %1 = memref.load %arg2[%0] : memref<2xi32, #tpu.memory_space<smem>>
    %c1_i32 = arith.constant 1 : i32
    %2 = arith.maxsi %1, %c1_i32 : i32
    %c0 = arith.constant 0 : index
    %c0_0 = arith.constant 0 : index
    %c0_1 = arith.constant 0 : index
    %3 = vector.load %arg3[%c0, %c0_0, %c0_1] : memref<1x128x32xf32, #tpu.memory_space<vmem>>, vector<1x128x32xf32>
    %4 = vector.shape_cast %3 : vector<1x128x32xf32> to vector<128x32xf32>
    %5 = arith.truncf %4 : vector<128x32xf32> to vector<128x32xbf16>
    %6 = tpu.iota {dimensions = array<i32: 1>} : vector<128x128xi32>
    %7 = vector.broadcast %2 : i32 to vector<128x128xi32>
    %8 = arith.cmpi sge, %6, %7 : vector<128x128xi32>
    %c0_2 = arith.constant 0 : index
    %c0_3 = arith.constant 0 : index
    %c0_4 = arith.constant 0 : index
    %9 = vector.load %arg4[%c0_2, %c0_3, %c0_4] : memref<1x32x48xbf16, #tpu.memory_space<vmem>>, vector<1x32x48xbf16>
    %10 = vector.shape_cast %9 : vector<1x32x48xbf16> to vector<32x48xbf16>
    %cst = arith.constant dense<0.000000e+00> : vector<128x48xf32>
    %11 = tpu.matmul %5, %10, %cst {dimension_numbers = #tpu.dot_dimension_numbers<[1], [0], [0], [1], [0, 0, 1, 1], [], []>} : vector<128x32xbf16>, vector<32x48xbf16>, vector<128x48xf32> -> vector<128x48xf32>
    %c0_5 = arith.constant 0 : index
    %c0_6 = arith.constant 0 : index
    %c0_7 = arith.constant 0 : index
    %12 = vector.load %arg5[%c0_5, %c0_6, %c0_7] : memref<1x1x48xf32, #tpu.memory_space<vmem>>, vector<1x1x48xf32>
    %13 = vector.shape_cast %12 : vector<1x1x48xf32> to vector<1x48xf32>
    %14 = vector.broadcast %13 : vector<1x48xf32> to vector<128x48xf32>
    %15 = arith.addf %11, %14 : vector<128x48xf32>
    %16 = vector.extract_strided_slice %15 {offsets = [0, 0], sizes = [128, 16], strides = [1, 1]} : vector<128x48xf32> to vector<128x16xf32>
    %17 = vector.extract_strided_slice %15 {offsets = [0, 16], sizes = [128, 16], strides = [1, 1]} : vector<128x48xf32> to vector<128x16xf32>
    %18 = vector.extract_strided_slice %15 {offsets = [0, 32], sizes = [128, 16], strides = [1, 1]} : vector<128x48xf32> to vector<128x16xf32>
    %19 = arith.truncf %16 : vector<128x16xf32> to vector<128x16xbf16>
    %20 = arith.truncf %17 : vector<128x16xf32> to vector<128x16xbf16>
    %cst_8 = arith.constant dense<0.000000e+00> : vector<128x128xf32>
    %21 = tpu.matmul %19, %20, %cst_8 {dimension_numbers = #tpu.dot_dimension_numbers<[1], [1], [0], [0], [0, 0, 1, 0], [], []>} : vector<128x16xbf16>, vector<128x16xbf16>, vector<128x128xf32> -> vector<128x128xf32>
    %cst_9 = arith.constant 0xFF800000 : f32
    %22 = vector.broadcast %cst_9 : f32 to vector<128x128xf32>
    %23 = arith.select %8, %22, %21 : vector<128x128xi1>, vector<128x128xf32>
    %cst_10 = arith.constant dense<0xFF800000> : vector<128xf32>
    %24 = vector.multi_reduction <maximumf>, %23, %cst_10 [1] : vector<128x128xf32> to vector<128xf32>
    %25 = vector.shape_cast %24 : vector<128xf32> to vector<128x1xf32>
    %26 = vector.broadcast %25 : vector<128x1xf32> to vector<128x128xf32>
    %27 = arith.subf %23, %26 : vector<128x128xf32>
    %28 = math.exp %27 : vector<128x128xf32>
    %cst_11 = arith.constant dense<0.000000e+00> : vector<128xf32>
    %29 = vector.multi_reduction <add>, %28, %cst_11 [1] : vector<128x128xf32> to vector<128xf32>
    %30 = vector.shape_cast %29 : vector<128xf32> to vector<128x1xf32>
    %31 = tpu.reciprocal %30 {approx = true} : vector<128x1xf32> -> vector<128x1xf32>
    %32 = vector.broadcast %31 : vector<128x1xf32> to vector<128x128xf32>
    %33 = arith.mulf %28, %32 : vector<128x128xf32>
    %34 = arith.truncf %33 : vector<128x128xf32> to vector<128x128xbf16>
    %c0_12 = arith.constant 0 : index
    %c0_13 = arith.constant 0 : index
    %c0_14 = arith.constant 0 : index
    %c0_15 = arith.constant 0 : index
    %35 = vector.load %arg17[%c0_12, %c0_13, %c0_14, %c0_15] : memref<1x1x128x128xbf16, #tpu.memory_space<vmem>>, vector<1x1x128x128xbf16>
    %36 = vector.shape_cast %35 : vector<1x1x128x128xbf16> to vector<128x128xbf16>
    %37 = vector.shape_cast %34 : vector<128x128xbf16> to vector<1x1x128x128xbf16>
    tpu.vector_store %arg17[%c0_12, %c0_13, %c0_14, %c0_15], %37 {strides = array<i32>} : memref<1x1x128x128xbf16, #tpu.memory_space<vmem>>, vector<1x1x128x128xbf16>,
    %38 = arith.truncf %33 : vector<128x128xf32> to vector<128x128xbf16>
    %39 = arith.truncf %18 : vector<128x16xf32> to vector<128x16xbf16>
    %cst_16 = arith.constant dense<0.000000e+00> : vector<128x16xf32>
    %40 = tpu.matmul %38, %39, %cst_16 {dimension_numbers = #tpu.dot_dimension_numbers<[1], [0], [0], [1], [0, 0, 1, 1], [], []>} : vector<128x128xbf16>, vector<128x16xbf16>, vector<128x16xf32> -> vector<128x16xf32>
    %41 = arith.truncf %40 : vector<128x16xf32> to vector<128x16xbf16>
    %c0_17 = arith.constant 0 : index
    %c0_18 = arith.constant 0 : index
    %c0_19 = arith.constant 0 : index
    %42 = vector.load %arg6[%c0_17, %c0_18, %c0_19] : memref<1x16x32xbf16, #tpu.memory_space<vmem>>, vector<1x16x32xbf16>
    %43 = vector.shape_cast %42 : vector<1x16x32xbf16> to vector<16x32xbf16>
    %cst_20 = arith.constant dense<0.000000e+00> : vector<128x32xf32>
    %44 = tpu.matmul %41, %43, %cst_20 {dimension_numbers = #tpu.dot_dimension_numbers<[1], [0], [0], [1], [0, 0, 1, 1], [], []>} : vector<128x16xbf16>, vector<16x32xbf16>, vector<128x32xf32> -> vector<128x32xf32>
    %c0_i32 = arith.constant 0 : i32
    %45 = arith.cmpi eq, %arg1, %c0_i32 : i32
    %46 = arith.extui %45 : i1 to i32
    %c0_i32_21 = arith.constant 0 : i32
    %47 = arith.cmpi ne, %46, %c0_i32_21 : i32
    scf.if %47 {
      %cst_28 = arith.constant 0.000000e+00 : f32
      %54 = vector.broadcast %cst_28 : f32 to vector<128x32xf32>
      %c0_29 = arith.constant 0 : index
      %c0_30 = arith.constant 0 : index
      %55 = vector.load %arg18[%c0_29, %c0_30] : memref<128x32xf32, #tpu.memory_space<vmem>>, vector<128x32xf32>
      tpu.vector_store %arg18[%c0_29, %c0_30], %54 {strides = array<i32>} : memref<128x32xf32, #tpu.memory_space<vmem>>, vector<128x32xf32>,
    } else {
    }
    %c0_22 = arith.constant 0 : index
    %c0_23 = arith.constant 0 : index
    %48 = vector.load %arg18[%c0_22, %c0_23] : memref<128x32xf32, #tpu.memory_space<vmem>>, vector<128x32xf32>
    %49 = arith.addf %48, %44 : vector<128x32xf32>
    %c0_24 = arith.constant 0 : index
    %c0_25 = arith.constant 0 : index
    %50 = vector.load %arg18[%c0_24, %c0_25] : memref<128x32xf32, #tpu.memory_space<vmem>>, vector<128x32xf32>
    tpu.vector_store %arg18[%c0_24, %c0_25], %49 {strides = array<i32>} : memref<128x32xf32, #tpu.memory_space<vmem>>, vector<128x32xf32>,
    %c1_i32_26 = arith.constant 1 : i32
    %51 = arith.cmpi eq, %arg1, %c1_i32_26 : i32
    %52 = arith.extui %51 : i1 to i32
    %c0_i32_27 = arith.constant 0 : i32
    %53 = arith.cmpi ne, %52, %c0_i32_27 : i32
    scf.if %53 {
      %54 = tpu.iota {dimensions = array<i32: 0>} : vector<128x1xi32>
      %55 = vector.broadcast %1 : i32 to vector<128x1xi32>
      %56 = arith.cmpi slt, %54, %55 : vector<128x1xi32>
      %57 = arith.extui %56 : vector<128x1xi1> to vector<128x1xi32>
      %58 = arith.sitofp %57 : vector<128x1xi32> to vector<128x1xf32>
      %c0_28 = arith.constant 0 : index
      %c0_29 = arith.constant 0 : index
      %59 = vector.load %arg18[%c0_28, %c0_29] : memref<128x32xf32, #tpu.memory_space<vmem>>, vector<128x32xf32>
      %c0_30 = arith.constant 0 : index
      %c0_31 = arith.constant 0 : index
      %60 = vector.load %arg7[%c0_30, %c0_31] : memref<1x32xf32, #tpu.memory_space<vmem>>, vector<1x32xf32>
      %61 = vector.shape_cast %60 : vector<1x32xf32> to vector<32xf32>
      %62 = vector.shape_cast %61 : vector<32xf32> to vector<1x32xf32>
      %63 = vector.broadcast %62 : vector<1x32xf32> to vector<128x32xf32>
      %64 = arith.addf %59, %63 : vector<128x32xf32>
      %65 = arith.addf %64, %4 : vector<128x32xf32>
      %c0_32 = arith.constant 0 : index
      %c0_33 = arith.constant 0 : index
      %66 = vector.load %arg8[%c0_32, %c0_33] : memref<1x32xf32, #tpu.memory_space<vmem>>, vector<1x32xf32>
      %67 = vector.shape_cast %66 : vector<1x32xf32> to vector<32xf32>
      %c0_34 = arith.constant 0 : index
      %c0_35 = arith.constant 0 : index
      %68 = vector.load %arg9[%c0_34, %c0_35] : memref<1x32xf32, #tpu.memory_space<vmem>>, vector<1x32xf32>
      %69 = vector.shape_cast %68 : vector<1x32xf32> to vector<32xf32>
      %cst_36 = arith.constant dense<0.000000e+00> : vector<128xf32>
      %70 = vector.multi_reduction <add>, %65, %cst_36 [1] : vector<128x32xf32> to vector<128xf32>
      %71 = vector.shape_cast %70 : vector<128xf32> to vector<128x1xf32>
      %cst_37 = arith.constant 3.200000e+01 : f32
      %72 = vector.broadcast %cst_37 : f32 to vector<128x1xf32>
      %73 = arith.divf %71, %72 : vector<128x1xf32>
      %74 = vector.broadcast %73 : vector<128x1xf32> to vector<128x32xf32>
      %75 = arith.subf %65, %74 : vector<128x32xf32>
      %76 = arith.mulf %75, %75 : vector<128x32xf32>
      %cst_38 = arith.constant dense<0.000000e+00> : vector<128xf32>
      %77 = vector.multi_reduction <add>, %76, %cst_38 [1] : vector<128x32xf32> to vector<128xf32>
      %78 = vector.shape_cast %77 : vector<128xf32> to vector<128x1xf32>
      %cst_39 = arith.constant 3.200000e+01 : f32
      %79 = vector.broadcast %cst_39 : f32 to vector<128x1xf32>
      %80 = arith.divf %78, %79 : vector<128x1xf32>
      %81 = vector.broadcast %73 : vector<128x1xf32> to vector<128x32xf32>
      %82 = arith.subf %65, %81 : vector<128x32xf32>
      %cst_40 = arith.constant 9.99999974E-6 : f32
      %83 = vector.broadcast %cst_40 : f32 to vector<128x1xf32>
      %84 = arith.addf %80, %83 : vector<128x1xf32>
      %85 = math.rsqrt %84 : vector<128x1xf32>
      %86 = vector.broadcast %85 : vector<128x1xf32> to vector<128x32xf32>
      %87 = arith.mulf %82, %86 : vector<128x32xf32>
      %88 = vector.shape_cast %67 : vector<32xf32> to vector<1x32xf32>
      %89 = vector.broadcast %88 : vector<1x32xf32> to vector<128x32xf32>
      %90 = arith.mulf %87, %89 : vector<128x32xf32>
      %91 = vector.shape_cast %69 : vector<32xf32> to vector<1x32xf32>
      %92 = vector.broadcast %91 : vector<1x32xf32> to vector<128x32xf32>
      %93 = arith.addf %90, %92 : vector<128x32xf32>
      %94 = vector.broadcast %58 : vector<128x1xf32> to vector<128x32xf32>
      %95 = arith.mulf %93, %94 : vector<128x32xf32>
      %cst_41 = arith.constant 0.000000e+00 : f32
      %96 = vector.broadcast %cst_41 : f32 to vector<8x32xf32>
      %c0_42 = arith.constant 0 : index
      %c0_43 = arith.constant 0 : index
      %97 = vector.load %arg19[%c0_42, %c0_43] : memref<144x32xf32, #tpu.memory_space<vmem>>, vector<8x32xf32>
      tpu.vector_store %arg19[%c0_42, %c0_43], %96 {strides = array<i32>} : memref<144x32xf32, #tpu.memory_space<vmem>>, vector<8x32xf32>,
      %c136 = arith.constant 136 : index
      %c0_44 = arith.constant 0 : index
      %98 = vector.load %arg19[%c136, %c0_44] : memref<144x32xf32, #tpu.memory_space<vmem>>, vector<8x32xf32>
      tpu.vector_store %arg19[%c136, %c0_44], %96 {strides = array<i32>} : memref<144x32xf32, #tpu.memory_space<vmem>>, vector<8x32xf32>,
      %c8 = arith.constant 8 : index
      %c0_45 = arith.constant 0 : index
      %99 = vector.load %arg19[%c8, %c0_45] : memref<144x32xf32, #tpu.memory_space<vmem>>, vector<128x32xf32>
      tpu.vector_store %arg19[%c8, %c0_45], %95 {strides = array<i32>} : memref<144x32xf32, #tpu.memory_space<vmem>>, vector<128x32xf32>,
      %cst_46 = arith.constant 0.000000e+00 : f32
      %100 = vector.broadcast %cst_46 : f32 to vector<128x64xf32>
      %c4 = arith.constant 4 : index
      %c0_47 = arith.constant 0 : index
      %101 = vector.load %arg19[%c4, %c0_47] : memref<144x32xf32, #tpu.memory_space<vmem>>, vector<128x32xf32>
      %102 = arith.truncf %101 : vector<128x32xf32> to vector<128x32xbf16>
      %c0_48 = arith.constant 0 : index
      %c0_49 = arith.constant 0 : index
      %c0_50 = arith.constant 0 : index
      %103 = vector.load %arg10[%c0_48, %c0_49, %c0_50] : memref<9x32x64xbf16, #tpu.memory_space<vmem>>, vector<1x32x64xbf16>
      %104 = vector.shape_cast %103 : vector<1x32x64xbf16> to vector<32x64xbf16>
      %cst_51 = arith.constant dense<0.000000e+00> : vector<128x64xf32>
      %105 = tpu.matmul %102, %104, %cst_51 {dimension_numbers = #tpu.dot_dimension_numbers<[1], [0], [0], [1], [0, 0, 1, 1], [], []>} : vector<128x32xbf16>, vector<32x64xbf16>, vector<128x64xf32> -> vector<128x64xf32>
      %106 = arith.addf %100, %105 : vector<128x64xf32>
      %c5 = arith.constant 5 : index
      %c0_52 = arith.constant 0 : index
      %107 = vector.load %arg19[%c5, %c0_52] : memref<144x32xf32, #tpu.memory_space<vmem>>, vector<128x32xf32>
      %108 = arith.truncf %107 : vector<128x32xf32> to vector<128x32xbf16>
      %c1 = arith.constant 1 : index
      %c0_53 = arith.constant 0 : index
      %c0_54 = arith.constant 0 : index
      %109 = vector.load %arg10[%c1, %c0_53, %c0_54] : memref<9x32x64xbf16, #tpu.memory_space<vmem>>, vector<1x32x64xbf16>
      %110 = vector.shape_cast %109 : vector<1x32x64xbf16> to vector<32x64xbf16>
      %cst_55 = arith.constant dense<0.000000e+00> : vector<128x64xf32>
      %111 = tpu.matmul %108, %110, %cst_55 {dimension_numbers = #tpu.dot_dimension_numbers<[1], [0], [0], [1], [0, 0, 1, 1], [], []>} : vector<128x32xbf16>, vector<32x64xbf16>, vector<128x64xf32> -> vector<128x64xf32>
      %112 = arith.addf %106, %111 : vector<128x64xf32>
      %c6 = arith.constant 6 : index
      %c0_56 = arith.constant 0 : index
      %113 = vector.load %arg19[%c6, %c0_56] : memref<144x32xf32, #tpu.memory_space<vmem>>, vector<128x32xf32>
      %114 = arith.truncf %113 : vector<128x32xf32> to vector<128x32xbf16>
      %c2 = arith.constant 2 : index
      %c0_57 = arith.constant 0 : index
      %c0_58 = arith.constant 0 : index
      %115 = vector.load %arg10[%c2, %c0_57, %c0_58] : memref<9x32x64xbf16, #tpu.memory_space<vmem>>, vector<1x32x64xbf16>
      %116 = vector.shape_cast %115 : vector<1x32x64xbf16> to vector<32x64xbf16>
      %cst_59 = arith.constant dense<0.000000e+00> : vector<128x64xf32>
      %117 = tpu.matmul %114, %116, %cst_59 {dimension_numbers = #tpu.dot_dimension_numbers<[1], [0], [0], [1], [0, 0, 1, 1], [], []>} : vector<128x32xbf16>, vector<32x64xbf16>, vector<128x64xf32> -> vector<128x64xf32>
      %118 = arith.addf %112, %117 : vector<128x64xf32>
      %c7 = arith.constant 7 : index
      %c0_60 = arith.constant 0 : index
      %119 = vector.load %arg19[%c7, %c0_60] : memref<144x32xf32, #tpu.memory_space<vmem>>, vector<128x32xf32>
      %120 = arith.truncf %119 : vector<128x32xf32> to vector<128x32xbf16>
      %c3 = arith.constant 3 : index
      %c0_61 = arith.constant 0 : index
      %c0_62 = arith.constant 0 : index
      %121 = vector.load %arg10[%c3, %c0_61, %c0_62] : memref<9x32x64xbf16, #tpu.memory_space<vmem>>, vector<1x32x64xbf16>
      %122 = vector.shape_cast %121 : vector<1x32x64xbf16> to vector<32x64xbf16>
      %cst_63 = arith.constant dense<0.000000e+00> : vector<128x64xf32>
      %123 = tpu.matmul %120, %122, %cst_63 {dimension_numbers = #tpu.dot_dimension_numbers<[1], [0], [0], [1], [0, 0, 1, 1], [], []>} : vector<128x32xbf16>, vector<32x64xbf16>, vector<128x64xf32> -> vector<128x64xf32>
      %124 = arith.addf %118, %123 : vector<128x64xf32>
      %c8_64 = arith.constant 8 : index
      %c0_65 = arith.constant 0 : index
      %125 = vector.load %arg19[%c8_64, %c0_65] : memref<144x32xf32, #tpu.memory_space<vmem>>, vector<128x32xf32>
      %126 = arith.truncf %125 : vector<128x32xf32> to vector<128x32xbf16>
      %c4_66 = arith.constant 4 : index
      %c0_67 = arith.constant 0 : index
      %c0_68 = arith.constant 0 : index
      %127 = vector.load %arg10[%c4_66, %c0_67, %c0_68] : memref<9x32x64xbf16, #tpu.memory_space<vmem>>, vector<1x32x64xbf16>
      %128 = vector.shape_cast %127 : vector<1x32x64xbf16> to vector<32x64xbf16>
      %cst_69 = arith.constant dense<0.000000e+00> : vector<128x64xf32>
      %129 = tpu.matmul %126, %128, %cst_69 {dimension_numbers = #tpu.dot_dimension_numbers<[1], [0], [0], [1], [0, 0, 1, 1], [], []>} : vector<128x32xbf16>, vector<32x64xbf16>, vector<128x64xf32> -> vector<128x64xf32>
      %130 = arith.addf %124, %129 : vector<128x64xf32>
      %c9 = arith.constant 9 : index
      %c0_70 = arith.constant 0 : index
      %131 = vector.load %arg19[%c9, %c0_70] : memref<144x32xf32, #tpu.memory_space<vmem>>, vector<128x32xf32>
      %132 = arith.truncf %131 : vector<128x32xf32> to vector<128x32xbf16>
      %c5_71 = arith.constant 5 : index
      %c0_72 = arith.constant 0 : index
      %c0_73 = arith.constant 0 : index
      %133 = vector.load %arg10[%c5_71, %c0_72, %c0_73] : memref<9x32x64xbf16, #tpu.memory_space<vmem>>, vector<1x32x64xbf16>
      %134 = vector.shape_cast %133 : vector<1x32x64xbf16> to vector<32x64xbf16>
      %cst_74 = arith.constant dense<0.000000e+00> : vector<128x64xf32>
      %135 = tpu.matmul %132, %134, %cst_74 {dimension_numbers = #tpu.dot_dimension_numbers<[1], [0], [0], [1], [0, 0, 1, 1], [], []>} : vector<128x32xbf16>, vector<32x64xbf16>, vector<128x64xf32> -> vector<128x64xf32>
      %136 = arith.addf %130, %135 : vector<128x64xf32>
      %c10 = arith.constant 10 : index
      %c0_75 = arith.constant 0 : index
      %137 = vector.load %arg19[%c10, %c0_75] : memref<144x32xf32, #tpu.memory_space<vmem>>, vector<128x32xf32>
      %138 = arith.truncf %137 : vector<128x32xf32> to vector<128x32xbf16>
      %c6_76 = arith.constant 6 : index
      %c0_77 = arith.constant 0 : index
      %c0_78 = arith.constant 0 : index
      %139 = vector.load %arg10[%c6_76, %c0_77, %c0_78] : memref<9x32x64xbf16, #tpu.memory_space<vmem>>, vector<1x32x64xbf16>
      %140 = vector.shape_cast %139 : vector<1x32x64xbf16> to vector<32x64xbf16>
      %cst_79 = arith.constant dense<0.000000e+00> : vector<128x64xf32>
      %141 = tpu.matmul %138, %140, %cst_79 {dimension_numbers = #tpu.dot_dimension_numbers<[1], [0], [0], [1], [0, 0, 1, 1], [], []>} : vector<128x32xbf16>, vector<32x64xbf16>, vector<128x64xf32> -> vector<128x64xf32>
      %142 = arith.addf %136, %141 : vector<128x64xf32>
      %c11 = arith.constant 11 : index
      %c0_80 = arith.constant 0 : index
      %143 = vector.load %arg19[%c11, %c0_80] : memref<144x32xf32, #tpu.memory_space<vmem>>, vector<128x32xf32>
      %144 = arith.truncf %143 : vector<128x32xf32> to vector<128x32xbf16>
      %c7_81 = arith.constant 7 : index
      %c0_82 = arith.constant 0 : index
      %c0_83 = arith.constant 0 : index
      %145 = vector.load %arg10[%c7_81, %c0_82, %c0_83] : memref<9x32x64xbf16, #tpu.memory_space<vmem>>, vector<1x32x64xbf16>
      %146 = vector.shape_cast %145 : vector<1x32x64xbf16> to vector<32x64xbf16>
      %cst_84 = arith.constant dense<0.000000e+00> : vector<128x64xf32>
      %147 = tpu.matmul %144, %146, %cst_84 {dimension_numbers = #tpu.dot_dimension_numbers<[1], [0], [0], [1], [0, 0, 1, 1], [], []>} : vector<128x32xbf16>, vector<32x64xbf16>, vector<128x64xf32> -> vector<128x64xf32>
      %148 = arith.addf %142, %147 : vector<128x64xf32>
      %c12 = arith.constant 12 : index
      %c0_85 = arith.constant 0 : index
      %149 = vector.load %arg19[%c12, %c0_85] : memref<144x32xf32, #tpu.memory_space<vmem>>, vector<128x32xf32>
      %150 = arith.truncf %149 : vector<128x32xf32> to vector<128x32xbf16>
      %c8_86 = arith.constant 8 : index
      %c0_87 = arith.constant 0 : index
      %c0_88 = arith.constant 0 : index
      %151 = vector.load %arg10[%c8_86, %c0_87, %c0_88] : memref<9x32x64xbf16, #tpu.memory_space<vmem>>, vector<1x32x64xbf16>
      %152 = vector.shape_cast %151 : vector<1x32x64xbf16> to vector<32x64xbf16>
      %cst_89 = arith.constant dense<0.000000e+00> : vector<128x64xf32>
      %153 = tpu.matmul %150, %152, %cst_89 {dimension_numbers = #tpu.dot_dimension_numbers<[1], [0], [0], [1], [0, 0, 1, 1], [], []>} : vector<128x32xbf16>, vector<32x64xbf16>, vector<128x64xf32> -> vector<128x64xf32>
      %154 = arith.addf %148, %153 : vector<128x64xf32>
      %c0_90 = arith.constant 0 : index
      %c0_91 = arith.constant 0 : index
      %155 = vector.load %arg11[%c0_90, %c0_91] : memref<1x64xf32, #tpu.memory_space<vmem>>, vector<1x64xf32>
      %156 = vector.shape_cast %155 : vector<1x64xf32> to vector<64xf32>
      %157 = vector.shape_cast %156 : vector<64xf32> to vector<1x64xf32>
      %158 = vector.broadcast %157 : vector<1x64xf32> to vector<128x64xf32>
      %159 = arith.addf %154, %158 : vector<128x64xf32>
      %cst_92 = arith.constant 0.000000e+00 : f32
      %160 = vector.broadcast %cst_92 : f32 to vector<128x64xf32>
      %161 = arith.maximumf %159, %160 : vector<128x64xf32>
      %162 = arith.truncf %161 : vector<128x64xf32> to vector<128x64xbf16>
      %c0_93 = arith.constant 0 : index
      %c0_94 = arith.constant 0 : index
      %163 = vector.load %arg12[%c0_93, %c0_94] : memref<64x32xbf16, #tpu.memory_space<vmem>>, vector<64x32xbf16>
      %cst_95 = arith.constant dense<0.000000e+00> : vector<128x32xf32>
      %164 = tpu.matmul %162, %163, %cst_95 {dimension_numbers = #tpu.dot_dimension_numbers<[1], [0], [0], [1], [0, 0, 1, 1], [], []>} : vector<128x64xbf16>, vector<64x32xbf16>, vector<128x32xf32> -> vector<128x32xf32>
      %c0_96 = arith.constant 0 : index
      %c0_97 = arith.constant 0 : index
      %165 = vector.load %arg13[%c0_96, %c0_97] : memref<1x32xf32, #tpu.memory_space<vmem>>, vector<1x32xf32>
      %166 = vector.shape_cast %165 : vector<1x32xf32> to vector<32xf32>
      %167 = vector.shape_cast %166 : vector<32xf32> to vector<1x32xf32>
      %168 = vector.broadcast %167 : vector<1x32xf32> to vector<128x32xf32>
      %169 = arith.addf %164, %168 : vector<128x32xf32>
      %170 = arith.addf %169, %95 : vector<128x32xf32>
      %c0_98 = arith.constant 0 : index
      %c0_99 = arith.constant 0 : index
      %171 = vector.load %arg14[%c0_98, %c0_99] : memref<1x32xf32, #tpu.memory_space<vmem>>, vector<1x32xf32>
      %172 = vector.shape_cast %171 : vector<1x32xf32> to vector<32xf32>
      %c0_100 = arith.constant 0 : index
      %c0_101 = arith.constant 0 : index
      %173 = vector.load %arg15[%c0_100, %c0_101] : memref<1x32xf32, #tpu.memory_space<vmem>>, vector<1x32xf32>
      %174 = vector.shape_cast %173 : vector<1x32xf32> to vector<32xf32>
      %cst_102 = arith.constant dense<0.000000e+00> : vector<128xf32>
      %175 = vector.multi_reduction <add>, %170, %cst_102 [1] : vector<128x32xf32> to vector<128xf32>
      %176 = vector.shape_cast %175 : vector<128xf32> to vector<128x1xf32>
      %cst_103 = arith.constant 3.200000e+01 : f32
      %177 = vector.broadcast %cst_103 : f32 to vector<128x1xf32>
      %178 = arith.divf %176, %177 : vector<128x1xf32>
      %179 = vector.broadcast %178 : vector<128x1xf32> to vector<128x32xf32>
      %180 = arith.subf %170, %179 : vector<128x32xf32>
      %181 = arith.mulf %180, %180 : vector<128x32xf32>
      %cst_104 = arith.constant dense<0.000000e+00> : vector<128xf32>
      %182 = vector.multi_reduction <add>, %181, %cst_104 [1] : vector<128x32xf32> to vector<128xf32>
      %183 = vector.shape_cast %182 : vector<128xf32> to vector<128x1xf32>
      %cst_105 = arith.constant 3.200000e+01 : f32
      %184 = vector.broadcast %cst_105 : f32 to vector<128x1xf32>
      %185 = arith.divf %183, %184 : vector<128x1xf32>
      %186 = vector.broadcast %178 : vector<128x1xf32> to vector<128x32xf32>
      %187 = arith.subf %170, %186 : vector<128x32xf32>
      %cst_106 = arith.constant 9.99999974E-6 : f32
      %188 = vector.broadcast %cst_106 : f32 to vector<128x1xf32>
      %189 = arith.addf %185, %188 : vector<128x1xf32>
      %190 = math.rsqrt %189 : vector<128x1xf32>
      %191 = vector.broadcast %190 : vector<128x1xf32> to vector<128x32xf32>
      %192 = arith.mulf %187, %191 : vector<128x32xf32>
      %193 = vector.shape_cast %172 : vector<32xf32> to vector<1x32xf32>
      %194 = vector.broadcast %193 : vector<1x32xf32> to vector<128x32xf32>
      %195 = arith.mulf %192, %194 : vector<128x32xf32>
      %196 = vector.shape_cast %174 : vector<32xf32> to vector<1x32xf32>
      %197 = vector.broadcast %196 : vector<1x32xf32> to vector<128x32xf32>
      %198 = arith.addf %195, %197 : vector<128x32xf32>
      %199 = vector.broadcast %58 : vector<128x1xf32> to vector<128x32xf32>
      %200 = arith.mulf %198, %199 : vector<128x32xf32>
      %c0_107 = arith.constant 0 : index
      %c0_108 = arith.constant 0 : index
      %c0_109 = arith.constant 0 : index
      %201 = vector.load %arg16[%c0_107, %c0_108, %c0_109] : memref<1x128x32xf32, #tpu.memory_space<vmem>>, vector<1x128x32xf32>
      %202 = vector.shape_cast %201 : vector<1x128x32xf32> to vector<128x32xf32>
      %203 = vector.shape_cast %200 : vector<128x32xf32> to vector<1x128x32xf32>
      tpu.vector_store %arg16[%c0_107, %c0_108, %c0_109], %203 {strides = array<i32>} : memref<1x128x32xf32, #tpu.memory_space<vmem>>, vector<1x128x32xf32>,
    } else {
    }
    return
  }
  func.func @transform_0(%arg0: i32, %arg1: i32, %arg2: memref<2xi32, #tpu.memory_space<smem>>) -> (i32, i32, i32) {
    %c0_i32 = arith.constant 0 : i32
    %c0_i32_0 = arith.constant 0 : i32
    %c0_i32_1 = arith.constant 0 : i32
    return %arg0, %c0_i32, %c0_i32_0 : i32, i32, i32
  }
  func.func @transform_1(%arg0: i32, %arg1: i32, %arg2: memref<2xi32, #tpu.memory_space<smem>>) -> (i32, i32, i32) {
    %c0_i32 = arith.constant 0 : i32
    %c0_i32_0 = arith.constant 0 : i32
    %c0_i32_1 = arith.constant 0 : i32
    return %arg1, %c0_i32, %c0_i32_0 : i32, i32, i32
  }
  func.func @transform_2(%arg0: i32, %arg1: i32, %arg2: memref<2xi32, #tpu.memory_space<smem>>) -> (i32, i32, i32) {
    %c0_i32 = arith.constant 0 : i32
    %c0_i32_0 = arith.constant 0 : i32
    %c0_i32_1 = arith.constant 0 : i32
    return %arg1, %c0_i32, %c0_i32_0 : i32, i32, i32
  }
  func.func @transform_3(%arg0: i32, %arg1: i32, %arg2: memref<2xi32, #tpu.memory_space<smem>>) -> (i32, i32, i32) {
    %c0_i32 = arith.constant 0 : i32
    %c0_i32_0 = arith.constant 0 : i32
    %c0_i32_1 = arith.constant 0 : i32
    return %arg1, %c0_i32, %c0_i32_0 : i32, i32, i32
  }
  func.func @transform_4(%arg0: i32, %arg1: i32, %arg2: memref<2xi32, #tpu.memory_space<smem>>) -> (i32, i32) {
    %c0_i32 = arith.constant 0 : i32
    %c0_i32_0 = arith.constant 0 : i32
    %c0_i32_1 = arith.constant 0 : i32
    return %c0_i32, %c0_i32_0 : i32, i32
  }
  func.func @transform_5(%arg0: i32, %arg1: i32, %arg2: memref<2xi32, #tpu.memory_space<smem>>) -> (i32, i32) {
    %c0_i32 = arith.constant 0 : i32
    %c0_i32_0 = arith.constant 0 : i32
    %c0_i32_1 = arith.constant 0 : i32
    return %c0_i32, %c0_i32_0 : i32, i32
  }
  func.func @transform_6(%arg0: i32, %arg1: i32, %arg2: memref<2xi32, #tpu.memory_space<smem>>) -> (i32, i32) {
    %c0_i32 = arith.constant 0 : i32
    %c0_i32_0 = arith.constant 0 : i32
    %c0_i32_1 = arith.constant 0 : i32
    return %c0_i32, %c0_i32_0 : i32, i32
  }
  func.func @transform_7(%arg0: i32, %arg1: i32, %arg2: memref<2xi32, #tpu.memory_space<smem>>) -> (i32, i32, i32) {
    %c0_i32 = arith.constant 0 : i32
    %c0_i32_0 = arith.constant 0 : i32
    %c0_i32_1 = arith.constant 0 : i32
    %c0_i32_2 = arith.constant 0 : i32
    return %c0_i32, %c0_i32_0, %c0_i32_1 : i32, i32, i32
  }
  func.func @transform_8(%arg0: i32, %arg1: i32, %arg2: memref<2xi32, #tpu.memory_space<smem>>) -> (i32, i32) {
    %c0_i32 = arith.constant 0 : i32
    %c0_i32_0 = arith.constant 0 : i32
    %c0_i32_1 = arith.constant 0 : i32
    return %c0_i32, %c0_i32_0 : i32, i32
  }
  func.func @transform_9(%arg0: i32, %arg1: i32, %arg2: memref<2xi32, #tpu.memory_space<smem>>) -> (i32, i32) {
    %c0_i32 = arith.constant 0 : i32
    %c0_i32_0 = arith.constant 0 : i32
    %c0_i32_1 = arith.constant 0 : i32
    return %c0_i32, %c0_i32_0 : i32, i32
  }
  func.func @transform_10(%arg0: i32, %arg1: i32, %arg2: memref<2xi32, #tpu.memory_space<smem>>) -> (i32, i32) {
    %c0_i32 = arith.constant 0 : i32
    %c0_i32_0 = arith.constant 0 : i32
    %c0_i32_1 = arith.constant 0 : i32
    return %c0_i32, %c0_i32_0 : i32, i32
  }
  func.func @transform_11(%arg0: i32, %arg1: i32, %arg2: memref<2xi32, #tpu.memory_space<smem>>) -> (i32, i32) {
    %c0_i32 = arith.constant 0 : i32
    %c0_i32_0 = arith.constant 0 : i32
    %c0_i32_1 = arith.constant 0 : i32
    return %c0_i32, %c0_i32_0 : i32, i32
  }
  func.func @transform_12(%arg0: i32, %arg1: i32, %arg2: memref<2xi32, #tpu.memory_space<smem>>) -> (i32, i32) {
    %c0_i32 = arith.constant 0 : i32
    %c0_i32_0 = arith.constant 0 : i32
    %c0_i32_1 = arith.constant 0 : i32
    return %c0_i32, %c0_i32_0 : i32, i32
  }
  func.func @transform_13(%arg0: i32, %arg1: i32, %arg2: memref<2xi32, #tpu.memory_space<smem>>) -> (i32, i32, i32) {
    %c0_i32 = arith.constant 0 : i32
    %c0_i32_0 = arith.constant 0 : i32
    %c0_i32_1 = arith.constant 0 : i32
    return %arg0, %c0_i32, %c0_i32_0 : i32, i32, i32
  }
  func.func @transform_14(%arg0: i32, %arg1: i32, %arg2: memref<2xi32, #tpu.memory_space<smem>>) -> (i32, i32, i32, i32) {
    %c0_i32 = arith.constant 0 : i32
    %c0_i32_0 = arith.constant 0 : i32
    %c0_i32_1 = arith.constant 0 : i32
    return %arg1, %arg0, %c0_i32, %c0_i32_0 : i32, i32, i32, i32
  }
}

</mosaic_0001>

<llo_original>
// kernel: tpu_custom_call.1
$region0: #{tpu_custom_call.1}
  #allocation0 [shape = 'u32[]', space=smem, size = 0x4, offset = 0x4, fixed_abs, tag = 'smem constant byte address 0x4 - core index']
  #allocation1 [shape = 'u32[144,128]{1,0:T(1,128)}', space=vmem, size = 0x12000, scoped, tag = 'internal scratch']
  #allocation2 [shape = 'f32[128,32]{1,0:T(8,128)}', space=vmem, size = 0x10000, scoped, tag = 'scratch operand']
  #allocation3 [shape = 'f32[144,32]{1,0:T(8,128)}', space=vmem, size = 0x12000, scoped, tag = 'scratch operand']
  #allocation4 [shape = 's32[1]{0}', space=sflag, size = 0x4, scoped, tag = 'scoped memory for tpu_custom_call.1']
  #allocation5 [shape = 'u8[512]{0}', space=smem, size = 0x200, scoped, tag = 'prefetched SMEM operand 0']
  %s0 = inlined_call_operand.vmem [shape: s32[2], index: 0, kind: input, shape index: {}]
  %s1 = inlined_call_operand.vmem [shape: f32[2,128,32], index: 1, kind: input, shape index: {}]
  %s2 = inlined_call_operand.vmem [shape: bf16[2,32,48], index: 2, kind: input, shape index: {}]
  %s3 = inlined_call_operand.vmem [shape: f32[2,1,48], index: 3, kind: input, shape index: {}]
  %s4 = inlined_call_operand.vmem [shape: bf16[2,16,32], index: 4, kind: input, shape index: {}]
  %s5 = inlined_call_operand.vmem [shape: f32[1,32], index: 5, kind: input, shape index: {}]
  %s6 = inlined_call_operand.vmem [shape: f32[1,32], index: 6, kind: input, shape index: {}]
  %s7 = inlined_call_operand.vmem [shape: f32[1,32], index: 7, kind: input, shape index: {}]
  %s8 = inlined_call_operand.vmem [shape: bf16[9,32,64], index: 8, kind: input, shape index: {}]
  %s9 = inlined_call_operand.vmem [shape: f32[1,64], index: 9, kind: input, shape index: {}]
  %s10 = inlined_call_operand.vmem [shape: bf16[64,32], index: 10, kind: input, shape index: {}]
  %s11 = inlined_call_operand.vmem [shape: f32[1,32], index: 11, kind: input, shape index: {}]
  %s12 = inlined_call_operand.vmem [shape: f32[1,32], index: 12, kind: input, shape index: {}]
  %s13 = inlined_call_operand.vmem [shape: f32[1,32], index: 13, kind: input, shape index: {}]
  %s14 = inlined_call_operand.vmem [shape: f32[2,128,32], index: 14, kind: output, shape index: {0}]
  %s15 = inlined_call_operand.hbm [shape: bf16[2,2,128,128], index: 15, kind: output, shape index: {1}]
  %16 = xla_tuple %s14, %s15
  %s17 = sld [smem:[#allocation0]]
  $region101: #{tpu_custom_call.1} parent=0
    _
  %s19 = ssub.s32 1, %s17
  %s20 = scalar_select 0, %s19, %s17
  %s21 = sshll.u32 %s0, 4
  %s22 = int_to_ptr.vmem [resolvable:$true] %s21
  %24 = dma.vmem_to_smem %s22, 16, [#allocation5], [#allocation4]
  %25 = dma.done [#allocation4], 16
  %26 = sfence
  $region1: #{tpu_custom_call.1} parent=0
    #allocation6 [shape = 'u8[65536]{0}', space=vmem, size = 0x10000, scoped, tag = 'output window, operand 1']
    #allocation7 [shape = 's32[2]{0}', space=sflag, size = 0x8, scoped, tag = 'scoped memory for tpu_custom_call.1']
    %27 = vsyncpa [#allocation7], 0
    %s28 = scalar_lea.sflag [#allocation7], 1
    %29 = vsyncpa %s28, 0
    loop: start=0, step=1, limit=6
    $region2: #{tpu_custom_call.1} parent=1 // loop_pre_header
      _
    $region3: #{tpu_custom_call.1} parent=1 // loop_header
      %s31 = sphi 0, %s35
      %p32 = scmp.ge.s32.totalorder %s31, 6
      %s38 = sphi 0, %s50
      %s39 = sphi 0, %s46
      %s40 = sphi 0, %s38
      %s41 = sphi 0, %s39
      %s42 = sphi 0, %s40
      %s43 = sphi 0, %s41
      %s53 = sphi 0, %s55
      %s56 = sphi 0, %s53
      %s57 = sphi 0, %s56
      %s73 = sphi 0, %s57
      %s79 = sphi 0, %s81
      %s82 = sphi 0, %s79
      %s83 = sphi 0, %s82
      %s99 = sphi 0, %s83
      %s105 = sphi 0, %s107
      %s108 = sphi 0, %s105
      %s109 = sphi 0, %s108
      %s125 = sphi 0, %s109
      %s131 = sphi 0, %s133
      %s134 = sphi 0, %s131
      %s135 = sphi 0, %s134
      %s151 = sphi 0, %s135
      %s155 = sphi 0, %s155
      %s157 = sphi 0, %s155
      %s158 = sphi 0, %s157
      %s172 = sphi 0, %s158
      %s176 = sphi 0, %s176
      %s178 = sphi 0, %s176
      %s179 = sphi 0, %s178
      %s193 = sphi 0, %s179
      %s197 = sphi 0, %s197
      %s199 = sphi 0, %s197
      %s200 = sphi 0, %s199
      %s214 = sphi 0, %s200
      %s218 = sphi 0, %s218
      %s220 = sphi 0, %s218
      %s221 = sphi 0, %s220
      %s235 = sphi 0, %s221
      %s239 = sphi 0, %s239
      %s241 = sphi 0, %s239
      %s242 = sphi 0, %s241
      %s256 = sphi 0, %s242
      %s260 = sphi 0, %s260
      %s262 = sphi 0, %s260
      %s263 = sphi 0, %s262
      %s277 = sphi 0, %s263
      %s281 = sphi 0, %s281
      %s283 = sphi 0, %s281
      %s284 = sphi 0, %s283
      %s298 = sphi 0, %s284
      %s302 = sphi 0, %s302
      %s304 = sphi 0, %s302
      %s305 = sphi 0, %s304
      %s319 = sphi 0, %s305
      %s323 = sphi 0, %s323
      %s325 = sphi 0, %s323
      %s326 = sphi 0, %s325
      %s340 = sphi 0, %s326
      %s346 = sphi 0, %s348
      %s349 = sphi 0, %s346
      %s350 = sphi 0, %s349
      %s366 = sphi 0, %s350
      %s374 = sphi 0, %s376
      %s377 = sphi 0, %s374
      %s378 = sphi 0, %s377
      %s394 = sphi 0, %s378
    $region4: #{tpu_custom_call.1} parent=1 // loop_header_branch
      %34 = sbr.rel (%p32) target = $region8
    $region5: #{tpu_custom_call.1} parent=1 // loop_body
      %s36 = ssub.s32 %s31, 1
      %s37 = ssub.s32 %s31, 2
      %s44 = sadd.s32 1, %s39
      %p45 = scmp.ge.s32.totalorder %s44, 2
      %s46 = scalar_select %p45, 0, %s44
      %s47 = sadd.s32 1, %s38
      %s48 = scalar_select %p45, %s47, %s38
      %p49 = scmp.ge.s32.totalorder %s48, 2
      %s50 = scalar_select %p49, 0, %s48
      %s51 = ssub.s32 %s38, %s50
      %p52 = scmp.eq.s32.totalorder %s51, 0
      %s54 = sadd.s32 %s53, 1
      %s55 = scalar_select %p52, %s53, %s54
      %p58 = pneg %p52
      %p59 = scmp.eq.s32.totalorder %s31, 3
      %p60 = por %p58, %p59
      %p61 = scmp.ne.s32.totalorder %s53, %s56
      %p62 = scmp.eq.s32.totalorder %s31, 0
      %p63 = por %p61, %p62
      %p64 = scmp.ne.s32.totalorder %s53, %s56
      %p65 = scmp.eq.s32.totalorder %s36, 3
      %p66 = por %p64, %p65
      %p67 = scmp.ne.s32.totalorder %s56, %s57
      %p68 = scmp.eq.s32.totalorder %s36, 0
      %p69 = por %p67, %p68
      %p70 = scmp.ne.s32.totalorder %s56, %s57
      %p71 = scmp.eq.s32.totalorder %s37, 3
      %p72 = por %p70, %p71
      %p74 = scmp.ne.s32.totalorder %s57, %s73
      %p75 = scmp.eq.s32.totalorder %s37, 0
      %p76 = por %p74, %p75
      %s77 = ssub.s32 %s39, %s46
      %p78 = scmp.eq.s32.totalorder %s77, 0
      %s80 = sadd.s32 %s79, 1
      %s81 = scalar_select %p78, %s79, %s80
      %p84 = pneg %p78
      %p85 = scmp.eq.s32.totalorder %s31, 3
      %p86 = por %p84, %p85
      %p87 = scmp.ne.s32.totalorder %s79, %s82
      %p88 = scmp.eq.s32.totalorder %s31, 0
      %p89 = por %p87, %p88
      %p90 = scmp.ne.s32.totalorder %s79, %s82
      %p91 = scmp.eq.s32.totalorder %s36, 3
      %p92 = por %p90, %p91
      %p93 = scmp.ne.s32.totalorder %s82, %s83
      %p94 = scmp.eq.s32.totalorder %s36, 0
      %p95 = por %p93, %p94
      %p96 = scmp.ne.s32.totalorder %s82, %s83
      %p97 = scmp.eq.s32.totalorder %s37, 3
      %p98 = por %p96, %p97
      %p100 = scmp.ne.s32.totalorder %s83, %s99
      %p101 = scmp.eq.s32.totalorder %s37, 0
      %p102 = por %p100, %p101
      %s103 = ssub.s32 %s39, %s46
      %p104 = scmp.eq.s32.totalorder %s103, 0
      %s106 = sadd.s32 %s105, 1
      %s107 = scalar_select %p104, %s105, %s106
      %p110 = pneg %p104
      %p111 = scmp.eq.s32.totalorder %s31, 3
      %p112 = por %p110, %p111
      %p113 = scmp.ne.s32.totalorder %s105, %s108
      %p114 = scmp.eq.s32.totalorder %s31, 0
      %p115 = por %p113, %p114
      %p116 = scmp.ne.s32.totalorder %s105, %s108
      %p117 = scmp.eq.s32.totalorder %s36, 3
      %p118 = por %p116, %p117
      %p119 = scmp.ne.s32.totalorder %s108, %s109
      %p120 = scmp.eq.s32.totalorder %s36, 0
      %p121 = por %p119, %p120
      %p122 = scmp.ne.s32.totalorder %s108, %s109
      %p123 = scmp.eq.s32.totalorder %s37, 3
      %p124 = por %p122, %p123
      %p126 = scmp.ne.s32.totalorder %s109, %s125
      %p127 = scmp.eq.s32.totalorder %s37, 0
      %p128 = por %p126, %p127
      %s129 = ssub.s32 %s39, %s46
      %p130 = scmp.eq.s32.totalorder %s129, 0
      %s132 = sadd.s32 %s131, 1
      %s133 = scalar_select %p130, %s131, %s132
      %p136 = pneg %p130
      %p137 = scmp.eq.s32.totalorder %s31, 3
      %p138 = por %p136, %p137
      %p139 = scmp.ne.s32.totalorder %s131, %s134
      %p140 = scmp.eq.s32.totalorder %s31, 0
      %p141 = por %p139, %p140
      %p142 = scmp.ne.s32.totalorder %s131, %s134
      %p143 = scmp.eq.s32.totalorder %s36, 3
      %p144 = por %p142, %p143
      %p145 = scmp.ne.s32.totalorder %s134, %s135
      %p146 = scmp.eq.s32.totalorder %s36, 0
      %p147 = por %p145, %p146
      %p148 = scmp.ne.s32.totalorder %s134, %s135
      %p149 = scmp.eq.s32.totalorder %s37, 3
      %p150 = por %p148, %p149
      %p152 = scmp.ne.s32.totalorder %s135, %s151
      %p153 = scmp.eq.s32.totalorder %s37, 0
      %p154 = por %p152, %p153
      %s156 = sadd.s32 %s155, 1
      %p159 = scmp.eq.s32.totalorder %s31, 3
      %p160 = scmp.ne.s32.totalorder %s155, %s157
      %p161 = scmp.eq.s32.totalorder %s31, 0
      %p162 = por %p160, %p161
      %p163 = scmp.ne.s32.totalorder %s155, %s157
      %p164 = scmp.eq.s32.totalorder %s36, 3
      %p165 = por %p163, %p164
      %p166 = scmp.ne.s32.totalorder %s157, %s158
      %p167 = scmp.eq.s32.totalorder %s36, 0
      %p168 = por %p166, %p167
      %p169 = scmp.ne.s32.totalorder %s157, %s158
      %p170 = scmp.eq.s32.totalorder %s37, 3
      %p171 = por %p169, %p170
      %p173 = scmp.ne.s32.totalorder %s158, %s172
      %p174 = scmp.eq.s32.totalorder %s37, 0
      %p175 = por %p173, %p174
      %s177 = sadd.s32 %s176, 1
      %p180 = scmp.eq.s32.totalorder %s31, 3
      %p181 = scmp.ne.s32.totalorder %s176, %s178
      %p182 = scmp.eq.s32.totalorder %s31, 0
      %p183 = por %p181, %p182
      %p184 = scmp.ne.s32.totalorder %s176, %s178
      %p185 = scmp.eq.s32.totalorder %s36, 3
      %p186 = por %p184, %p185
      %p187 = scmp.ne.s32.totalorder %s178, %s179
      %p188 = scmp.eq.s32.totalorder %s36, 0
      %p189 = por %p187, %p188
      %p190 = scmp.ne.s32.totalorder %s178, %s179
      %p191 = scmp.eq.s32.totalorder %s37, 3
      %p192 = por %p190, %p191
      %p194 = scmp.ne.s32.totalorder %s179, %s193
      %p195 = scmp.eq.s32.totalorder %s37, 0
      %p196 = por %p194, %p195
      %s198 = sadd.s32 %s197, 1
      %p201 = scmp.eq.s32.totalorder %s31, 3
      %p202 = scmp.ne.s32.totalorder %s197, %s199
      %p203 = scmp.eq.s32.totalorder %s31, 0
      %p204 = por %p202, %p203
      %p205 = scmp.ne.s32.totalorder %s197, %s199
      %p206 = scmp.eq.s32.totalorder %s36, 3
      %p207 = por %p205, %p206
      %p208 = scmp.ne.s32.totalorder %s199, %s200
      %p209 = scmp.eq.s32.totalorder %s36, 0
      %p210 = por %p208, %p209
      %p211 = scmp.ne.s32.totalorder %s199, %s200
      %p212 = scmp.eq.s32.totalorder %s37, 3
      %p213 = por %p211, %p212
      %p215 = scmp.ne.s32.totalorder %s200, %s214
      %p216 = scmp.eq.s32.totalorder %s37, 0
      %p217 = por %p215, %p216
      %s219 = sadd.s32 %s218, 1
      %p222 = scmp.eq.s32.totalorder %s31, 3
      %p223 = scmp.ne.s32.totalorder %s218, %s220
      %p224 = scmp.eq.s32.totalorder %s31, 0
      %p225 = por %p223, %p224
      %p226 = scmp.ne.s32.totalorder %s218, %s220
      %p227 = scmp.eq.s32.totalorder %s36, 3
      %p228 = por %p226, %p227
      %p229 = scmp.ne.s32.totalorder %s220, %s221
      %p230 = scmp.eq.s32.totalorder %s36, 0
      %p231 = por %p229, %p230
      %p232 = scmp.ne.s32.totalorder %s220, %s221
      %p233 = scmp.eq.s32.totalorder %s37, 3
      %p234 = por %p232, %p233
      %p236 = scmp.ne.s32.totalorder %s221, %s235
      %p237 = scmp.eq.s32.totalorder %s37, 0
      %p238 = por %p236, %p237
      %s240 = sadd.s32 %s239, 1
      %p243 = scmp.eq.s32.totalorder %s31, 3
      %p244 = scmp.ne.s32.totalorder %s239, %s241
      %p245 = scmp.eq.s32.totalorder %s31, 0
      %p246 = por %p244, %p245
      %p247 = scmp.ne.s32.totalorder %s239, %s241
      %p248 = scmp.eq.s32.totalorder %s36, 3
      %p249 = por %p247, %p248
      %p250 = scmp.ne.s32.totalorder %s241, %s242
      %p251 = scmp.eq.s32.totalorder %s36, 0
      %p252 = por %p250, %p251
      %p253 = scmp.ne.s32.totalorder %s241, %s242
      %p254 = scmp.eq.s32.totalorder %s37, 3
      %p255 = por %p253, %p254
      %p257 = scmp.ne.s32.totalorder %s242, %s256
      %p258 = scmp.eq.s32.totalorder %s37, 0
      %p259 = por %p257, %p258
      %s261 = sadd.s32 %s260, 1
      %p264 = scmp.eq.s32.totalorder %s31, 3
      %p265 = scmp.ne.s32.totalorder %s260, %s262
      %p266 = scmp.eq.s32.totalorder %s31, 0
      %p267 = por %p265, %p266
      %p268 = scmp.ne.s32.totalorder %s260, %s262
      %p269 = scmp.eq.s32.totalorder %s36, 3
      %p270 = por %p268, %p269
      %p271 = scmp.ne.s32.totalorder %s262, %s263
      %p272 = scmp.eq.s32.totalorder %s36, 0
      %p273 = por %p271, %p272
      %p274 = scmp.ne.s32.totalorder %s262, %s263
      %p275 = scmp.eq.s32.totalorder %s37, 3
      %p276 = por %p274, %p275
      %p278 = scmp.ne.s32.totalorder %s263, %s277
      %p279 = scmp.eq.s32.totalorder %s37, 0
      %p280 = por %p278, %p279
      %s282 = sadd.s32 %s281, 1
      %p285 = scmp.eq.s32.totalorder %s31, 3
      %p286 = scmp.ne.s32.totalorder %s281, %s283
      %p287 = scmp.eq.s32.totalorder %s31, 0
      %p288 = por %p286, %p287
      %p289 = scmp.ne.s32.totalorder %s281, %s283
      %p290 = scmp.eq.s32.totalorder %s36, 3
      %p291 = por %p289, %p290
      %p292 = scmp.ne.s32.totalorder %s283, %s284
      %p293 = scmp.eq.s32.totalorder %s36, 0
      %p294 = por %p292, %p293
      %p295 = scmp.ne.s32.totalorder %s283, %s284
      %p296 = scmp.eq.s32.totalorder %s37, 3
      %p297 = por %p295, %p296
      %p299 = scmp.ne.s32.totalorder %s284, %s298
      %p300 = scmp.eq.s32.totalorder %s37, 0
      %p301 = por %p299, %p300
      %s303 = sadd.s32 %s302, 1
      %p306 = scmp.eq.s32.totalorder %s31, 3
      %p307 = scmp.ne.s32.totalorder %s302, %s304
      %p308 = scmp.eq.s32.totalorder %s31, 0
      %p309 = por %p307, %p308
      %p310 = scmp.ne.s32.totalorder %s302, %s304
      %p311 = scmp.eq.s32.totalorder %s36, 3
      %p312 = por %p310, %p311
      %p313 = scmp.ne.s32.totalorder %s304, %s305
      %p314 = scmp.eq.s32.totalorder %s36, 0
      %p315 = por %p313, %p314
      %p316 = scmp.ne.s32.totalorder %s304, %s305
      %p317 = scmp.eq.s32.totalorder %s37, 3
      %p318 = por %p316, %p317
      %p320 = scmp.ne.s32.totalorder %s305, %s319
      %p321 = scmp.eq.s32.totalorder %s37, 0
      %p322 = por %p320, %p321
      %s324 = sadd.s32 %s323, 1
      %p327 = scmp.eq.s32.totalorder %s31, 3
      %p328 = scmp.ne.s32.totalorder %s323, %s325
      %p329 = scmp.eq.s32.totalorder %s31, 0
      %p330 = por %p328, %p329
      %p331 = scmp.ne.s32.totalorder %s323, %s325
      %p332 = scmp.eq.s32.totalorder %s36, 3
      %p333 = por %p331, %p332
      %p334 = scmp.ne.s32.totalorder %s325, %s326
      %p335 = scmp.eq.s32.totalorder %s36, 0
      %p336 = por %p334, %p335
      %p337 = scmp.ne.s32.totalorder %s325, %s326
      %p338 = scmp.eq.s32.totalorder %s37, 3
      %p339 = por %p337, %p338
      %p341 = scmp.ne.s32.totalorder %s326, %s340
      %p342 = scmp.eq.s32.totalorder %s37, 0
      %p343 = por %p341, %p342
      %s344 = ssub.s32 %s38, %s50
      %p345 = scmp.eq.s32.totalorder %s344, 0
      %s347 = sadd.s32 %s346, 1
      %s348 = scalar_select %p345, %s346, %s347
      %p351 = pneg %p345
      %p352 = scmp.eq.s32.totalorder %s31, 3
      %p353 = por %p351, %p352
      %p354 = scmp.ne.s32.totalorder %s346, %s349
      %p355 = scmp.eq.s32.totalorder %s31, 0
      %p356 = por %p354, %p355
      %p357 = scmp.ne.s32.totalorder %s346, %s349
      %p358 = scmp.eq.s32.totalorder %s36, 3
      %p359 = por %p357, %p358
      %p360 = scmp.ne.s32.totalorder %s349, %s350
      %p361 = scmp.eq.s32.totalorder %s36, 0
      %p362 = por %p360, %p361
      %p363 = scmp.ne.s32.totalorder %s349, %s350
      %p364 = scmp.eq.s32.totalorder %s37, 3
      %p365 = por %p363, %p364
      %p367 = scmp.ne.s32.totalorder %s350, %s366
      %p368 = scmp.eq.s32.totalorder %s37, 0
      %p369 = por %p367, %p368
      %s370 = ssub.s32 %s39, %s46
      %s371 = ssub.s32 %s38, %s50
      %s372 = sor.u32 %s370, %s371
      %p373 = scmp.eq.s32.totalorder %s372, 0
      %s375 = sadd.s32 %s374, 1
      %s376 = scalar_select %p373, %s374, %s375
      %p379 = pneg %p373
      %p380 = scmp.eq.s32.totalorder %s31, 3
      %p381 = por %p379, %p380
      %p382 = scmp.ne.s32.totalorder %s374, %s377
      %p383 = scmp.eq.s32.totalorder %s31, 0
      %p384 = por %p382, %p383
      %p385 = scmp.ne.s32.totalorder %s374, %s377
      %p386 = scmp.eq.s32.totalorder %s36, 3
      %p387 = por %p385, %p386
      %p388 = scmp.ne.s32.totalorder %s377, %s378
      %p389 = scmp.eq.s32.totalorder %s36, 0
      %p390 = por %p388, %p389
      %p391 = scmp.ne.s32.totalorder %s377, %s378
      %p392 = scmp.eq.s32.totalorder %s37, 3
      %p393 = por %p391, %p392
      %p395 = scmp.ne.s32.totalorder %s378, %s394
      %p396 = scmp.eq.s32.totalorder %s37, 0
      %p397 = por %p395, %p396
      %p398 = scmp.le.s32.totalorder 1, %s31
      %p399 = scmp.lt.s32.totalorder %s31, 5
      %p400 = pnand %p398, %p399
      %p401 = pneg %p400
      // Predicated region
      $region9: #{tpu_custom_call.1} parent=5 // pred_check
        _
      $region10: #{tpu_custom_call.1} parent=5 // pred_check_branch
        %403 = sbr.rel (%p400) target = $region12
      $region11: #{tpu_custom_call.1} parent=5 // pred_region
        %s404 = ssub.s32 %s31, 1
        // Predicated region
        $region13: #{tpu_custom_call.1} parent=11 // pred_check
          %p405 = pneg %p168
        $region14: #{tpu_custom_call.1} parent=11 // pred_check_branch
          %407 = sbr.rel (%p405) target = $region16
        $region15: #{tpu_custom_call.1} parent=11 // pred_region
          _
        $region16: #{tpu_custom_call.1} parent=11 // pred_fallthru
          _
        // Predicated region
        $region17: #{tpu_custom_call.1} parent=11 // pred_check
          %p408 = pneg %p189
        $region18: #{tpu_custom_call.1} parent=11 // pred_check_branch
          %410 = sbr.rel (%p408) target = $region20
        $region19: #{tpu_custom_call.1} parent=11 // pred_region
          _
        $region20: #{tpu_custom_call.1} parent=11 // pred_fallthru
          _
        // Predicated region
        $region21: #{tpu_custom_call.1} parent=11 // pred_check
          %p411 = pneg %p210
        $region22: #{tpu_custom_call.1} parent=11 // pred_check_branch
          %413 = sbr.rel (%p411) target = $region24
        $region23: #{tpu_custom_call.1} parent=11 // pred_region
          _
        $region24: #{tpu_custom_call.1} parent=11 // pred_fallthru
          _
        // Predicated region
        $region25: #{tpu_custom_call.1} parent=11 // pred_check
          %p414 = pneg %p231
        $region26: #{tpu_custom_call.1} parent=11 // pred_check_branch
          %416 = sbr.rel (%p414) target = $region28
        $region27: #{tpu_custom_call.1} parent=11 // pred_region
          _
        $region28: #{tpu_custom_call.1} parent=11 // pred_fallthru
          _
        // Predicated region
        $region29: #{tpu_custom_call.1} parent=11 // pred_check
          %p417 = pneg %p252
        $region30: #{tpu_custom_call.1} parent=11 // pred_check_branch
          %419 = sbr.rel (%p417) target = $region32
        $region31: #{tpu_custom_call.1} parent=11 // pred_region
          _
        $region32: #{tpu_custom_call.1} parent=11 // pred_fallthru
          _
        // Predicated region
        $region33: #{tpu_custom_call.1} parent=11 // pred_check
          %p420 = pneg %p273
        $region34: #{tpu_custom_call.1} parent=11 // pred_check_branch
          %422 = sbr.rel (%p420) target = $region36
        $region35: #{tpu_custom_call.1} parent=11 // pred_region
          _
        $region36: #{tpu_custom_call.1} parent=11 // pred_fallthru
          _
        // Predicated region
        $region37: #{tpu_custom_call.1} parent=11 // pred_check
          %p423 = pneg %p294
        $region38: #{tpu_custom_call.1} parent=11 // pred_check_branch
          %425 = sbr.rel (%p423) target = $region40
        $region39: #{tpu_custom_call.1} parent=11 // pred_region
          _
        $region40: #{tpu_custom_call.1} parent=11 // pred_fallthru
          _
        // Predicated region
        $region41: #{tpu_custom_call.1} parent=11 // pred_check
          %p426 = pneg %p315
        $region42: #{tpu_custom_call.1} parent=11 // pred_check_branch
          %428 = sbr.rel (%p426) target = $region44
        $region43: #{tpu_custom_call.1} parent=11 // pred_region
          _
        $region44: #{tpu_custom_call.1} parent=11 // pred_fallthru
          _
        // Predicated region
        $region45: #{tpu_custom_call.1} parent=11 // pred_check
          %p429 = pneg %p336
        $region46: #{tpu_custom_call.1} parent=11 // pred_check_branch
          %431 = sbr.rel (%p429) target = $region48
        $region47: #{tpu_custom_call.1} parent=11 // pred_region
          _
        $region48: #{tpu_custom_call.1} parent=11 // pred_fallthru
          _
      $region12: #{tpu_custom_call.1} parent=5 // pred_fallthru
        _
      %p432 = scmp.lt.s32.totalorder %s31, 4
      // Predicated region
      $region49: #{tpu_custom_call.1} parent=5 // pred_check
        %p433 = pneg %p432
      $region50: #{tpu_custom_call.1} parent=5 // pred_check_branch
        %435 = sbr.rel (%p433) target = $region52
      $region51: #{tpu_custom_call.1} parent=5 // pred_region
        // Predicated region
        $region53: #{tpu_custom_call.1} parent=51 // pred_check
          %p436 = pneg %p63
        $region54: #{tpu_custom_call.1} parent=51 // pred_check_branch
          %438 = sbr.rel (%p436) target = $region56
        $region55: #{tpu_custom_call.1} parent=51 // pred_region
          %p439 = scmp.lt.s32.totalorder %s38, 1
          %s440 = scalar_select %p439, %s38, 1
          %s441 = smul.addr %s440, 16
          %s442 = smul.addr %s441, 8
          %s443 = scalar_lea.vmem %s1, %s442
        $region56: #{tpu_custom_call.1} parent=51 // pred_fallthru
          _
        // Predicated region
        $region57: #{tpu_custom_call.1} parent=51 // pred_check
          %p444 = pneg %p89
        $region58: #{tpu_custom_call.1} parent=51 // pred_check_branch
          %446 = sbr.rel (%p444) target = $region60
        $region59: #{tpu_custom_call.1} parent=51 // pred_region
          %p447 = scmp.lt.s32.totalorder %s39, 1
          %s448 = scalar_select %p447, %s39, 1
          %s449 = smul.addr %s448, 4
          %s450 = smul.addr %s449, 4
          %s451 = scalar_lea.vmem %s2, %s450
        $region60: #{tpu_custom_call.1} parent=51 // pred_fallthru
          _
        // Predicated region
        $region61: #{tpu_custom_call.1} parent=51 // pred_check
          %p452 = pneg %p115
        $region62: #{tpu_custom_call.1} parent=51 // pred_check_branch
          %454 = sbr.rel (%p452) target = $region64
        $region63: #{tpu_custom_call.1} parent=51 // pred_region
          %p455 = scmp.lt.s32.totalorder %s39, 1
          %s456 = scalar_select %p455, %s39, 1
          %s457 = scalar_lea.vmem %s3, %s456
        $region64: #{tpu_custom_call.1} parent=51 // pred_fallthru
          _
        // Predicated region
        $region65: #{tpu_custom_call.1} parent=51 // pred_check
          %p458 = pneg %p141
        $region66: #{tpu_custom_call.1} parent=51 // pred_check_branch
          %460 = sbr.rel (%p458) target = $region68
        $region67: #{tpu_custom_call.1} parent=51 // pred_region
          %p461 = scmp.lt.s32.totalorder %s39, 1
          %s462 = scalar_select %p461, %s39, 1
          %s463 = smul.addr %s462, 2
          %s464 = smul.addr %s463, 4
          %s465 = scalar_lea.vmem %s4, %s464
        $region68: #{tpu_custom_call.1} parent=51 // pred_fallthru
          _
      $region52: #{tpu_custom_call.1} parent=5 // pred_fallthru
        _
      %p466 = scmp.le.s32.totalorder 1, %s31
      %p467 = scmp.lt.s32.totalorder %s31, 5
      %p468 = pnand %p466, %p467
      %p469 = pneg %p468
      // Predicated region
      $region69: #{tpu_custom_call.1} parent=5 // pred_check
        _
      $region70: #{tpu_custom_call.1} parent=5 // pred_check_branch
        %471 = sbr.rel (%p468) target = $region72
      $region71: #{tpu_custom_call.1} parent=5 // pred_region
        %s472 = ssub.s32 %s31, 1
        %p473 = scmp.lt.s32.totalorder %s40, 1
        %s474 = scalar_select %p473, %s40, 1
        %s475 = smul.addr %s474, 16
        %s476 = smul.addr %s475, 8
        %s477 = scalar_lea.vmem %s1, %s476
        %p478 = pneg %p69
        %p479 = pneg %p66
        %p480 = scmp.lt.s32.totalorder %s41, 1
        %s481 = scalar_select %p480, %s41, 1
        %s482 = smul.addr %s481, 4
        %s483 = smul.addr %s482, 4
        %s484 = scalar_lea.vmem %s2, %s483
        %p485 = pneg %p95
        %p486 = pneg %p92
        %p487 = scmp.lt.s32.totalorder %s41, 1
        %s488 = scalar_select %p487, %s41, 1
        %s489 = scalar_lea.vmem %s3, %s488
        %p490 = pneg %p121
        %p491 = pneg %p118
        %p492 = scmp.lt.s32.totalorder %s41, 1
        %s493 = scalar_select %p492, %s41, 1
        %s494 = smul.addr %s493, 2
        %s495 = smul.addr %s494, 4
        %s496 = scalar_lea.vmem %s4, %s495
        %p497 = pneg %p147
        %p498 = pneg %p144
        %p499 = pneg %p168
        %p500 = pneg %p165
        %p501 = pneg %p189
        %p502 = pneg %p186
        %p503 = pneg %p210
        %p504 = pneg %p207
        %p505 = pneg %p231
        %p506 = pneg %p228
        %p507 = pneg %p252
        %p508 = pneg %p249
        %p509 = pneg %p273
        %p510 = pneg %p270
        %p511 = pneg %p294
        %p512 = pneg %p291
        %p513 = pneg %p315
        %p514 = pneg %p312
        %p515 = pneg %p336
        %p516 = pneg %p333
        %p517 = pneg %p362
        %p518 = pneg %p359
        %p519 = scmp.lt.s32.totalorder %s40, 1
        %s520 = scalar_select %p519, %s40, 1
        %s521 = smul.addr %s520, 16
        %s522 = smul.addr %s521, 8
        %s523 = scalar_lea.vmem %s14, %s522
        %p524 = pneg %p390
        %p525 = pneg %p387
        %s526 = sand.u32 %s377, 1
        %s527 = scalar_lea.sflag [#allocation7], %s526
        %s528 = sand.u32 %s377, 1
        %s529 = smul.addr %s528, 64
        %s530 = scalar_lea.vmem [#allocation6], %s529
        %p531 = scmp.lt.s32.totalorder %s40, 1
        %s532 = scalar_select %p531, %s40, 1
        %s533 = smul.addr %s532, 16
        %s534 = smul.addr %s533, 8
        %s535 = scalar_lea.vmem %s1, %s534
        %p536 = scmp.lt.s32.totalorder %s41, 1
        %s537 = scalar_select %p536, %s41, 1
        %s538 = smul.addr %s537, 4
        %s539 = smul.addr %s538, 4
        %s540 = scalar_lea.vmem %s2, %s539
        %p541 = scmp.lt.s32.totalorder %s41, 1
        %s542 = scalar_select %p541, %s41, 1
        %s543 = scalar_lea.vmem %s3, %s542
        %p544 = scmp.lt.s32.totalorder %s41, 1
        %s545 = scalar_select %p544, %s41, 1
        %s546 = smul.addr %s545, 2
        %s547 = smul.addr %s546, 4
        %s548 = scalar_lea.vmem %s4, %s547
        %p549 = scmp.lt.s32.totalorder %s40, 1
        %s550 = scalar_select %p549, %s40, 1
        %s551 = smul.addr %s550, 16
        %s552 = smul.addr %s551, 8
        %s553 = scalar_lea.vmem %s14, %s552
        %s555 = sld [smem:[#allocation5 + %s40]]
        %p556 = scmp.gt.s32.totalorder %s555, 1
        %s557 = scalar_select %p556, %s555, 1
        %v558 = vld [vmem:[%s535] sm:$0xff]
        %v559 = vld [vmem:[%s535 + $0x8] sm:$0xff]
        %v560 = vld [vmem:[%s535 + $0x10] sm:$0xff]
        %v561 = vld [vmem:[%s535 + $0x18] sm:$0xff]
        %v562 = vld [vmem:[%s535 + $0x20] sm:$0xff]
        %v563 = vld [vmem:[%s535 + $0x28] sm:$0xff]
        %v564 = vld [vmem:[%s535 + $0x30] sm:$0xff]
        %v565 = vld [vmem:[%s535 + $0x38] sm:$0xff]
        %v566 = vld [vmem:[%s535 + $0x40] sm:$0xff]
        %v567 = vld [vmem:[%s535 + $0x48] sm:$0xff]
        %v568 = vld [vmem:[%s535 + $0x50] sm:$0xff]
        %v569 = vld [vmem:[%s535 + $0x58] sm:$0xff]
        %v570 = vld [vmem:[%s535 + $0x60] sm:$0xff]
        %v571 = vld [vmem:[%s535 + $0x68] sm:$0xff]
        %v572 = vld [vmem:[%s535 + $0x70] sm:$0xff]
        %v573 = vld [vmem:[%s535 + $0x78] sm:$0xff]
        %v574 = vpack.c.bf16 %v559, %v558
        %v575 = vpack.c.bf16 %v561, %v560
        %v576 = vpack.c.bf16 %v563, %v562
        %v577 = vpack.c.bf16 %v565, %v564
        %v578 = vpack.c.bf16 %v567, %v566
        %v579 = vpack.c.bf16 %v569, %v568
        %v580 = vpack.c.bf16 %v571, %v570
        %v581 = vpack.c.bf16 %v573, %v572
        %v582 = vlaneseq
        %v583 = vand.u32 %v582, 127
        %v584 = vstv %s557
        %vm585 = vcmp.ge.s32.totalorder %v583, %v584
        %v586 = vld [vmem:[%s540] sm:$0xf]
        %v587 = vld [vmem:[%s540 + $0x4] sm:$0xf]
        %v588 = vld [vmem:[%s540 + $0x8] sm:$0xf]
        %v589 = vld [vmem:[%s540 + $0xc] sm:$0xf]
        %v590 = vld [vmem:[%s543] sm:$0x1]
        %v592 = vlaneseq
        %v593 = vshrl.u32 %v592, 7
        %v594 = vsub.s32 0, %v593
        %v595 = vrot.slane %v590, %v594
        %v601 = vunpack.c.l.b16 %v586
        %v602 = vunpack.c.l.b16 %v587
        %v603 = vunpack.c.l.b16 %v588
        %v604 = vunpack.c.l.b16 %v589
        %v605 = vpack.c.b16 %v602, %v601
        %v606 = vpack.c.b16 %v604, %v603
        %vm609 = vcmask 261120
        %v611 = vsel %vm609, %v574, 0
        %v614 = vsel %vm609, %v575, 0
        %v617 = vsel %vm609, %v576, 0
        %v620 = vsel %vm609, %v577, 0
        %v623 = vsel %vm609, %v578, 0
        %v626 = vsel %vm609, %v579, 0
        %v629 = vsel %vm609, %v580, 0
        %v632 = vsel %vm609, %v581, 0
        %634 = vmatprep.subr.bf16.mxu0 0
        %635 = vmatpush1.bf16.msra.mxu0 %v605
        %636 = vmatprep.subr.bf16.mxu0 0
        %637 = vmatpush1.bf16.msra.mxu0 %v606
        %638 = vmatprep.subr.bf16.mxu0 0
        %639 = vmatpush1.bf16.msra.mxu0 0
        %640 = vmatprep.subr.bf16.mxu0 0
        %641 = vmatpush1.bf16.msra.mxu0 0
        %642 = vmatprep.subr.bf16.mxu0 0
        %643 = vmatpush1.bf16.msra.mxu0 0
        %644 = vmatprep.subr.bf16.mxu0 0
        %645 = vmatpush1.bf16.msra.mxu0 0
        %646 = vmatprep.subr.bf16.mxu0 0
        %647 = vmatpush1.bf16.msra.mxu0 0
        %648 = vmatprep.subr.bf16.mxu0 0
        %649 = vmatpush1.bf16.msra.mxu0 0
        %650 = vmatprep.subr.bf16.mxu0 0
        %651 = vmatpush1.bf16.msra.mxu0 0
        %652 = vmatprep.subr.bf16.mxu0 0
        %653 = vmatpush1.bf16.msra.mxu0 0
        %654 = vmatprep.subr.bf16.mxu0 0
        %655 = vmatpush1.bf16.msra.mxu0 0
        %656 = vmatprep.subr.bf16.mxu0 0
        %657 = vmatpush1.bf16.msra.mxu0 0
        %658 = vmatprep.subr.bf16.mxu0 0
        %659 = vmatpush1.bf16.msra.mxu0 0
        %660 = vmatprep.subr.bf16.mxu0 0
        %661 = vmatpush1.bf16.msra.mxu0 0
        %662 = vmatprep.subr.bf16.mxu0 0
        %663 = vmatpush1.bf16.msra.mxu0 0
        %664 = vmatprep.subr.bf16.mxu0 0
        %665 = vmatpush1.bf16.msra.mxu0 0
        %666 = vmatprep.mubr.bf16.mxu0 0
        %667 = vmatmul.mubr.bf16.gmra.mrb[0].mxu0 %v611
        %v668 = vpop.f32.mrb[0].mxu0
        %v669 = vadd.f32 %v595, %v668
        %v670 = vpop.f32.mrb[0].mxu0
        %v671 = vpop.f32.mrb[0].mxu0
        %v672 = vadd.f32 %v595, %v671
        %v673 = vpop.f32.mrb[0].mxu0
        %674 = vmatprep.mubr.bf16.mxu0 0
        %675 = vmatmul.mubr.bf16.gmra.mrb[0].mxu0 %v614
        %v676 = vpop.f32.mrb[0].mxu0
        %v677 = vadd.f32 %v595, %v676
        %v678 = vpop.f32.mrb[0].mxu0
        %v679 = vpop.f32.mrb[0].mxu0
        %v680 = vadd.f32 %v595, %v679
        %v681 = vpop.f32.mrb[0].mxu0
        %682 = vmatprep.mubr.bf16.mxu0 0
        %683 = vmatmul.mubr.bf16.gmra.mrb[0].mxu0 %v617
        %v684 = vpop.f32.mrb[0].mxu0
        %v685 = vadd.f32 %v595, %v684
        %v686 = vpop.f32.mrb[0].mxu0
        %v687 = vpop.f32.mrb[0].mxu0
        %v688 = vadd.f32 %v595, %v687
        %v689 = vpop.f32.mrb[0].mxu0
        %690 = vmatprep.mubr.bf16.mxu0 0
        %691 = vmatmul.mubr.bf16.gmra.mrb[0].mxu0 %v620
        %v692 = vpop.f32.mrb[0].mxu0
        %v693 = vadd.f32 %v595, %v692
        %v694 = vpop.f32.mrb[0].mxu0
        %v695 = vpop.f32.mrb[0].mxu0
        %v696 = vadd.f32 %v595, %v695
        %v697 = vpop.f32.mrb[0].mxu0
        %698 = vmatprep.mubr.bf16.mxu0 0
        %699 = vmatmul.mubr.bf16.gmra.mrb[0].mxu0 %v623
        %v700 = vpop.f32.mrb[0].mxu0
        %v701 = vadd.f32 %v595, %v700
        %v702 = vpop.f32.mrb[0].mxu0
        %v703 = vpop.f32.mrb[0].mxu0
        %v704 = vadd.f32 %v595, %v703
        %v705 = vpop.f32.mrb[0].mxu0
        %706 = vmatprep.mubr.bf16.mxu0 0
        %707 = vmatmul.mubr.bf16.gmra.mrb[0].mxu0 %v626
        %v708 = vpop.f32.mrb[0].mxu0
        %v709 = vadd.f32 %v595, %v708
        %v710 = vpop.f32.mrb[0].mxu0
        %v711 = vpop.f32.mrb[0].mxu0
        %v712 = vadd.f32 %v595, %v711
        %v713 = vpop.f32.mrb[0].mxu0
        %714 = vmatprep.mubr.bf16.mxu0 0
        %715 = vmatmul.mubr.bf16.gmra.mrb[0].mxu0 %v629
        %v716 = vpop.f32.mrb[0].mxu0
        %v717 = vadd.f32 %v595, %v716
        %v718 = vpop.f32.mrb[0].mxu0
        %v719 = vpop.f32.mrb[0].mxu0
        %v720 = vadd.f32 %v595, %v719
        %v721 = vpop.f32.mrb[0].mxu0
        %722 = vmatprep.mubr.bf16.mxu0 0
        %723 = vmatmul.mubr.bf16.gmra.mrb[0].mxu0 %v632
        %v724 = vpop.f32.mrb[0].mxu0
        %v725 = vadd.f32 %v595, %v724
        %v726 = vpop.f32.mrb[0].mxu0
        %v727 = vpop.f32.mrb[0].mxu0
        %v728 = vadd.f32 %v595, %v727
        %v729 = vpop.f32.mrb[0].mxu0
        %730 = vdwg.mxu0
        %v731 = vpack.c.bf16 %v672, %v669
        %v732 = vpack.c.bf16 %v680, %v677
        %v733 = vpack.c.bf16 %v688, %v685
        %v734 = vpack.c.bf16 %v696, %v693
        %v735 = vpack.c.bf16 %v704, %v701
        %v736 = vpack.c.bf16 %v712, %v709
        %v737 = vpack.c.bf16 %v720, %v717
        %v738 = vpack.c.bf16 %v728, %v725
        %747 = vrot.lane.b32.xlu0 %v731, 112
        %v748 = vpop.permute.xlu0 %747
        %749 = vrot.lane.b32.xlu0 %v732, 112
        %v750 = vpop.permute.xlu0 %749
        %751 = vrot.lane.b32.xlu0 %v733, 112
        %v752 = vpop.permute.xlu0 %751
        %753 = vrot.lane.b32.xlu0 %v734, 112
        %v754 = vpop.permute.xlu0 %753
        %755 = vrot.lane.b32.xlu0 %v735, 112
        %v756 = vpop.permute.xlu0 %755
        %757 = vrot.lane.b32.xlu0 %v736, 112
        %v758 = vpop.permute.xlu0 %757
        %759 = vrot.lane.b32.xlu0 %v737, 112
        %v760 = vpop.permute.xlu0 %759
        %761 = vrot.lane.b32.xlu0 %v738, 112
        %v762 = vpop.permute.xlu0 %761
        %vm763 = vcmask 130048
        %v765 = vsel %vm763, %v731, 0
        %v768 = vsel %vm763, %v732, 0
        %v771 = vsel %vm763, %v733, 0
        %v774 = vsel %vm763, %v734, 0
        %v777 = vsel %vm763, %v735, 0
        %v780 = vsel %vm763, %v736, 0
        %v783 = vsel %vm763, %v737, 0
        %v786 = vsel %vm763, %v738, 0
        %v789 = vsel %vm763, %v748, 0
        %v792 = vsel %vm763, %v750, 0
        %v795 = vsel %vm763, %v752, 0
        %v798 = vsel %vm763, %v754, 0
        %v801 = vsel %vm763, %v756, 0
        %v804 = vsel %vm763, %v758, 0
        %v807 = vsel %vm763, %v760, 0
        %v810 = vsel %vm763, %v762, 0
        %812 = vmatprep.subr.bf16.mxu0 0
        %813 = vmatpush1.bf16.xpose.msra.mxu0 %v789
        %814 = vmatprep.subr.bf16.mxu0 0
        %815 = vmatpush1.bf16.xpose.msra.mxu0 %v792
        %816 = vmatprep.subr.bf16.mxu0 0
        %817 = vmatpush1.bf16.xpose.msra.mxu0 %v795
        %818 = vmatprep.subr.bf16.mxu0 0
        %819 = vmatpush1.bf16.xpose.msra.mxu0 %v798
        %820 = vmatprep.subr.bf16.mxu0 0
        %821 = vmatpush1.bf16.xpose.msra.mxu0 %v801
        %822 = vmatprep.subr.bf16.mxu0 0
        %823 = vmatpush1.bf16.xpose.msra.mxu0 %v804
        %824 = vmatprep.subr.bf16.mxu0 0
        %825 = vmatpush1.bf16.xpose.msra.mxu0 %v807
        %826 = vmatprep.subr.bf16.mxu0 0
        %827 = vmatpush1.bf16.xpose.msra.mxu0 %v810
        %828 = vmatprep.subr.bf16.mxu0 0
        %829 = vmatpush1.bf16.xpose.msra.mxu0 0
        %830 = vmatprep.subr.bf16.mxu0 0
        %831 = vmatpush1.bf16.xpose.msra.mxu0 0
        %832 = vmatprep.subr.bf16.mxu0 0
        %833 = vmatpush1.bf16.xpose.msra.mxu0 0
        %834 = vmatprep.subr.bf16.mxu0 0
        %835 = vmatpush1.bf16.xpose.msra.mxu0 0
        %836 = vmatprep.subr.bf16.mxu0 0
        %837 = vmatpush1.bf16.xpose.msra.mxu0 0
        %838 = vmatprep.subr.bf16.mxu0 0
        %839 = vmatpush1.bf16.xpose.msra.mxu0 0
        %840 = vmatprep.subr.bf16.mxu0 0
        %841 = vmatpush1.bf16.xpose.msra.mxu0 0
        %842 = vmatprep.subr.bf16.mxu0 0
        %843 = vmatpush1.bf16.xpose.msra.mxu0 0
        %844 = vmatprep.mubr.bf16.mxu0 0
        %845 = vmatmul.mubr.bf16.gmra.mrb[0].mxu0 %v765
        %v846 = vpop.f32.mrb[0].mxu0
        %v847 = vadd.f32 0.0, %v846
        %v848 = vpop.f32.mrb[0].mxu0
        %v849 = vpop.f32.mrb[0].mxu0
        %v850 = vadd.f32 0.0, %v849
        %v851 = vpop.f32.mrb[0].mxu0
        %852 = vmatprep.mubr.bf16.mxu0 0
        %853 = vmatmul.mubr.bf16.gmra.mrb[0].mxu0 %v768
        %v854 = vpop.f32.mrb[0].mxu0
        %v855 = vadd.f32 0.0, %v854
        %v856 = vpop.f32.mrb[0].mxu0
        %v857 = vpop.f32.mrb[0].mxu0
        %v858 = vadd.f32 0.0, %v857
        %v859 = vpop.f32.mrb[0].mxu0
        %860 = vmatprep.mubr.bf16.mxu0 0
        %861 = vmatmul.mubr.bf16.gmra.mrb[0].mxu0 %v771
        %v862 = vpop.f32.mrb[0].mxu0
        %v863 = vadd.f32 0.0, %v862
        %v864 = vpop.f32.mrb[0].mxu0
        %v865 = vpop.f32.mrb[0].mxu0
        %v866 = vadd.f32 0.0, %v865
        %v867 = vpop.f32.mrb[0].mxu0
        %868 = vmatprep.mubr.bf16.mxu0 0
        %869 = vmatmul.mubr.bf16.gmra.mrb[0].mxu0 %v774
        %v870 = vpop.f32.mrb[0].mxu0
        %v871 = vadd.f32 0.0, %v870
        %v872 = vpop.f32.mrb[0].mxu0
        %v873 = vpop.f32.mrb[0].mxu0
        %v874 = vadd.f32 0.0, %v873
        %v875 = vpop.f32.mrb[0].mxu0
        %876 = vmatprep.mubr.bf16.mxu0 0
        %877 = vmatmul.mubr.bf16.gmra.mrb[0].mxu0 %v777
        %v878 = vpop.f32.mrb[0].mxu0
        %v879 = vadd.f32 0.0, %v878
        %v880 = vpop.f32.mrb[0].mxu0
        %v881 = vpop.f32.mrb[0].mxu0
        %v882 = vadd.f32 0.0, %v881
        %v883 = vpop.f32.mrb[0].mxu0
        %884 = vmatprep.mubr.bf16.mxu0 0
        %885 = vmatmul.mubr.bf16.gmra.mrb[0].mxu0 %v780
        %v886 = vpop.f32.mrb[0].mxu0
        %v887 = vadd.f32 0.0, %v886
        %v888 = vpop.f32.mrb[0].mxu0
        %v889 = vpop.f32.mrb[0].mxu0
        %v890 = vadd.f32 0.0, %v889
        %v891 = vpop.f32.mrb[0].mxu0
        %892 = vmatprep.mubr.bf16.mxu0 0
        %893 = vmatmul.mubr.bf16.gmra.mrb[0].mxu0 %v783
        %v894 = vpop.f32.mrb[0].mxu0
        %v895 = vadd.f32 0.0, %v894
        %v896 = vpop.f32.mrb[0].mxu0
        %v897 = vpop.f32.mrb[0].mxu0
        %v898 = vadd.f32 0.0, %v897
        %v899 = vpop.f32.mrb[0].mxu0
        %900 = vmatprep.mubr.bf16.mxu0 0
        %901 = vmatmul.mubr.bf16.gmra.mrb[0].mxu0 %v786
        %v902 = vpop.f32.mrb[0].mxu0
        %v903 = vadd.f32 0.0, %v902
        %v904 = vpop.f32.mrb[0].mxu0
        %v905 = vpop.f32.mrb[0].mxu0
        %v906 = vadd.f32 0.0, %v905
        %v907 = vpop.f32.mrb[0].mxu0
        %908 = vdwg.mxu0
        %v909 = vsel %vm585, -inf, %v847
        %v910 = vsel %vm585, -inf, %v850
        %v911 = vsel %vm585, -inf, %v855
        %v912 = vsel %vm585, -inf, %v858
        %v913 = vsel %vm585, -inf, %v863
        %v914 = vsel %vm585, -inf, %v866
        %v915 = vsel %vm585, -inf, %v871
        %v916 = vsel %vm585, -inf, %v874
        %v917 = vsel %vm585, -inf, %v879
        %v918 = vsel %vm585, -inf, %v882
        %v919 = vsel %vm585, -inf, %v887
        %v920 = vsel %vm585, -inf, %v890
        %v921 = vsel %vm585, -inf, %v895
        %v922 = vsel %vm585, -inf, %v898
        %v923 = vsel %vm585, -inf, %v903
        %v924 = vsel %vm585, -inf, %v906
        %925 = vmax.xlane.f32.xlu0 %v909
        %v926 = vpop.xlane.xlu0 %925
        %927 = vmax.xlane.f32.xlu0 %v910
        %v928 = vpop.xlane.xlu0 %927
        %929 = vmax.xlane.f32.xlu0 %v911
        %v930 = vpop.xlane.xlu0 %929
        %931 = vmax.xlane.f32.xlu0 %v912
        %v932 = vpop.xlane.xlu0 %931
        %933 = vmax.xlane.f32.xlu0 %v913
        %v934 = vpop.xlane.xlu0 %933
        %935 = vmax.xlane.f32.xlu0 %v914
        %v936 = vpop.xlane.xlu0 %935
        %937 = vmax.xlane.f32.xlu0 %v915
        %v938 = vpop.xlane.xlu0 %937
        %939 = vmax.xlane.f32.xlu0 %v916
        %v940 = vpop.xlane.xlu0 %939
        %941 = vmax.xlane.f32.xlu0 %v917
        %v942 = vpop.xlane.xlu0 %941
        %943 = vmax.xlane.f32.xlu0 %v918
        %v944 = vpop.xlane.xlu0 %943
        %945 = vmax.xlane.f32.xlu0 %v919
        %v946 = vpop.xlane.xlu0 %945
        %947 = vmax.xlane.f32.xlu0 %v920
        %v948 = vpop.xlane.xlu0 %947
        %949 = vmax.xlane.f32.xlu0 %v921
        %v950 = vpop.xlane.xlu0 %949
        %951 = vmax.xlane.f32.xlu0 %v922
        %v952 = vpop.xlane.xlu0 %951
        %953 = vmax.xlane.f32.xlu0 %v923
        %v954 = vpop.xlane.xlu0 %953
        %955 = vmax.xlane.f32.xlu0 %v924
        %v956 = vpop.xlane.xlu0 %955
        %v957 = vsub.f32 %v909, %v926
        %v958 = vsub.f32 %v910, %v928
        %v959 = vsub.f32 %v911, %v930
        %v960 = vsub.f32 %v912, %v932
        %v961 = vsub.f32 %v913, %v934
        %v962 = vsub.f32 %v914, %v936
        %v963 = vsub.f32 %v915, %v938
        %v964 = vsub.f32 %v916, %v940
        %v965 = vsub.f32 %v917, %v942
        %v966 = vsub.f32 %v918, %v944
        %v967 = vsub.f32 %v919, %v946
        %v968 = vsub.f32 %v920, %v948
        %v969 = vsub.f32 %v921, %v950
        %v970 = vsub.f32 %v922, %v952
        %v971 = vsub.f32 %v923, %v954
        %v972 = vsub.f32 %v924, %v956
        %v973 = vmul.f32 %v957, 1.442695
        %v974 = vpow.pop %v973
        %v975 = vmul.f32 %v958, 1.442695
        %v976 = vpow.pop %v975
        %v977 = vmul.f32 %v959, 1.442695
        %v978 = vpow.pop %v977
        %v979 = vmul.f32 %v960, 1.442695
        %v980 = vpow.pop %v979
        %v981 = vmul.f32 %v961, 1.442695
        %v982 = vpow.pop %v981
        %v983 = vmul.f32 %v962, 1.442695
        %v984 = vpow.pop %v983
        %v985 = vmul.f32 %v963, 1.442695
        %v986 = vpow.pop %v985
        %v987 = vmul.f32 %v964, 1.442695
        %v988 = vpow.pop %v987
        %v989 = vmul.f32 %v965, 1.442695
        %v990 = vpow.pop %v989
        %v991 = vmul.f32 %v966, 1.442695
        %v992 = vpow.pop %v991
        %v993 = vmul.f32 %v967, 1.442695
        %v994 = vpow.pop %v993
        %v995 = vmul.f32 %v968, 1.442695
        %v996 = vpow.pop %v995
        %v997 = vmul.f32 %v969, 1.442695
        %v998 = vpow.pop %v997
        %v999 = vmul.f32 %v970, 1.442695
        %v1000 = vpow.pop %v999
        %v1001 = vmul.f32 %v971, 1.442695
        %v1002 = vpow.pop %v1001
        %v1003 = vmul.f32 %v972, 1.442695
        %v1004 = vpow.pop %v1003
        %1005 = vadd.xlane.f32.xlu0 %v974
        %v1006 = vpop.xlane.xlu0 %1005
        %1007 = vadd.xlane.f32.xlu0 %v976
        %v1008 = vpop.xlane.xlu0 %1007
        %1009 = vadd.xlane.f32.xlu0 %v978
        %v1010 = vpop.xlane.xlu0 %1009
        %1011 = vadd.xlane.f32.xlu0 %v980
        %v1012 = vpop.xlane.xlu0 %1011
        %1013 = vadd.xlane.f32.xlu0 %v982
        %v1014 = vpop.xlane.xlu0 %1013
        %1015 = vadd.xlane.f32.xlu0 %v984
        %v1016 = vpop.xlane.xlu0 %1015
        %1017 = vadd.xlane.f32.xlu0 %v986
        %v1018 = vpop.xlane.xlu0 %1017
        %1019 = vadd.xlane.f32.xlu0 %v988
        %v1020 = vpop.xlane.xlu0 %1019
        %1021 = vadd.xlane.f32.xlu0 %v990
        %v1022 = vpop.xlane.xlu0 %1021
        %1023 = vadd.xlane.f32.xlu0 %v992
        %v1024 = vpop.xlane.xlu0 %1023
        %1025 = vadd.xlane.f32.xlu0 %v994
        %v1026 = vpop.xlane.xlu0 %1025
        %1027 = vadd.xlane.f32.xlu0 %v996
        %v1028 = vpop.xlane.xlu0 %1027
        %1029 = vadd.xlane.f32.xlu0 %v998
        %v1030 = vpop.xlane.xlu0 %1029
        %1031 = vadd.xlane.f32.xlu0 %v1000
        %v1032 = vpop.xlane.xlu0 %1031
        %1033 = vadd.xlane.f32.xlu0 %v1002
        %v1034 = vpop.xlane.xlu0 %1033
        %1035 = vadd.xlane.f32.xlu0 %v1004
        %v1036 = vpop.xlane.xlu0 %1035
        %v1037 = vrcp.pop %v1006
        %v1038 = vrcp.pop %v1008
        %v1039 = vrcp.pop %v1010
        %v1040 = vrcp.pop %v1012
        %v1041 = vrcp.pop %v1014
        %v1042 = vrcp.pop %v1016
        %v1043 = vrcp.pop %v1018
        %v1044 = vrcp.pop %v1020
        %v1045 = vrcp.pop %v1022
        %v1046 = vrcp.pop %v1024
        %v1047 = vrcp.pop %v1026
        %v1048 = vrcp.pop %v1028
        %v1049 = vrcp.pop %v1030
        %v1050 = vrcp.pop %v1032
        %v1051 = vrcp.pop %v1034
        %v1052 = vrcp.pop %v1036
        %v1053 = vmul.f32 %v974, %v1037
        %v1054 = vmul.f32 %v976, %v1038
        %v1055 = vmul.f32 %v978, %v1039
        %v1056 = vmul.f32 %v980, %v1040
        %v1057 = vmul.f32 %v982, %v1041
        %v1058 = vmul.f32 %v984, %v1042
        %v1059 = vmul.f32 %v986, %v1043
        %v1060 = vmul.f32 %v988, %v1044
        %v1061 = vmul.f32 %v990, %v1045
        %v1062 = vmul.f32 %v992, %v1046
        %v1063 = vmul.f32 %v994, %v1047
        %v1064 = vmul.f32 %v996, %v1048
        %v1065 = vmul.f32 %v998, %v1049
        %v1066 = vmul.f32 %v1000, %v1050
        %v1067 = vmul.f32 %v1002, %v1051
        %v1068 = vmul.f32 %v1004, %v1052
        %v1069 = vpack.c.bf16 %v1054, %v1053
        %v1070 = vpack.c.bf16 %v1056, %v1055
        %v1071 = vpack.c.bf16 %v1058, %v1057
        %v1072 = vpack.c.bf16 %v1060, %v1059
        %v1073 = vpack.c.bf16 %v1062, %v1061
        %v1074 = vpack.c.bf16 %v1064, %v1063
        %v1075 = vpack.c.bf16 %v1066, %v1065
        %v1076 = vpack.c.bf16 %v1068, %v1067
        %v1085 = vunpack.c.l.b16 %v1069
        %v1086 = vunpack.c.h.b16 %v1069
        %v1087 = vunpack.c.l.b16 %v1070
        %v1088 = vunpack.c.h.b16 %v1070
        %v1089 = vunpack.c.l.b16 %v1071
        %v1090 = vunpack.c.h.b16 %v1071
        %v1091 = vunpack.c.l.b16 %v1072
        %v1092 = vunpack.c.h.b16 %v1072
        %v1093 = vunpack.c.l.b16 %v1073
        %v1094 = vunpack.c.h.b16 %v1073
        %v1095 = vunpack.c.l.b16 %v1074
        %v1096 = vunpack.c.h.b16 %v1074
        %v1097 = vunpack.c.l.b16 %v1075
        %v1098 = vunpack.c.h.b16 %v1075
        %v1099 = vunpack.c.l.b16 %v1076
        %v1100 = vunpack.c.h.b16 %v1076
        %v1101 = vpack.c.b16 %v1085, %v1085
        %v1102 = vpack.c.b16 %v1086, %v1086
        %v1103 = vpack.c.b16 %v1087, %v1087
        %v1104 = vpack.c.b16 %v1088, %v1088
        %v1105 = vpack.c.b16 %v1089, %v1089
        %v1106 = vpack.c.b16 %v1090, %v1090
        %v1107 = vpack.c.b16 %v1091, %v1091
        %v1108 = vpack.c.b16 %v1092, %v1092
        %v1109 = vpack.c.b16 %v1093, %v1093
        %v1110 = vpack.c.b16 %v1094, %v1094
        %v1111 = vpack.c.b16 %v1095, %v1095
        %v1112 = vpack.c.b16 %v1096, %v1096
        %v1113 = vpack.c.b16 %v1097, %v1097
        %v1114 = vpack.c.b16 %v1098, %v1098
        %v1115 = vpack.c.b16 %v1099, %v1099
        %v1116 = vpack.c.b16 %v1100, %v1100
        %1133 = vst [vmem:[%s530] sm:$0xf] %v1101
        %1134 = vst [vmem:[%s530 + $0x4] sm:$0xf] %v1102
        %1135 = vst [vmem:[%s530 + $0x8] sm:$0xf] %v1103
        %1136 = vst [vmem:[%s530 + $0xc] sm:$0xf] %v1104
        %1137 = vst [vmem:[%s530 + $0x10] sm:$0xf] %v1105
        %1138 = vst [vmem:[%s530 + $0x14] sm:$0xf] %v1106
        %1139 = vst [vmem:[%s530 + $0x18] sm:$0xf] %v1107
        %1140 = vst [vmem:[%s530 + $0x1c] sm:$0xf] %v1108
        %1141 = vst [vmem:[%s530 + $0x20] sm:$0xf] %v1109
        %1142 = vst [vmem:[%s530 + $0x24] sm:$0xf] %v1110
        %1143 = vst [vmem:[%s530 + $0x28] sm:$0xf] %v1111
        %1144 = vst [vmem:[%s530 + $0x2c] sm:$0xf] %v1112
        %1145 = vst [vmem:[%s530 + $0x30] sm:$0xf] %v1113
        %1146 = vst [vmem:[%s530 + $0x34] sm:$0xf] %v1114
        %1147 = vst [vmem:[%s530 + $0x38] sm:$0xf] %v1115
        %1148 = vst [vmem:[%s530 + $0x3c] sm:$0xf] %v1116
        %1149 = vrot.lane.b32.xlu0 %v731, 96
        %v1150 = vpop.permute.xlu0 %1149
        %1151 = vrot.lane.b32.xlu0 %v732, 96
        %v1152 = vpop.permute.xlu0 %1151
        %1153 = vrot.lane.b32.xlu0 %v733, 96
        %v1154 = vpop.permute.xlu0 %1153
        %1155 = vrot.lane.b32.xlu0 %v734, 96
        %v1156 = vpop.permute.xlu0 %1155
        %1157 = vrot.lane.b32.xlu0 %v735, 96
        %v1158 = vpop.permute.xlu0 %1157
        %1159 = vrot.lane.b32.xlu0 %v736, 96
        %v1160 = vpop.permute.xlu0 %1159
        %1161 = vrot.lane.b32.xlu0 %v737, 96
        %v1162 = vpop.permute.xlu0 %1161
        %1163 = vrot.lane.b32.xlu0 %v738, 96
        %v1164 = vpop.permute.xlu0 %1163
        %1173 = vmatprep.subr.bf16.mxu0 0
        %1174 = vmatpush1.bf16.msra.mxu0 %v1150
        %1175 = vmatprep.subr.bf16.mxu0 0
        %1176 = vmatpush1.bf16.msra.mxu0 %v1152
        %1177 = vmatprep.subr.bf16.mxu0 0
        %1178 = vmatpush1.bf16.msra.mxu0 %v1154
        %1179 = vmatprep.subr.bf16.mxu0 0
        %1180 = vmatpush1.bf16.msra.mxu0 %v1156
        %1181 = vmatprep.subr.bf16.mxu0 0
        %1182 = vmatpush1.bf16.msra.mxu0 %v1158
        %1183 = vmatprep.subr.bf16.mxu0 0
        %1184 = vmatpush1.bf16.msra.mxu0 %v1160
        %1185 = vmatprep.subr.bf16.mxu0 0
        %1186 = vmatpush1.bf16.msra.mxu0 %v1162
        %1187 = vmatprep.subr.bf16.mxu0 0
        %1188 = vmatpush1.bf16.msra.mxu0 %v1164
        %1189 = vmatprep.subr.bf16.mxu0 0
        %1190 = vmatpush1.bf16.msra.mxu0 0
        %1191 = vmatprep.subr.bf16.mxu0 0
        %1192 = vmatpush1.bf16.msra.mxu0 0
        %1193 = vmatprep.subr.bf16.mxu0 0
        %1194 = vmatpush1.bf16.msra.mxu0 0
        %1195 = vmatprep.subr.bf16.mxu0 0
        %1196 = vmatpush1.bf16.msra.mxu0 0
        %1197 = vmatprep.subr.bf16.mxu0 0
        %1198 = vmatpush1.bf16.msra.mxu0 0
        %1199 = vmatprep.subr.bf16.mxu0 0
        %1200 = vmatpush1.bf16.msra.mxu0 0
        %1201 = vmatprep.subr.bf16.mxu0 0
        %1202 = vmatpush1.bf16.msra.mxu0 0
        %1203 = vmatprep.subr.bf16.mxu0 0
        %1204 = vmatpush1.bf16.msra.mxu0 0
        %1205 = vmatprep.mubr.bf16.mxu0 0
        %1206 = vmatmul.mubr.bf16.gmra.mrb[0].mxu0 %v1069
        %v1207 = vpop.f32.mrb[0].mxu0
        %v1208 = vadd.f32 0.0, %v1207
        %v1209 = vpop.f32.mrb[0].mxu0
        %v1210 = vpop.f32.mrb[0].mxu0
        %v1211 = vadd.f32 0.0, %v1210
        %v1212 = vpop.f32.mrb[0].mxu0
        %1213 = vmatprep.mubr.bf16.mxu0 0
        %1214 = vmatmul.mubr.bf16.gmra.mrb[0].mxu0 %v1070
        %v1215 = vpop.f32.mrb[0].mxu0
        %v1216 = vadd.f32 0.0, %v1215
        %v1217 = vpop.f32.mrb[0].mxu0
        %v1218 = vpop.f32.mrb[0].mxu0
        %v1219 = vadd.f32 0.0, %v1218
        %v1220 = vpop.f32.mrb[0].mxu0
        %1221 = vmatprep.mubr.bf16.mxu0 0
        %1222 = vmatmul.mubr.bf16.gmra.mrb[0].mxu0 %v1071
        %v1223 = vpop.f32.mrb[0].mxu0
        %v1224 = vadd.f32 0.0, %v1223
        %v1225 = vpop.f32.mrb[0].mxu0
        %v1226 = vpop.f32.mrb[0].mxu0
        %v1227 = vadd.f32 0.0, %v1226
        %v1228 = vpop.f32.mrb[0].mxu0
        %1229 = vmatprep.mubr.bf16.mxu0 0
        %1230 = vmatmul.mubr.bf16.gmra.mrb[0].mxu0 %v1072
        %v1231 = vpop.f32.mrb[0].mxu0
        %v1232 = vadd.f32 0.0, %v1231
        %v1233 = vpop.f32.mrb[0].mxu0
        %v1234 = vpop.f32.mrb[0].mxu0
        %v1235 = vadd.f32 0.0, %v1234
        %v1236 = vpop.f32.mrb[0].mxu0
        %1237 = vmatprep.mubr.bf16.mxu0 0
        %1238 = vmatmul.mubr.bf16.gmra.mrb[0].mxu0 %v1073
        %v1239 = vpop.f32.mrb[0].mxu0
        %v1240 = vadd.f32 0.0, %v1239
        %v1241 = vpop.f32.mrb[0].mxu0
        %v1242 = vpop.f32.mrb[0].mxu0
        %v1243 = vadd.f32 0.0, %v1242
        %v1244 = vpop.f32.mrb[0].mxu0
        %1245 = vmatprep.mubr.bf16.mxu0 0
        %1246 = vmatmul.mubr.bf16.gmra.mrb[0].mxu0 %v1074
        %v1247 = vpop.f32.mrb[0].mxu0
        %v1248 = vadd.f32 0.0, %v1247
        %v1249 = vpop.f32.mrb[0].mxu0
        %v1250 = vpop.f32.mrb[0].mxu0
        %v1251 = vadd.f32 0.0, %v1250
        %v1252 = vpop.f32.mrb[0].mxu0
        %1253 = vmatprep.mubr.bf16.mxu0 0
        %1254 = vmatmul.mubr.bf16.gmra.mrb[0].mxu0 %v1075
        %v1255 = vpop.f32.mrb[0].mxu0
        %v1256 = vadd.f32 0.0, %v1255
        %v1257 = vpop.f32.mrb[0].mxu0
        %v1258 = vpop.f32.mrb[0].mxu0
        %v1259 = vadd.f32 0.0, %v1258
        %v1260 = vpop.f32.mrb[0].mxu0
        %1261 = vmatprep.mubr.bf16.mxu0 0
        %1262 = vmatmul.mubr.bf16.gmra.mrb[0].mxu0 %v1076
        %v1263 = vpop.f32.mrb[0].mxu0
        %v1264 = vadd.f32 0.0, %v1263
        %v1265 = vpop.f32.mrb[0].mxu0
        %v1266 = vpop.f32.mrb[0].mxu0
        %v1267 = vadd.f32 0.0, %v1266
        %v1268 = vpop.f32.mrb[0].mxu0
        %1269 = vdwg.mxu0
        %v1270 = vpack.c.bf16 %v1211, %v1208
        %v1271 = vpack.c.bf16 %v1219, %v1216
        %v1272 = vpack.c.bf16 %v1227, %v1224
        %v1273 = vpack.c.bf16 %v1235, %v1232
        %v1274 = vpack.c.bf16 %v1243, %v1240
        %v1275 = vpack.c.bf16 %v1251, %v1248
        %v1276 = vpack.c.bf16 %v1259, %v1256
        %v1277 = vpack.c.bf16 %v1267, %v1264
        %v1278 = vld [vmem:[%s548] sm:$0xf]
        %v1279 = vld [vmem:[%s548 + $0x4] sm:$0xf]
        %v1282 = vunpack.c.l.b16 %v1278
        %v1283 = vunpack.c.l.b16 %v1279
        %v1284 = vpack.c.b16 %v1283, %v1282
        %v1287 = vsel %vm763, %v1270, 0
        %v1290 = vsel %vm763, %v1271, 0
        %v1293 = vsel %vm763, %v1272, 0
        %v1296 = vsel %vm763, %v1273, 0
        %v1299 = vsel %vm763, %v1274, 0
        %v1302 = vsel %vm763, %v1275, 0
        %v1305 = vsel %vm763, %v1276, 0
        %v1308 = vsel %vm763, %v1277, 0
        %1310 = vmatprep.subr.bf16.mxu0 0
        %1311 = vmatpush1.bf16.msra.mxu0 %v1284
        %1312 = vmatprep.subr.bf16.mxu0 0
        %1313 = vmatpush1.bf16.msra.mxu0 0
        %1314 = vmatprep.subr.bf16.mxu0 0
        %1315 = vmatpush1.bf16.msra.mxu0 0
        %1316 = vmatprep.subr.bf16.mxu0 0
        %1317 = vmatpush1.bf16.msra.mxu0 0
        %1318 = vmatprep.subr.bf16.mxu0 0
        %1319 = vmatpush1.bf16.msra.mxu0 0
        %1320 = vmatprep.subr.bf16.mxu0 0
        %1321 = vmatpush1.bf16.msra.mxu0 0
        %1322 = vmatprep.subr.bf16.mxu0 0
        %1323 = vmatpush1.bf16.msra.mxu0 0
        %1324 = vmatprep.subr.bf16.mxu0 0
        %1325 = vmatpush1.bf16.msra.mxu0 0
        %1326 = vmatprep.subr.bf16.mxu0 0
        %1327 = vmatpush1.bf16.msra.mxu0 0
        %1328 = vmatprep.subr.bf16.mxu0 0
        %1329 = vmatpush1.bf16.msra.mxu0 0
        %1330 = vmatprep.subr.bf16.mxu0 0
        %1331 = vmatpush1.bf16.msra.mxu0 0
        %1332 = vmatprep.subr.bf16.mxu0 0
        %1333 = vmatpush1.bf16.msra.mxu0 0
        %1334 = vmatprep.subr.bf16.mxu0 0
        %1335 = vmatpush1.bf16.msra.mxu0 0
        %1336 = vmatprep.subr.bf16.mxu0 0
        %1337 = vmatpush1.bf16.msra.mxu0 0
        %1338 = vmatprep.subr.bf16.mxu0 0
        %1339 = vmatpush1.bf16.msra.mxu0 0
        %1340 = vmatprep.subr.bf16.mxu0 0
        %1341 = vmatpush1.bf16.msra.mxu0 0
        %1342 = vmatprep.mubr.bf16.mxu0 0
        %1343 = vmatmul.mubr.bf16.gmra.mrb[0].mxu0 %v1287
        %v1344 = vpop.f32.mrb[0].mxu0
        %v1345 = vadd.f32 0.0, %v1344
        %v1346 = vpop.f32.mrb[0].mxu0
        %v1347 = vpop.f32.mrb[0].mxu0
        %v1348 = vadd.f32 0.0, %v1347
        %v1349 = vpop.f32.mrb[0].mxu0
        %1350 = vmatprep.mubr.bf16.mxu0 0
        %1351 = vmatmul.mubr.bf16.gmra.mrb[0].mxu0 %v1290
        %v1352 = vpop.f32.mrb[0].mxu0
        %v1353 = vadd.f32 0.0, %v1352
        %v1354 = vpop.f32.mrb[0].mxu0
        %v1355 = vpop.f32.mrb[0].mxu0
        %v1356 = vadd.f32 0.0, %v1355
        %v1357 = vpop.f32.mrb[0].mxu0
        %1358 = vmatprep.mubr.bf16.mxu0 0
        %1359 = vmatmul.mubr.bf16.gmra.mrb[0].mxu0 %v1293
        %v1360 = vpop.f32.mrb[0].mxu0
        %v1361 = vadd.f32 0.0, %v1360
        %v1362 = vpop.f32.mrb[0].mxu0
        %v1363 = vpop.f32.mrb[0].mxu0
        %v1364 = vadd.f32 0.0, %v1363
        %v1365 = vpop.f32.mrb[0].mxu0
        %1366 = vmatprep.mubr.bf16.mxu0 0
        %1367 = vmatmul.mubr.bf16.gmra.mrb[0].mxu0 %v1296
        %v1368 = vpop.f32.mrb[0].mxu0
        %v1369 = vadd.f32 0.0, %v1368
        %v1370 = vpop.f32.mrb[0].mxu0
        %v1371 = vpop.f32.mrb[0].mxu0
        %v1372 = vadd.f32 0.0, %v1371
        %v1373 = vpop.f32.mrb[0].mxu0
        %1374 = vmatprep.mubr.bf16.mxu0 0
        %1375 = vmatmul.mubr.bf16.gmra.mrb[0].mxu0 %v1299
        %v1376 = vpop.f32.mrb[0].mxu0
        %v1377 = vadd.f32 0.0, %v1376
        %v1378 = vpop.f32.mrb[0].mxu0
        %v1379 = vpop.f32.mrb[0].mxu0
        %v1380 = vadd.f32 0.0, %v1379
        %v1381 = vpop.f32.mrb[0].mxu0
        %1382 = vmatprep.mubr.bf16.mxu0 0
        %1383 = vmatmul.mubr.bf16.gmra.mrb[0].mxu0 %v1302
        %v1384 = vpop.f32.mrb[0].mxu0
        %v1385 = vadd.f32 0.0, %v1384
        %v1386 = vpop.f32.mrb[0].mxu0
        %v1387 = vpop.f32.mrb[0].mxu0
        %v1388 = vadd.f32 0.0, %v1387
        %v1389 = vpop.f32.mrb[0].mxu0
        %1390 = vmatprep.mubr.bf16.mxu0 0
        %1391 = vmatmul.mubr.bf16.gmra.mrb[0].mxu0 %v1305
        %v1392 = vpop.f32.mrb[0].mxu0
        %v1393 = vadd.f32 0.0, %v1392
        %v1394 = vpop.f32.mrb[0].mxu0
        %v1395 = vpop.f32.mrb[0].mxu0
        %v1396 = vadd.f32 0.0, %v1395
        %v1397 = vpop.f32.mrb[0].mxu0
        %1398 = vmatprep.mubr.bf16.mxu0 0
        %1399 = vmatmul.mubr.bf16.gmra.mrb[0].mxu0 %v1308
        %v1400 = vpop.f32.mrb[0].mxu0
        %v1401 = vadd.f32 0.0, %v1400
        %v1402 = vpop.f32.mrb[0].mxu0
        %v1403 = vpop.f32.mrb[0].mxu0
        %v1404 = vadd.f32 0.0, %v1403
        %v1405 = vpop.f32.mrb[0].mxu0
        %1406 = vdwg.mxu0
        %p1407 = scmp.eq.s32.totalorder %s41, 0
        // Predicated region
        $region73: #{tpu_custom_call.1} parent=71 // pred_check
          %p1408 = pneg %p1407
        $region74: #{tpu_custom_call.1} parent=71 // pred_check_branch
          %1410 = sbr.rel (%p1408) target = $region76
        $region75: #{tpu_custom_call.1} parent=71 // pred_region
          %1411 = vst.msk [vmem:[#allocation2] sm:$0xff] %vm609, 0.0
          %1412 = vst.msk [vmem:[#allocation2 + $0x8] sm:$0xff] %vm609, 0.0
          %1413 = vst.msk [vmem:[#allocation2 + $0x10] sm:$0xff] %vm609, 0.0
          %1414 = vst.msk [vmem:[#allocation2 + $0x18] sm:$0xff] %vm609, 0.0
          %1415 = vst.msk [vmem:[#allocation2 + $0x20] sm:$0xff] %vm609, 0.0
          %1416 = vst.msk [vmem:[#allocation2 + $0x28] sm:$0xff] %vm609, 0.0
          %1417 = vst.msk [vmem:[#allocation2 + $0x30] sm:$0xff] %vm609, 0.0
          %1418 = vst.msk [vmem:[#allocation2 + $0x38] sm:$0xff] %vm609, 0.0
          %1419 = vst.msk [vmem:[#allocation2 + $0x40] sm:$0xff] %vm609, 0.0
          %1420 = vst.msk [vmem:[#allocation2 + $0x48] sm:$0xff] %vm609, 0.0
          %1421 = vst.msk [vmem:[#allocation2 + $0x50] sm:$0xff] %vm609, 0.0
          %1422 = vst.msk [vmem:[#allocation2 + $0x58] sm:$0xff] %vm609, 0.0
          %1423 = vst.msk [vmem:[#allocation2 + $0x60] sm:$0xff] %vm609, 0.0
          %1424 = vst.msk [vmem:[#allocation2 + $0x68] sm:$0xff] %vm609, 0.0
          %1425 = vst.msk [vmem:[#allocation2 + $0x70] sm:$0xff] %vm609, 0.0
          %1426 = vst.msk [vmem:[#allocation2 + $0x78] sm:$0xff] %vm609, 0.0
        $region76: #{tpu_custom_call.1} parent=71 // pred_fallthru
          _
        %v1427 = vld [vmem:[#allocation2] sm:$0xff]
        %v1428 = vld [vmem:[#allocation2 + $0x8] sm:$0xff]
        %v1429 = vld [vmem:[#allocation2 + $0x10] sm:$0xff]
        %v1430 = vld [vmem:[#allocation2 + $0x18] sm:$0xff]
        %v1431 = vld [vmem:[#allocation2 + $0x20] sm:$0xff]
        %v1432 = vld [vmem:[#allocation2 + $0x28] sm:$0xff]
        %v1433 = vld [vmem:[#allocation2 + $0x30] sm:$0xff]
        %v1434 = vld [vmem:[#allocation2 + $0x38] sm:$0xff]
        %v1435 = vld [vmem:[#allocation2 + $0x40] sm:$0xff]
        %v1436 = vld [vmem:[#allocation2 + $0x48] sm:$0xff]
        %v1437 = vld [vmem:[#allocation2 + $0x50] sm:$0xff]
        %v1438 = vld [vmem:[#allocation2 + $0x58] sm:$0xff]
        %v1439 = vld [vmem:[#allocation2 + $0x60] sm:$0xff]
        %v1440 = vld [vmem:[#allocation2 + $0x68] sm:$0xff]
        %v1441 = vld [vmem:[#allocation2 + $0x70] sm:$0xff]
        %v1442 = vld [vmem:[#allocation2 + $0x78] sm:$0xff]
        %v1443 = vadd.f32 %v1427, %v1345
        %v1444 = vadd.f32 %v1428, %v1348
        %v1445 = vadd.f32 %v1429, %v1353
        %v1446 = vadd.f32 %v1430, %v1356
        %v1447 = vadd.f32 %v1431, %v1361
        %v1448 = vadd.f32 %v1432, %v1364
        %v1449 = vadd.f32 %v1433, %v1369
        %v1450 = vadd.f32 %v1434, %v1372
        %v1451 = vadd.f32 %v1435, %v1377
        %v1452 = vadd.f32 %v1436, %v1380
        %v1453 = vadd.f32 %v1437, %v1385
        %v1454 = vadd.f32 %v1438, %v1388
        %v1455 = vadd.f32 %v1439, %v1393
        %v1456 = vadd.f32 %v1440, %v1396
        %v1457 = vadd.f32 %v1441, %v1401
        %v1458 = vadd.f32 %v1442, %v1404
        %1459 = vst.msk [vmem:[#allocation2] sm:$0xff] %vm609, %v1443
        %1460 = vst.msk [vmem:[#allocation2 + $0x8] sm:$0xff] %vm609, %v1444
        %1461 = vst.msk [vmem:[#allocation2 + $0x10] sm:$0xff] %vm609, %v1445
        %1462 = vst.msk [vmem:[#allocation2 + $0x18] sm:$0xff] %vm609, %v1446
        %1463 = vst.msk [vmem:[#allocation2 + $0x20] sm:$0xff] %vm609, %v1447
        %1464 = vst.msk [vmem:[#allocation2 + $0x28] sm:$0xff] %vm609, %v1448
        %1465 = vst.msk [vmem:[#allocation2 + $0x30] sm:$0xff] %vm609, %v1449
        %1466 = vst.msk [vmem:[#allocation2 + $0x38] sm:$0xff] %vm609, %v1450
        %1467 = vst.msk [vmem:[#allocation2 + $0x40] sm:$0xff] %vm609, %v1451
        %1468 = vst.msk [vmem:[#allocation2 + $0x48] sm:$0xff] %vm609, %v1452
        %1469 = vst.msk [vmem:[#allocation2 + $0x50] sm:$0xff] %vm609, %v1453
        %1470 = vst.msk [vmem:[#allocation2 + $0x58] sm:$0xff] %vm609, %v1454
        %1471 = vst.msk [vmem:[#allocation2 + $0x60] sm:$0xff] %vm609, %v1455
        %1472 = vst.msk [vmem:[#allocation2 + $0x68] sm:$0xff] %vm609, %v1456
        %1473 = vst.msk [vmem:[#allocation2 + $0x70] sm:$0xff] %vm609, %v1457
        %1474 = vst.msk [vmem:[#allocation2 + $0x78] sm:$0xff] %vm609, %v1458
        %p1475 = scmp.eq.s32.totalorder %s41, 1
        // Predicated region
        $region77: #{tpu_custom_call.1} parent=71 // pred_check
          %p1476 = pneg %p1475
        $region78: #{tpu_custom_call.1} parent=71 // pred_check_branch
          %1478 = sbr.rel (%p1476) target = $region80
        $region79: #{tpu_custom_call.1} parent=71 // pred_region
          %v1479 = vlaneseq
          %v1480 = vshrl.u32 %v1479, 7
          %v1481 = vadd.s32 %v1480, 8
          %v1482 = vadd.s32 %v1480, 16
          %v1483 = vadd.s32 %v1480, 24
          %v1484 = vadd.s32 %v1480, 32
          %v1485 = vadd.s32 %v1480, 40
          %v1486 = vadd.s32 %v1480, 48
          %v1487 = vadd.s32 %v1480, 56
          %v1488 = vadd.s32 %v1480, 64
          %v1489 = vadd.s32 %v1480, 72
          %v1490 = vadd.s32 %v1480, 80
          %v1491 = vadd.s32 %v1480, 88
          %v1492 = vadd.s32 %v1480, 96
          %v1493 = vadd.s32 %v1480, 104
          %v1494 = vadd.s32 %v1480, 112
          %v1495 = vadd.s32 %v1480, 120
          %v1496 = vstv %s555
          %vm1497 = vcmp.lt.s32.totalorder %v1480, %v1496
          %vm1498 = vcmp.lt.s32.totalorder %v1481, %v1496
          %vm1499 = vcmp.lt.s32.totalorder %v1482, %v1496
          %vm1500 = vcmp.lt.s32.totalorder %v1483, %v1496
          %vm1501 = vcmp.lt.s32.totalorder %v1484, %v1496
          %vm1502 = vcmp.lt.s32.totalorder %v1485, %v1496
          %vm1503 = vcmp.lt.s32.totalorder %v1486, %v1496
          %vm1504 = vcmp.lt.s32.totalorder %v1487, %v1496
          %vm1505 = vcmp.lt.s32.totalorder %v1488, %v1496
          %vm1506 = vcmp.lt.s32.totalorder %v1489, %v1496
          %vm1507 = vcmp.lt.s32.totalorder %v1490, %v1496
          %vm1508 = vcmp.lt.s32.totalorder %v1491, %v1496
          %vm1509 = vcmp.lt.s32.totalorder %v1492, %v1496
          %vm1510 = vcmp.lt.s32.totalorder %v1493, %v1496
          %vm1511 = vcmp.lt.s32.totalorder %v1494, %v1496
          %vm1512 = vcmp.lt.s32.totalorder %v1495, %v1496
          %v1513 = vsel %vm1497, 1, 0
          %v1514 = vsel %vm1498, 1, 0
          %v1515 = vsel %vm1499, 1, 0
          %v1516 = vsel %vm1500, 1, 0
          %v1517 = vsel %vm1501, 1, 0
          %v1518 = vsel %vm1502, 1, 0
          %v1519 = vsel %vm1503, 1, 0
          %v1520 = vsel %vm1504, 1, 0
          %v1521 = vsel %vm1505, 1, 0
          %v1522 = vsel %vm1506, 1, 0
          %v1523 = vsel %vm1507, 1, 0
          %v1524 = vsel %vm1508, 1, 0
          %v1525 = vsel %vm1509, 1, 0
          %v1526 = vsel %vm1510, 1, 0
          %v1527 = vsel %vm1511, 1, 0
          %v1528 = vsel %vm1512, 1, 0
          %v1529 = vcvt.s32.f32 %v1513
          %v1530 = vcvt.s32.f32 %v1514
          %v1531 = vcvt.s32.f32 %v1515
          %v1532 = vcvt.s32.f32 %v1516
          %v1533 = vcvt.s32.f32 %v1517
          %v1534 = vcvt.s32.f32 %v1518
          %v1535 = vcvt.s32.f32 %v1519
          %v1536 = vcvt.s32.f32 %v1520
          %v1537 = vcvt.s32.f32 %v1521
          %v1538 = vcvt.s32.f32 %v1522
          %v1539 = vcvt.s32.f32 %v1523
          %v1540 = vcvt.s32.f32 %v1524
          %v1541 = vcvt.s32.f32 %v1525
          %v1542 = vcvt.s32.f32 %v1526
          %v1543 = vcvt.s32.f32 %v1527
          %v1544 = vcvt.s32.f32 %v1528
          %v1545 = vld [vmem:[#allocation2] sm:$0xff]
          %v1546 = vld [vmem:[#allocation2 + $0x8] sm:$0xff]
          %v1547 = vld [vmem:[#allocation2 + $0x10] sm:$0xff]
          %v1548 = vld [vmem:[#allocation2 + $0x18] sm:$0xff]
          %v1549 = vld [vmem:[#allocation2 + $0x20] sm:$0xff]
          %v1550 = vld [vmem:[#allocation2 + $0x28] sm:$0xff]
          %v1551 = vld [vmem:[#allocation2 + $0x30] sm:$0xff]
          %v1552 = vld [vmem:[#allocation2 + $0x38] sm:$0xff]
          %v1553 = vld [vmem:[#allocation2 + $0x40] sm:$0xff]
          %v1554 = vld [vmem:[#allocation2 + $0x48] sm:$0xff]
          %v1555 = vld [vmem:[#allocation2 + $0x50] sm:$0xff]
          %v1556 = vld [vmem:[#allocation2 + $0x58] sm:$0xff]
          %v1557 = vld [vmem:[#allocation2 + $0x60] sm:$0xff]
          %v1558 = vld [vmem:[#allocation2 + $0x68] sm:$0xff]
          %v1559 = vld [vmem:[#allocation2 + $0x70] sm:$0xff]
          %v1560 = vld [vmem:[#allocation2 + $0x78] sm:$0xff]
          %v1561 = vld [vmem:[%s5] sm:$0x1]
          %v1563 = vlaneseq
          %v1564 = vshrl.u32 %v1563, 7
          %v1565 = vsub.s32 0, %v1564
          %v1566 = vrot.slane %v1561, %v1565
          %v1568 = vadd.f32 %v1545, %v1566
          %v1569 = vadd.f32 %v1546, %v1566
          %v1570 = vadd.f32 %v1547, %v1566
          %v1571 = vadd.f32 %v1548, %v1566
          %v1572 = vadd.f32 %v1549, %v1566
          %v1573 = vadd.f32 %v1550, %v1566
          %v1574 = vadd.f32 %v1551, %v1566
          %v1575 = vadd.f32 %v1552, %v1566
          %v1576 = vadd.f32 %v1553, %v1566
          %v1577 = vadd.f32 %v1554, %v1566
          %v1578 = vadd.f32 %v1555, %v1566
          %v1579 = vadd.f32 %v1556, %v1566
          %v1580 = vadd.f32 %v1557, %v1566
          %v1581 = vadd.f32 %v1558, %v1566
          %v1582 = vadd.f32 %v1559, %v1566
          %v1583 = vadd.f32 %v1560, %v1566
          %v1584 = vadd.f32 %v1568, %v558
          %v1585 = vadd.f32 %v1569, %v559
          %v1586 = vadd.f32 %v1570, %v560
          %v1587 = vadd.f32 %v1571, %v561
          %v1588 = vadd.f32 %v1572, %v562
          %v1589 = vadd.f32 %v1573, %v563
          %v1590 = vadd.f32 %v1574, %v564
          %v1591 = vadd.f32 %v1575, %v565
          %v1592 = vadd.f32 %v1576, %v566
          %v1593 = vadd.f32 %v1577, %v567
          %v1594 = vadd.f32 %v1578, %v568
          %v1595 = vadd.f32 %v1579, %v569
          %v1596 = vadd.f32 %v1580, %v570
          %v1597 = vadd.f32 %v1581, %v571
          %v1598 = vadd.f32 %v1582, %v572
          %v1599 = vadd.f32 %v1583, %v573
          %v1600 = vld [vmem:[%s6] sm:$0x1]
          %v1601 = vld [vmem:[%s7] sm:$0x1]
          %v1602 = vsel %vm609, %v1584, 0.0
          %1603 = vadd.xlane.f32.xlu0 %v1602
          %v1604 = vpop.xlane.xlu0 %1603
          %v1605 = vsel %vm609, %v1585, 0.0
          %1606 = vadd.xlane.f32.xlu0 %v1605
          %v1607 = vpop.xlane.xlu0 %1606
          %v1608 = vsel %vm609, %v1586, 0.0
          %1609 = vadd.xlane.f32.xlu0 %v1608
          %v1610 = vpop.xlane.xlu0 %1609
          %v1611 = vsel %vm609, %v1587, 0.0
          %1612 = vadd.xlane.f32.xlu0 %v1611
          %v1613 = vpop.xlane.xlu0 %1612
          %v1614 = vsel %vm609, %v1588, 0.0
          %1615 = vadd.xlane.f32.xlu0 %v1614
          %v1616 = vpop.xlane.xlu0 %1615
          %v1617 = vsel %vm609, %v1589, 0.0
          %1618 = vadd.xlane.f32.xlu0 %v1617
          %v1619 = vpop.xlane.xlu0 %1618
          %v1620 = vsel %vm609, %v1590, 0.0
          %1621 = vadd.xlane.f32.xlu0 %v1620
          %v1622 = vpop.xlane.xlu0 %1621
          %v1623 = vsel %vm609, %v1591, 0.0
          %1624 = vadd.xlane.f32.xlu0 %v1623
          %v1625 = vpop.xlane.xlu0 %1624
          %v1626 = vsel %vm609, %v1592, 0.0
          %1627 = vadd.xlane.f32.xlu0 %v1626
          %v1628 = vpop.xlane.xlu0 %1627
          %v1629 = vsel %vm609, %v1593, 0.0
          %1630 = vadd.xlane.f32.xlu0 %v1629
          %v1631 = vpop.xlane.xlu0 %1630
          %v1632 = vsel %vm609, %v1594, 0.0
          %1633 = vadd.xlane.f32.xlu0 %v1632
          %v1634 = vpop.xlane.xlu0 %1633
          %v1635 = vsel %vm609, %v1595, 0.0
          %1636 = vadd.xlane.f32.xlu0 %v1635
          %v1637 = vpop.xlane.xlu0 %1636
          %v1638 = vsel %vm609, %v1596, 0.0
          %1639 = vadd.xlane.f32.xlu0 %v1638
          %v1640 = vpop.xlane.xlu0 %1639
          %v1641 = vsel %vm609, %v1597, 0.0
          %1642 = vadd.xlane.f32.xlu0 %v1641
          %v1643 = vpop.xlane.xlu0 %1642
          %v1644 = vsel %vm609, %v1598, 0.0
          %1645 = vadd.xlane.f32.xlu0 %v1644
          %v1646 = vpop.xlane.xlu0 %1645
          %v1647 = vsel %vm609, %v1599, 0.0
          %1648 = vadd.xlane.f32.xlu0 %v1647
          %v1649 = vpop.xlane.xlu0 %1648
          %v1650 = vrcp.pop 32.0
          %v1651 = vmul.f32 %v1604, %v1650
          %v1652 = vmul.f32 %v1607, %v1650
          %v1653 = vmul.f32 %v1610, %v1650
          %v1654 = vmul.f32 %v1613, %v1650
          %v1655 = vmul.f32 %v1616, %v1650
          %v1656 = vmul.f32 %v1619, %v1650
          %v1657 = vmul.f32 %v1622, %v1650
          %v1658 = vmul.f32 %v1625, %v1650
          %v1659 = vmul.f32 %v1628, %v1650
          %v1660 = vmul.f32 %v1631, %v1650
          %v1661 = vmul.f32 %v1634, %v1650
          %v1662 = vmul.f32 %v1637, %v1650
          %v1663 = vmul.f32 %v1640, %v1650
          %v1664 = vmul.f32 %v1643, %v1650
          %v1665 = vmul.f32 %v1646, %v1650
          %v1666 = vmul.f32 %v1649, %v1650
          %v1667 = vsub.f32 %v1584, %v1651
          %v1668 = vsub.f32 %v1585, %v1652
          %v1669 = vsub.f32 %v1586, %v1653
          %v1670 = vsub.f32 %v1587, %v1654
          %v1671 = vsub.f32 %v1588, %v1655
          %v1672 = vsub.f32 %v1589, %v1656
          %v1673 = vsub.f32 %v1590, %v1657
          %v1674 = vsub.f32 %v1591, %v1658
          %v1675 = vsub.f32 %v1592, %v1659
          %v1676 = vsub.f32 %v1593, %v1660
          %v1677 = vsub.f32 %v1594, %v1661
          %v1678 = vsub.f32 %v1595, %v1662
          %v1679 = vsub.f32 %v1596, %v1663
          %v1680 = vsub.f32 %v1597, %v1664
          %v1681 = vsub.f32 %v1598, %v1665
          %v1682 = vsub.f32 %v1599, %v1666
          %v1683 = vmul.f32 %v1667, %v1667
          %v1684 = vmul.f32 %v1668, %v1668
          %v1685 = vmul.f32 %v1669, %v1669
          %v1686 = vmul.f32 %v1670, %v1670
          %v1687 = vmul.f32 %v1671, %v1671
          %v1688 = vmul.f32 %v1672, %v1672
          %v1689 = vmul.f32 %v1673, %v1673
          %v1690 = vmul.f32 %v1674, %v1674
          %v1691 = vmul.f32 %v1675, %v1675
          %v1692 = vmul.f32 %v1676, %v1676
          %v1693 = vmul.f32 %v1677, %v1677
          %v1694 = vmul.f32 %v1678, %v1678
          %v1695 = vmul.f32 %v1679, %v1679
          %v1696 = vmul.f32 %v1680, %v1680
          %v1697 = vmul.f32 %v1681, %v1681
          %v1698 = vmul.f32 %v1682, %v1682
          %v1699 = vsel %vm609, %v1683, 0.0
          %1700 = vadd.xlane.f32.xlu0 %v1699
          %v1701 = vpop.xlane.xlu0 %1700
          %v1702 = vsel %vm609, %v1684, 0.0
          %1703 = vadd.xlane.f32.xlu0 %v1702
          %v1704 = vpop.xlane.xlu0 %1703
          %v1705 = vsel %vm609, %v1685, 0.0
          %1706 = vadd.xlane.f32.xlu0 %v1705
          %v1707 = vpop.xlane.xlu0 %1706
          %v1708 = vsel %vm609, %v1686, 0.0
          %1709 = vadd.xlane.f32.xlu0 %v1708
          %v1710 = vpop.xlane.xlu0 %1709
          %v1711 = vsel %vm609, %v1687, 0.0
          %1712 = vadd.xlane.f32.xlu0 %v1711
          %v1713 = vpop.xlane.xlu0 %1712
          %v1714 = vsel %vm609, %v1688, 0.0
          %1715 = vadd.xlane.f32.xlu0 %v1714
          %v1716 = vpop.xlane.xlu0 %1715
          %v1717 = vsel %vm609, %v1689, 0.0
          %1718 = vadd.xlane.f32.xlu0 %v1717
          %v1719 = vpop.xlane.xlu0 %1718
          %v1720 = vsel %vm609, %v1690, 0.0
          %1721 = vadd.xlane.f32.xlu0 %v1720
          %v1722 = vpop.xlane.xlu0 %1721
          %v1723 = vsel %vm609, %v1691, 0.0
          %1724 = vadd.xlane.f32.xlu0 %v1723
          %v1725 = vpop.xlane.xlu0 %1724
          %v1726 = vsel %vm609, %v1692, 0.0
          %1727 = vadd.xlane.f32.xlu0 %v1726
          %v1728 = vpop.xlane.xlu0 %1727
          %v1729 = vsel %vm609, %v1693, 0.0
          %1730 = vadd.xlane.f32.xlu0 %v1729
          %v1731 = vpop.xlane.xlu0 %1730
          %v1732 = vsel %vm609, %v1694, 0.0
          %1733 = vadd.xlane.f32.xlu0 %v1732
          %v1734 = vpop.xlane.xlu0 %1733
          %v1735 = vsel %vm609, %v1695, 0.0
          %1736 = vadd.xlane.f32.xlu0 %v1735
          %v1737 = vpop.xlane.xlu0 %1736
          %v1738 = vsel %vm609, %v1696, 0.0
          %1739 = vadd.xlane.f32.xlu0 %v1738
          %v1740 = vpop.xlane.xlu0 %1739
          %v1741 = vsel %vm609, %v1697, 0.0
          %1742 = vadd.xlane.f32.xlu0 %v1741
          %v1743 = vpop.xlane.xlu0 %1742
          %v1744 = vsel %vm609, %v1698, 0.0
          %1745 = vadd.xlane.f32.xlu0 %v1744
          %v1746 = vpop.xlane.xlu0 %1745
          %v1747 = vmul.f32 %v1701, %v1650
          %v1748 = vmul.f32 %v1704, %v1650
          %v1749 = vmul.f32 %v1707, %v1650
          %v1750 = vmul.f32 %v1710, %v1650
          %v1751 = vmul.f32 %v1713, %v1650
          %v1752 = vmul.f32 %v1716, %v1650
          %v1753 = vmul.f32 %v1719, %v1650
          %v1754 = vmul.f32 %v1722, %v1650
          %v1755 = vmul.f32 %v1725, %v1650
          %v1756 = vmul.f32 %v1728, %v1650
          %v1757 = vmul.f32 %v1731, %v1650
          %v1758 = vmul.f32 %v1734, %v1650
          %v1759 = vmul.f32 %v1737, %v1650
          %v1760 = vmul.f32 %v1740, %v1650
          %v1761 = vmul.f32 %v1743, %v1650
          %v1762 = vmul.f32 %v1746, %v1650
          %v1763 = vadd.f32 %v1747, 1e-05
          %v1764 = vadd.f32 %v1748, 1e-05
          %v1765 = vadd.f32 %v1749, 1e-05
          %v1766 = vadd.f32 %v1750, 1e-05
          %v1767 = vadd.f32 %v1751, 1e-05
          %v1768 = vadd.f32 %v1752, 1e-05
          %v1769 = vadd.f32 %v1753, 1e-05
          %v1770 = vadd.f32 %v1754, 1e-05
          %v1771 = vadd.f32 %v1755, 1e-05
          %v1772 = vadd.f32 %v1756, 1e-05
          %v1773 = vadd.f32 %v1757, 1e-05
          %v1774 = vadd.f32 %v1758, 1e-05
          %v1775 = vadd.f32 %v1759, 1e-05
          %v1776 = vadd.f32 %v1760, 1e-05
          %v1777 = vadd.f32 %v1761, 1e-05
          %v1778 = vadd.f32 %v1762, 1e-05
          %v1779 = vrsqrt.pop %v1763
          %v1780 = vrsqrt.pop %v1764
          %v1781 = vrsqrt.pop %v1765
          %v1782 = vrsqrt.pop %v1766
          %v1783 = vrsqrt.pop %v1767
          %v1784 = vrsqrt.pop %v1768
          %v1785 = vrsqrt.pop %v1769
          %v1786 = vrsqrt.pop %v1770
          %v1787 = vrsqrt.pop %v1771
          %v1788 = vrsqrt.pop %v1772
          %v1789 = vrsqrt.pop %v1773
          %v1790 = vrsqrt.pop %v1774
          %v1791 = vrsqrt.pop %v1775
          %v1792 = vrsqrt.pop %v1776
          %v1793 = vrsqrt.pop %v1777
          %v1794 = vrsqrt.pop %v1778
          %v1795 = vmul.f32 %v1667, %v1779
          %v1796 = vmul.f32 %v1668, %v1780
          %v1797 = vmul.f32 %v1669, %v1781
          %v1798 = vmul.f32 %v1670, %v1782
          %v1799 = vmul.f32 %v1671, %v1783
          %v1800 = vmul.f32 %v1672, %v1784
          %v1801 = vmul.f32 %v1673, %v1785
          %v1802 = vmul.f32 %v1674, %v1786
          %v1803 = vmul.f32 %v1675, %v1787
          %v1804 = vmul.f32 %v1676, %v1788
          %v1805 = vmul.f32 %v1677, %v1789
          %v1806 = vmul.f32 %v1678, %v1790
          %v1807 = vmul.f32 %v1679, %v1791
          %v1808 = vmul.f32 %v1680, %v1792
          %v1809 = vmul.f32 %v1681, %v1793
          %v1810 = vmul.f32 %v1682, %v1794
          %v1812 = vlaneseq
          %v1813 = vshrl.u32 %v1812, 7
          %v1814 = vsub.s32 0, %v1813
          %v1815 = vrot.slane %v1600, %v1814
          %v1817 = vmul.f32 %v1795, %v1815
          %v1818 = vmul.f32 %v1796, %v1815
          %v1819 = vmul.f32 %v1797, %v1815
          %v1820 = vmul.f32 %v1798, %v1815
          %v1821 = vmul.f32 %v1799, %v1815
          %v1822 = vmul.f32 %v1800, %v1815
          %v1823 = vmul.f32 %v1801, %v1815
          %v1824 = vmul.f32 %v1802, %v1815
          %v1825 = vmul.f32 %v1803, %v1815
          %v1826 = vmul.f32 %v1804, %v1815
          %v1827 = vmul.f32 %v1805, %v1815
          %v1828 = vmul.f32 %v1806, %v1815
          %v1829 = vmul.f32 %v1807, %v1815
          %v1830 = vmul.f32 %v1808, %v1815
          %v1831 = vmul.f32 %v1809, %v1815
          %v1832 = vmul.f32 %v1810, %v1815
          %v1834 = vlaneseq
          %v1835 = vshrl.u32 %v1834, 7
          %v1836 = vsub.s32 0, %v1835
          %v1837 = vrot.slane %v1601, %v1836
          %v1839 = vadd.f32 %v1817, %v1837
          %v1840 = vadd.f32 %v1818, %v1837
          %v1841 = vadd.f32 %v1819, %v1837
          %v1842 = vadd.f32 %v1820, %v1837
          %v1843 = vadd.f32 %v1821, %v1837
          %v1844 = vadd.f32 %v1822, %v1837
          %v1845 = vadd.f32 %v1823, %v1837
          %v1846 = vadd.f32 %v1824, %v1837
          %v1847 = vadd.f32 %v1825, %v1837
          %v1848 = vadd.f32 %v1826, %v1837
          %v1849 = vadd.f32 %v1827, %v1837
          %v1850 = vadd.f32 %v1828, %v1837
          %v1851 = vadd.f32 %v1829, %v1837
          %v1852 = vadd.f32 %v1830, %v1837
          %v1853 = vadd.f32 %v1831, %v1837
          %v1854 = vadd.f32 %v1832, %v1837
          %v1855 = vmul.f32 %v1839, %v1529
          %v1856 = vmul.f32 %v1840, %v1530
          %v1857 = vmul.f32 %v1841, %v1531
          %v1858 = vmul.f32 %v1842, %v1532
          %v1859 = vmul.f32 %v1843, %v1533
          %v1860 = vmul.f32 %v1844, %v1534
          %v1861 = vmul.f32 %v1845, %v1535
          %v1862 = vmul.f32 %v1846, %v1536
          %v1863 = vmul.f32 %v1847, %v1537
          %v1864 = vmul.f32 %v1848, %v1538
          %v1865 = vmul.f32 %v1849, %v1539
          %v1866 = vmul.f32 %v1850, %v1540
          %v1867 = vmul.f32 %v1851, %v1541
          %v1868 = vmul.f32 %v1852, %v1542
          %v1869 = vmul.f32 %v1853, %v1543
          %v1870 = vmul.f32 %v1854, %v1544
          %1871 = vst.msk [vmem:[#allocation3] sm:$0xff] %vm609, 0.0
          %1872 = vst.msk [vmem:[#allocation3 + $0x88] sm:$0xff] %vm609, 0.0
          %1873 = vst.msk [vmem:[#allocation3 + $0x8] sm:$0xff] %vm609, %v1855
          %1874 = vst.msk [vmem:[#allocation3 + $0x10] sm:$0xff] %vm609, %v1856
          %1875 = vst.msk [vmem:[#allocation3 + $0x18] sm:$0xff] %vm609, %v1857
          %1876 = vst.msk [vmem:[#allocation3 + $0x20] sm:$0xff] %vm609, %v1858
          %1877 = vst.msk [vmem:[#allocation3 + $0x28] sm:$0xff] %vm609, %v1859
          %1878 = vst.msk [vmem:[#allocation3 + $0x30] sm:$0xff] %vm609, %v1860
          %1879 = vst.msk [vmem:[#allocation3 + $0x38] sm:$0xff] %vm609, %v1861
          %1880 = vst.msk [vmem:[#allocation3 + $0x40] sm:$0xff] %vm609, %v1862
          %1881 = vst.msk [vmem:[#allocation3 + $0x48] sm:$0xff] %vm609, %v1863
          %1882 = vst.msk [vmem:[#allocation3 + $0x50] sm:$0xff] %vm609, %v1864
          %1883 = vst.msk [vmem:[#allocation3 + $0x58] sm:$0xff] %vm609, %v1865
          %1884 = vst.msk [vmem:[#allocation3 + $0x60] sm:$0xff] %vm609, %v1866
          %1885 = vst.msk [vmem:[#allocation3 + $0x68] sm:$0xff] %vm609, %v1867
          %1886 = vst.msk [vmem:[#allocation3 + $0x70] sm:$0xff] %vm609, %v1868
          %1887 = vst.msk [vmem:[#allocation3 + $0x78] sm:$0xff] %vm609, %v1869
          %1888 = vst.msk [vmem:[#allocation3 + $0x80] sm:$0xff] %vm609, %v1870
          %v1889 = vld [vmem:[#allocation3 + $0x4] sm:$0xff]
          %v1890 = vld [vmem:[#allocation3 + $0xc] sm:$0xff]
          %v1891 = vld [vmem:[#allocation3 + $0x14] sm:$0xff]
          %v1892 = vld [vmem:[#allocation3 + $0x1c] sm:$0xff]
          %v1893 = vld [vmem:[#allocation3 + $0x24] sm:$0xff]
          %v1894 = vld [vmem:[#allocation3 + $0x2c] sm:$0xff]
          %v1895 = vld [vmem:[#allocation3 + $0x34] sm:$0xff]
          %v1896 = vld [vmem:[#allocation3 + $0x3c] sm:$0xff]
          %v1897 = vld [vmem:[#allocation3 + $0x44] sm:$0xff]
          %v1898 = vld [vmem:[#allocation3 + $0x4c] sm:$0xff]
          %v1899 = vld [vmem:[#allocation3 + $0x54] sm:$0xff]
          %v1900 = vld [vmem:[#allocation3 + $0x5c] sm:$0xff]
          %v1901 = vld [vmem:[#allocation3 + $0x64] sm:$0xff]
          %v1902 = vld [vmem:[#allocation3 + $0x6c] sm:$0xff]
          %v1903 = vld [vmem:[#allocation3 + $0x74] sm:$0xff]
          %v1904 = vld [vmem:[#allocation3 + $0x7c] sm:$0xff]
          %v1905 = vpack.c.bf16 %v1890, %v1889
          %v1906 = vpack.c.bf16 %v1892, %v1891
          %v1907 = vpack.c.bf16 %v1894, %v1893
          %v1908 = vpack.c.bf16 %v1896, %v1895
          %v1909 = vpack.c.bf16 %v1898, %v1897
          %v1910 = vpack.c.bf16 %v1900, %v1899
          %v1911 = vpack.c.bf16 %v1902, %v1901
          %v1912 = vpack.c.bf16 %v1904, %v1903
          %v1913 = vld [vmem:[%s8] sm:$0xf]
          %v1914 = vld [vmem:[%s8 + $0x4] sm:$0xf]
          %v1915 = vld [vmem:[%s8 + $0x8] sm:$0xf]
          %v1916 = vld [vmem:[%s8 + $0xc] sm:$0xf]
          %v1917 = vld [vmem:[#allocation3 + $0x5] sm:$0xff]
          %v1918 = vld [vmem:[#allocation3 + $0xd] sm:$0xff]
          %v1919 = vld [vmem:[#allocation3 + $0x15] sm:$0xff]
          %v1920 = vld [vmem:[#allocation3 + $0x1d] sm:$0xff]
          %v1921 = vld [vmem:[#allocation3 + $0x25] sm:$0xff]
          %v1922 = vld [vmem:[#allocation3 + $0x2d] sm:$0xff]
          %v1923 = vld [vmem:[#allocation3 + $0x35] sm:$0xff]
          %v1924 = vld [vmem:[#allocation3 + $0x3d] sm:$0xff]
          %v1925 = vld [vmem:[#allocation3 + $0x45] sm:$0xff]
          %v1926 = vld [vmem:[#allocation3 + $0x4d] sm:$0xff]
          %v1927 = vld [vmem:[#allocation3 + $0x55] sm:$0xff]
          %v1928 = vld [vmem:[#allocation3 + $0x5d] sm:$0xff]
          %v1929 = vld [vmem:[#allocation3 + $0x65] sm:$0xff]
          %v1930 = vld [vmem:[#allocation3 + $0x6d] sm:$0xff]
          %v1931 = vld [vmem:[#allocation3 + $0x75] sm:$0xff]
          %v1932 = vld [vmem:[#allocation3 + $0x7d] sm:$0xff]
          %v1933 = vpack.c.bf16 %v1918, %v1917
          %v1934 = vpack.c.bf16 %v1920, %v1919
          %v1935 = vpack.c.bf16 %v1922, %v1921
          %v1936 = vpack.c.bf16 %v1924, %v1923
          %v1937 = vpack.c.bf16 %v1926, %v1925
          %v1938 = vpack.c.bf16 %v1928, %v1927
          %v1939 = vpack.c.bf16 %v1930, %v1929
          %v1940 = vpack.c.bf16 %v1932, %v1931
          %s1941 = scalar_lea.vmem %s8, 16
          %v1942 = vld [vmem:[%s1941] sm:$0xf]
          %v1943 = vld [vmem:[%s1941 + $0x4] sm:$0xf]
          %v1944 = vld [vmem:[%s1941 + $0x8] sm:$0xf]
          %v1945 = vld [vmem:[%s1941 + $0xc] sm:$0xf]
          %v1950 = vunpack.c.l.b16 %v1942
          %v1951 = vunpack.c.l.b16 %v1943
          %v1952 = vunpack.c.l.b16 %v1944
          %v1953 = vunpack.c.l.b16 %v1945
          %v1954 = vpack.c.b16 %v1951, %v1950
          %v1955 = vpack.c.b16 %v1953, %v1952
          %v1959 = vsel %vm609, %v1933, 0
          %v1962 = vsel %vm609, %v1934, 0
          %v1965 = vsel %vm609, %v1935, 0
          %v1968 = vsel %vm609, %v1936, 0
          %v1971 = vsel %vm609, %v1937, 0
          %v1974 = vsel %vm609, %v1938, 0
          %v1977 = vsel %vm609, %v1939, 0
          %v1980 = vsel %vm609, %v1940, 0
          %1982 = vmatprep.subr.bf16.mxu0 0
          %1983 = vmatpush1.bf16.msra.mxu0 %v1954
          %1984 = vmatprep.subr.bf16.mxu0 0
          %1985 = vmatpush1.bf16.msra.mxu0 %v1955
          %1986 = vmatprep.subr.bf16.mxu0 0
          %1987 = vmatpush1.bf16.msra.mxu0 0
          %1988 = vmatprep.subr.bf16.mxu0 0
          %1989 = vmatpush1.bf16.msra.mxu0 0
          %1990 = vmatprep.subr.bf16.mxu0 0
          %1991 = vmatpush1.bf16.msra.mxu0 0
          %1992 = vmatprep.subr.bf16.mxu0 0
          %1993 = vmatpush1.bf16.msra.mxu0 0
          %1994 = vmatprep.subr.bf16.mxu0 0
          %1995 = vmatpush1.bf16.msra.mxu0 0
          %1996 = vmatprep.subr.bf16.mxu0 0
          %1997 = vmatpush1.bf16.msra.mxu0 0
          %1998 = vmatprep.subr.bf16.mxu0 0
          %1999 = vmatpush1.bf16.msra.mxu0 0
          %2000 = vmatprep.subr.bf16.mxu0 0
          %2001 = vmatpush1.bf16.msra.mxu0 0
          %2002 = vmatprep.subr.bf16.mxu0 0
          %2003 = vmatpush1.bf16.msra.mxu0 0
          %2004 = vmatprep.subr.bf16.mxu0 0
          %2005 = vmatpush1.bf16.msra.mxu0 0
          %2006 = vmatprep.subr.bf16.mxu0 0
          %2007 = vmatpush1.bf16.msra.mxu0 0
          %2008 = vmatprep.subr.bf16.mxu0 0
          %2009 = vmatpush1.bf16.msra.mxu0 0
          %2010 = vmatprep.subr.bf16.mxu0 0
          %2011 = vmatpush1.bf16.msra.mxu0 0
          %2012 = vmatprep.subr.bf16.mxu0 0
          %2013 = vmatpush1.bf16.msra.mxu0 0
          %2014 = vmatprep.mubr.bf16.mxu0 0
          %2015 = vmatmul.mubr.bf16.gmra.mrb[0].mxu0 %v1959
          %v2016 = vpop.f32.mrb[0].mxu0
          %v2017 = vadd.f32 0.0, %v2016
          %v2018 = vpop.f32.mrb[0].mxu0
          %v2019 = vpop.f32.mrb[0].mxu0
          %v2020 = vadd.f32 0.0, %v2019
          %v2021 = vpop.f32.mrb[0].mxu0
          %2022 = vmatprep.mubr.bf16.mxu0 0
          %2023 = vmatmul.mubr.bf16.gmra.mrb[0].mxu0 %v1962
          %v2024 = vpop.f32.mrb[0].mxu0
          %v2025 = vadd.f32 0.0, %v2024
          %v2026 = vpop.f32.mrb[0].mxu0
          %v2027 = vpop.f32.mrb[0].mxu0
          %v2028 = vadd.f32 0.0, %v2027
          %v2029 = vpop.f32.mrb[0].mxu0
          %2030 = vmatprep.mubr.bf16.mxu0 0
          %2031 = vmatmul.mubr.bf16.gmra.mrb[0].mxu0 %v1965
          %v2032 = vpop.f32.mrb[0].mxu0
          %v2033 = vadd.f32 0.0, %v2032
          %v2034 = vpop.f32.mrb[0].mxu0
          %v2035 = vpop.f32.mrb[0].mxu0
          %v2036 = vadd.f32 0.0, %v2035
          %v2037 = vpop.f32.mrb[0].mxu0
          %2038 = vmatprep.mubr.bf16.mxu0 0
          %2039 = vmatmul.mubr.bf16.gmra.mrb[0].mxu0 %v1968
          %v2040 = vpop.f32.mrb[0].mxu0
          %v2041 = vadd.f32 0.0, %v2040
          %v2042 = vpop.f32.mrb[0].mxu0
          %v2043 = vpop.f32.mrb[0].mxu0
          %v2044 = vadd.f32 0.0, %v2043
          %v2045 = vpop.f32.mrb[0].mxu0
          %2046 = vmatprep.mubr.bf16.mxu0 0
          %2047 = vmatmul.mubr.bf16.gmra.mrb[0].mxu0 %v1971
          %v2048 = vpop.f32.mrb[0].mxu0
          %v2049 = vadd.f32 0.0, %v2048
          %v2050 = vpop.f32.mrb[0].mxu0
          %v2051 = vpop.f32.mrb[0].mxu0
          %v2052 = vadd.f32 0.0, %v2051
          %v2053 = vpop.f32.mrb[0].mxu0
          %2054 = vmatprep.mubr.bf16.mxu0 0
          %2055 = vmatmul.mubr.bf16.gmra.mrb[0].mxu0 %v1974
          %v2056 = vpop.f32.mrb[0].mxu0
          %v2057 = vadd.f32 0.0, %v2056
          %v2058 = vpop.f32.mrb[0].mxu0
          %v2059 = vpop.f32.mrb[0].mxu0
          %v2060 = vadd.f32 0.0, %v2059
          %v2061 = vpop.f32.mrb[0].mxu0
          %2062 = vmatprep.mubr.bf16.mxu0 0
          %2063 = vmatmul.mubr.bf16.gmra.mrb[0].mxu0 %v1977
          %v2064 = vpop.f32.mrb[0].mxu0
          %v2065 = vadd.f32 0.0, %v2064
          %v2066 = vpop.f32.mrb[0].mxu0
          %v2067 = vpop.f32.mrb[0].mxu0
          %v2068 = vadd.f32 0.0, %v2067
          %v2069 = vpop.f32.mrb[0].mxu0
          %2070 = vmatprep.mubr.bf16.mxu0 0
          %2071 = vmatmul.mubr.bf16.gmra.mrb[0].mxu0 %v1980
          %v2072 = vpop.f32.mrb[0].mxu0
          %v2073 = vadd.f32 0.0, %v2072
          %v2074 = vpop.f32.mrb[0].mxu0
          %v2075 = vpop.f32.mrb[0].mxu0
          %v2076 = vadd.f32 0.0, %v2075
          %v2077 = vpop.f32.mrb[0].mxu0
          %2078 = vdwg.mxu0
          %v2083 = vunpack.c.l.b16 %v1913
          %v2084 = vunpack.c.l.b16 %v1914
          %v2085 = vunpack.c.l.b16 %v1915
          %v2086 = vunpack.c.l.b16 %v1916
          %v2087 = vpack.c.b16 %v2084, %v2083
          %v2088 = vpack.c.b16 %v2086, %v2085
          %v2092 = vsel %vm609, %v1905, 0
          %v2095 = vsel %vm609, %v1906, 0
          %v2098 = vsel %vm609, %v1907, 0
          %v2101 = vsel %vm609, %v1908, 0
          %v2104 = vsel %vm609, %v1909, 0
          %v2107 = vsel %vm609, %v1910, 0
          %v2110 = vsel %vm609, %v1911, 0
          %v2113 = vsel %vm609, %v1912, 0
          %2115 = vmatprep.subr.bf16.mxu0 0
          %2116 = vmatpush1.bf16.msra.mxu0 %v2087
          %2117 = vmatprep.subr.bf16.mxu0 0
          %2118 = vmatpush1.bf16.msra.mxu0 %v2088
          %2119 = vmatprep.subr.bf16.mxu0 0
          %2120 = vmatpush1.bf16.msra.mxu0 0
          %2121 = vmatprep.subr.bf16.mxu0 0
          %2122 = vmatpush1.bf16.msra.mxu0 0
          %2123 = vmatprep.subr.bf16.mxu0 0
          %2124 = vmatpush1.bf16.msra.mxu0 0
          %2125 = vmatprep.subr.bf16.mxu0 0
          %2126 = vmatpush1.bf16.msra.mxu0 0
          %2127 = vmatprep.subr.bf16.mxu0 0
          %2128 = vmatpush1.bf16.msra.mxu0 0
          %2129 = vmatprep.subr.bf16.mxu0 0
          %2130 = vmatpush1.bf16.msra.mxu0 0
          %2131 = vmatprep.subr.bf16.mxu0 0
          %2132 = vmatpush1.bf16.msra.mxu0 0
          %2133 = vmatprep.subr.bf16.mxu0 0
          %2134 = vmatpush1.bf16.msra.mxu0 0
          %2135 = vmatprep.subr.bf16.mxu0 0
          %2136 = vmatpush1.bf16.msra.mxu0 0
          %2137 = vmatprep.subr.bf16.mxu0 0
          %2138 = vmatpush1.bf16.msra.mxu0 0
          %2139 = vmatprep.subr.bf16.mxu0 0
          %2140 = vmatpush1.bf16.msra.mxu0 0
          %2141 = vmatprep.subr.bf16.mxu0 0
          %2142 = vmatpush1.bf16.msra.mxu0 0
          %2143 = vmatprep.subr.bf16.mxu0 0
          %2144 = vmatpush1.bf16.msra.mxu0 0
          %2145 = vmatprep.subr.bf16.mxu0 0
          %2146 = vmatpush1.bf16.msra.mxu0 0
          %2147 = vmatprep.mubr.bf16.mxu0 0
          %2148 = vmatmul.mubr.bf16.gmra.mrb[0].mxu0 %v2092
          %v2149 = vpop.f32.mrb[0].mxu0
          %v2150 = vadd.f32 %v2017, %v2149
          %v2151 = vpop.f32.mrb[0].mxu0
          %v2152 = vpop.f32.mrb[0].mxu0
          %v2153 = vadd.f32 %v2020, %v2152
          %v2154 = vpop.f32.mrb[0].mxu0
          %2155 = vmatprep.mubr.bf16.mxu0 0
          %2156 = vmatmul.mubr.bf16.gmra.mrb[0].mxu0 %v2095
          %v2157 = vpop.f32.mrb[0].mxu0
          %v2158 = vadd.f32 %v2025, %v2157
          %v2159 = vpop.f32.mrb[0].mxu0
          %v2160 = vpop.f32.mrb[0].mxu0
          %v2161 = vadd.f32 %v2028, %v2160
          %v2162 = vpop.f32.mrb[0].mxu0
          %2163 = vmatprep.mubr.bf16.mxu0 0
          %2164 = vmatmul.mubr.bf16.gmra.mrb[0].mxu0 %v2098
          %v2165 = vpop.f32.mrb[0].mxu0
          %v2166 = vadd.f32 %v2033, %v2165
          %v2167 = vpop.f32.mrb[0].mxu0
          %v2168 = vpop.f32.mrb[0].mxu0
          %v2169 = vadd.f32 %v2036, %v2168
          %v2170 = vpop.f32.mrb[0].mxu0
          %2171 = vmatprep.mubr.bf16.mxu0 0
          %2172 = vmatmul.mubr.bf16.gmra.mrb[0].mxu0 %v2101
          %v2173 = vpop.f32.mrb[0].mxu0
          %v2174 = vadd.f32 %v2041, %v2173
          %v2175 = vpop.f32.mrb[0].mxu0
          %v2176 = vpop.f32.mrb[0].mxu0
          %v2177 = vadd.f32 %v2044, %v2176
          %v2178 = vpop.f32.mrb[0].mxu0
          %2179 = vmatprep.mubr.bf16.mxu0 0
          %2180 = vmatmul.mubr.bf16.gmra.mrb[0].mxu0 %v2104
          %v2181 = vpop.f32.mrb[0].mxu0
          %v2182 = vadd.f32 %v2049, %v2181
          %v2183 = vpop.f32.mrb[0].mxu0
          %v2184 = vpop.f32.mrb[0].mxu0
          %v2185 = vadd.f32 %v2052, %v2184
          %v2186 = vpop.f32.mrb[0].mxu0
          %2187 = vmatprep.mubr.bf16.mxu0 0
          %2188 = vmatmul.mubr.bf16.gmra.mrb[0].mxu0 %v2107
          %v2189 = vpop.f32.mrb[0].mxu0
          %v2190 = vadd.f32 %v2057, %v2189
          %v2191 = vpop.f32.mrb[0].mxu0
          %v2192 = vpop.f32.mrb[0].mxu0
          %v2193 = vadd.f32 %v2060, %v2192
          %v2194 = vpop.f32.mrb[0].mxu0
          %2195 = vmatprep.mubr.bf16.mxu0 0
          %2196 = vmatmul.mubr.bf16.gmra.mrb[0].mxu0 %v2110
          %v2197 = vpop.f32.mrb[0].mxu0
          %v2198 = vadd.f32 %v2065, %v2197
          %v2199 = vpop.f32.mrb[0].mxu0
          %v2200 = vpop.f32.mrb[0].mxu0
          %v2201 = vadd.f32 %v2068, %v2200
          %v2202 = vpop.f32.mrb[0].mxu0
          %2203 = vmatprep.mubr.bf16.mxu0 0
          %2204 = vmatmul.mubr.bf16.gmra.mrb[0].mxu0 %v2113
          %v2205 = vpop.f32.mrb[0].mxu0
          %v2206 = vadd.f32 %v2073, %v2205
          %v2207 = vpop.f32.mrb[0].mxu0
          %v2208 = vpop.f32.mrb[0].mxu0
          %v2209 = vadd.f32 %v2076, %v2208
          %v2210 = vpop.f32.mrb[0].mxu0
          %2211 = vdwg.mxu0
          %v2212 = vld [vmem:[#allocation3 + $0x6] sm:$0xff]
          %v2213 = vld [vmem:[#allocation3 + $0xe] sm:$0xff]
          %v2214 = vld [vmem:[#allocation3 + $0x16] sm:$0xff]
          %v2215 = vld [vmem:[#allocation3 + $0x1e] sm:$0xff]
          %v2216 = vld [vmem:[#allocation3 + $0x26] sm:$0xff]
          %v2217 = vld [vmem:[#allocation3 + $0x2e] sm:$0xff]
          %v2218 = vld [vmem:[#allocation3 + $0x36] sm:$0xff]
          %v2219 = vld [vmem:[#allocation3 + $0x3e] sm:$0xff]
          %v2220 = vld [vmem:[#allocation3 + $0x46] sm:$0xff]
          %v2221 = vld [vmem:[#allocation3 + $0x4e] sm:$0xff]
          %v2222 = vld [vmem:[#allocation3 + $0x56] sm:$0xff]
          %v2223 = vld [vmem:[#allocation3 + $0x5e] sm:$0xff]
          %v2224 = vld [vmem:[#allocation3 + $0x66] sm:$0xff]
          %v2225 = vld [vmem:[#allocation3 + $0x6e] sm:$0xff]
          %v2226 = vld [vmem:[#allocation3 + $0x76] sm:$0xff]
          %v2227 = vld [vmem:[#allocation3 + $0x7e] sm:$0xff]
          %v2228 = vpack.c.bf16 %v2213, %v2212
          %v2229 = vpack.c.bf16 %v2215, %v2214
          %v2230 = vpack.c.bf16 %v2217, %v2216
          %v2231 = vpack.c.bf16 %v2219, %v2218
          %v2232 = vpack.c.bf16 %v2221, %v2220
          %v2233 = vpack.c.bf16 %v2223, %v2222
          %v2234 = vpack.c.bf16 %v2225, %v2224
          %v2235 = vpack.c.bf16 %v2227, %v2226
          %s2236 = scalar_lea.vmem %s8, 32
          %v2237 = vld [vmem:[%s2236] sm:$0xf]
          %v2238 = vld [vmem:[%s2236 + $0x4] sm:$0xf]
          %v2239 = vld [vmem:[%s2236 + $0x8] sm:$0xf]
          %v2240 = vld [vmem:[%s2236 + $0xc] sm:$0xf]
          %v2245 = vunpack.c.l.b16 %v2237
          %v2246 = vunpack.c.l.b16 %v2238
          %v2247 = vunpack.c.l.b16 %v2239
          %v2248 = vunpack.c.l.b16 %v2240
          %v2249 = vpack.c.b16 %v2246, %v2245
          %v2250 = vpack.c.b16 %v2248, %v2247
          %v2254 = vsel %vm609, %v2228, 0
          %v2257 = vsel %vm609, %v2229, 0
          %v2260 = vsel %vm609, %v2230, 0
          %v2263 = vsel %vm609, %v2231, 0
          %v2266 = vsel %vm609, %v2232, 0
          %v2269 = vsel %vm609, %v2233, 0
          %v2272 = vsel %vm609, %v2234, 0
          %v2275 = vsel %vm609, %v2235, 0
          %2277 = vmatprep.subr.bf16.mxu0 0
          %2278 = vmatpush1.bf16.msra.mxu0 %v2249
          %2279 = vmatprep.subr.bf16.mxu0 0
          %2280 = vmatpush1.bf16.msra.mxu0 %v2250
          %2281 = vmatprep.subr.bf16.mxu0 0
          %2282 = vmatpush1.bf16.msra.mxu0 0
          %2283 = vmatprep.subr.bf16.mxu0 0
          %2284 = vmatpush1.bf16.msra.mxu0 0
          %2285 = vmatprep.subr.bf16.mxu0 0
          %2286 = vmatpush1.bf16.msra.mxu0 0
          %2287 = vmatprep.subr.bf16.mxu0 0
          %2288 = vmatpush1.bf16.msra.mxu0 0
          %2289 = vmatprep.subr.bf16.mxu0 0
          %2290 = vmatpush1.bf16.msra.mxu0 0
          %2291 = vmatprep.subr.bf16.mxu0 0
          %2292 = vmatpush1.bf16.msra.mxu0 0
          %2293 = vmatprep.subr.bf16.mxu0 0
          %2294 = vmatpush1.bf16.msra.mxu0 0
          %2295 = vmatprep.subr.bf16.mxu0 0
          %2296 = vmatpush1.bf16.msra.mxu0 0
          %2297 = vmatprep.subr.bf16.mxu0 0
          %2298 = vmatpush1.bf16.msra.mxu0 0
          %2299 = vmatprep.subr.bf16.mxu0 0
          %2300 = vmatpush1.bf16.msra.mxu0 0
          %2301 = vmatprep.subr.bf16.mxu0 0
          %2302 = vmatpush1.bf16.msra.mxu0 0
          %2303 = vmatprep.subr.bf16.mxu0 0
          %2304 = vmatpush1.bf16.msra.mxu0 0
          %2305 = vmatprep.subr.bf16.mxu0 0
          %2306 = vmatpush1.bf16.msra.mxu0 0
          %2307 = vmatprep.subr.bf16.mxu0 0
          %2308 = vmatpush1.bf16.msra.mxu0 0
          %2309 = vmatprep.mubr.bf16.mxu0 0
          %2310 = vmatmul.mubr.bf16.gmra.mrb[0].mxu0 %v2254
          %v2311 = vpop.f32.mrb[0].mxu0
          %v2312 = vadd.f32 0.0, %v2311
          %v2313 = vpop.f32.mrb[0].mxu0
          %v2314 = vpop.f32.mrb[0].mxu0
          %v2315 = vadd.f32 0.0, %v2314
          %v2316 = vpop.f32.mrb[0].mxu0
          %2317 = vmatprep.mubr.bf16.mxu0 0
          %2318 = vmatmul.mubr.bf16.gmra.mrb[0].mxu0 %v2257
          %v2319 = vpop.f32.mrb[0].mxu0
          %v2320 = vadd.f32 0.0, %v2319
          %v2321 = vpop.f32.mrb[0].mxu0
          %v2322 = vpop.f32.mrb[0].mxu0
          %v2323 = vadd.f32 0.0, %v2322
          %v2324 = vpop.f32.mrb[0].mxu0
          %2325 = vmatprep.mubr.bf16.mxu0 0
          %2326 = vmatmul.mubr.bf16.gmra.mrb[0].mxu0 %v2260
          %v2327 = vpop.f32.mrb[0].mxu0
          %v2328 = vadd.f32 0.0, %v2327
          %v2329 = vpop.f32.mrb[0].mxu0
          %v2330 = vpop.f32.mrb[0].mxu0
          %v2331 = vadd.f32 0.0, %v2330
          %v2332 = vpop.f32.mrb[0].mxu0
          %2333 = vmatprep.mubr.bf16.mxu0 0
          %2334 = vmatmul.mubr.bf16.gmra.mrb[0].mxu0 %v2263
          %v2335 = vpop.f32.mrb[0].mxu0
          %v2336 = vadd.f32 0.0, %v2335
          %v2337 = vpop.f32.mrb[0].mxu0
          %v2338 = vpop.f32.mrb[0].mxu0
          %v2339 = vadd.f32 0.0, %v2338
          %v2340 = vpop.f32.mrb[0].mxu0
          %2341 = vmatprep.mubr.bf16.mxu0 0
          %2342 = vmatmul.mubr.bf16.gmra.mrb[0].mxu0 %v2266
          %v2343 = vpop.f32.mrb[0].mxu0
          %v2344 = vadd.f32 0.0, %v2343
          %v2345 = vpop.f32.mrb[0].mxu0
          %v2346 = vpop.f32.mrb[0].mxu0
          %v2347 = vadd.f32 0.0, %v2346
          %v2348 = vpop.f32.mrb[0].mxu0
          %2349 = vmatprep.mubr.bf16.mxu0 0
          %2350 = vmatmul.mubr.bf16.gmra.mrb[0].mxu0 %v2269
          %v2351 = vpop.f32.mrb[0].mxu0
          %v2352 = vadd.f32 0.0, %v2351
          %v2353 = vpop.f32.mrb[0].mxu0
          %v2354 = vpop.f32.mrb[0].mxu0
          %v2355 = vadd.f32 0.0, %v2354
          %v2356 = vpop.f32.mrb[0].mxu0
          %2357 = vmatprep.mubr.bf16.mxu0 0
          %2358 = vmatmul.mubr.bf16.gmra.mrb[0].mxu0 %v2272
          %v2359 = vpop.f32.mrb[0].mxu0
          %v2360 = vadd.f32 0.0, %v2359
          %v2361 = vpop.f32.mrb[0].mxu0
          %v2362 = vpop.f32.mrb[0].mxu0
          %v2363 = vadd.f32 0.0, %v2362
          %v2364 = vpop.f32.mrb[0].mxu0
          %2365 = vmatprep.mubr.bf16.mxu0 0
          %2366 = vmatmul.mubr.bf16.gmra.mrb[0].mxu0 %v2275
          %v2367 = vpop.f32.mrb[0].mxu0
          %v2368 = vadd.f32 0.0, %v2367
          %v2369 = vpop.f32.mrb[0].mxu0
          %v2370 = vpop.f32.mrb[0].mxu0
          %v2371 = vadd.f32 0.0, %v2370
          %v2372 = vpop.f32.mrb[0].mxu0
          %2373 = vdwg.mxu0
          %v2374 = vadd.f32 %v2150, %v2312
          %v2375 = vadd.f32 %v2153, %v2315
          %v2376 = vadd.f32 %v2158, %v2320
          %v2377 = vadd.f32 %v2161, %v2323
          %v2378 = vadd.f32 %v2166, %v2328
          %v2379 = vadd.f32 %v2169, %v2331
          %v2380 = vadd.f32 %v2174, %v2336
          %v2381 = vadd.f32 %v2177, %v2339
          %v2382 = vadd.f32 %v2182, %v2344
          %v2383 = vadd.f32 %v2185, %v2347
          %v2384 = vadd.f32 %v2190, %v2352
          %v2385 = vadd.f32 %v2193, %v2355
          %v2386 = vadd.f32 %v2198, %v2360
          %v2387 = vadd.f32 %v2201, %v2363
          %v2388 = vadd.f32 %v2206, %v2368
          %v2389 = vadd.f32 %v2209, %v2371
          %v2390 = vld [vmem:[#allocation3 + $0x7] sm:$0xff]
          %v2391 = vld [vmem:[#allocation3 + $0xf] sm:$0xff]
          %v2392 = vld [vmem:[#allocation3 + $0x17] sm:$0xff]
          %v2393 = vld [vmem:[#allocation3 + $0x1f] sm:$0xff]
          %v2394 = vld [vmem:[#allocation3 + $0x27] sm:$0xff]
          %v2395 = vld [vmem:[#allocation3 + $0x2f] sm:$0xff]
          %v2396 = vld [vmem:[#allocation3 + $0x37] sm:$0xff]
          %v2397 = vld [vmem:[#allocation3 + $0x3f] sm:$0xff]
          %v2398 = vld [vmem:[#allocation3 + $0x47] sm:$0xff]
          %v2399 = vld [vmem:[#allocation3 + $0x4f] sm:$0xff]
          %v2400 = vld [vmem:[#allocation3 + $0x57] sm:$0xff]
          %v2401 = vld [vmem:[#allocation3 + $0x5f] sm:$0xff]
          %v2402 = vld [vmem:[#allocation3 + $0x67] sm:$0xff]
          %v2403 = vld [vmem:[#allocation3 + $0x6f] sm:$0xff]
          %v2404 = vld [vmem:[#allocation3 + $0x77] sm:$0xff]
          %v2405 = vld [vmem:[#allocation3 + $0x7f] sm:$0xff]
          %v2406 = vpack.c.bf16 %v2391, %v2390
          %v2407 = vpack.c.bf16 %v2393, %v2392
          %v2408 = vpack.c.bf16 %v2395, %v2394
          %v2409 = vpack.c.bf16 %v2397, %v2396
          %v2410 = vpack.c.bf16 %v2399, %v2398
          %v2411 = vpack.c.bf16 %v2401, %v2400
          %v2412 = vpack.c.bf16 %v2403, %v2402
          %v2413 = vpack.c.bf16 %v2405, %v2404
          %s2414 = scalar_lea.vmem %s8, 48
          %v2415 = vld [vmem:[%s2414] sm:$0xf]
          %v2416 = vld [vmem:[%s2414 + $0x4] sm:$0xf]
          %v2417 = vld [vmem:[%s2414 + $0x8] sm:$0xf]
          %v2418 = vld [vmem:[%s2414 + $0xc] sm:$0xf]
          %v2423 = vunpack.c.l.b16 %v2415
          %v2424 = vunpack.c.l.b16 %v2416
          %v2425 = vunpack.c.l.b16 %v2417
          %v2426 = vunpack.c.l.b16 %v2418
          %v2427 = vpack.c.b16 %v2424, %v2423
          %v2428 = vpack.c.b16 %v2426, %v2425
          %v2432 = vsel %vm609, %v2406, 0
          %v2435 = vsel %vm609, %v2407, 0
          %v2438 = vsel %vm609, %v2408, 0
          %v2441 = vsel %vm609, %v2409, 0
          %v2444 = vsel %vm609, %v2410, 0
          %v2447 = vsel %vm609, %v2411, 0
          %v2450 = vsel %vm609, %v2412, 0
          %v2453 = vsel %vm609, %v2413, 0
          %2455 = vmatprep.subr.bf16.mxu0 0
          %2456 = vmatpush1.bf16.msra.mxu0 %v2427
          %2457 = vmatprep.subr.bf16.mxu0 0
          %2458 = vmatpush1.bf16.msra.mxu0 %v2428
          %2459 = vmatprep.subr.bf16.mxu0 0
          %2460 = vmatpush1.bf16.msra.mxu0 0
          %2461 = vmatprep.subr.bf16.mxu0 0
          %2462 = vmatpush1.bf16.msra.mxu0 0
          %2463 = vmatprep.subr.bf16.mxu0 0
          %2464 = vmatpush1.bf16.msra.mxu0 0
          %2465 = vmatprep.subr.bf16.mxu0 0
          %2466 = vmatpush1.bf16.msra.mxu0 0
          %2467 = vmatprep.subr.bf16.mxu0 0
          %2468 = vmatpush1.bf16.msra.mxu0 0
          %2469 = vmatprep.subr.bf16.mxu0 0
          %2470 = vmatpush1.bf16.msra.mxu0 0
          %2471 = vmatprep.subr.bf16.mxu0 0
          %2472 = vmatpush1.bf16.msra.mxu0 0
          %2473 = vmatprep.subr.bf16.mxu0 0
          %2474 = vmatpush1.bf16.msra.mxu0 0
          %2475 = vmatprep.subr.bf16.mxu0 0
          %2476 = vmatpush1.bf16.msra.mxu0 0
          %2477 = vmatprep.subr.bf16.mxu0 0
          %2478 = vmatpush1.bf16.msra.mxu0 0
          %2479 = vmatprep.subr.bf16.mxu0 0
          %2480 = vmatpush1.bf16.msra.mxu0 0
          %2481 = vmatprep.subr.bf16.mxu0 0
          %2482 = vmatpush1.bf16.msra.mxu0 0
          %2483 = vmatprep.subr.bf16.mxu0 0
          %2484 = vmatpush1.bf16.msra.mxu0 0
          %2485 = vmatprep.subr.bf16.mxu0 0
          %2486 = vmatpush1.bf16.msra.mxu0 0
          %2487 = vmatprep.mubr.bf16.mxu0 0
          %2488 = vmatmul.mubr.bf16.gmra.mrb[0].mxu0 %v2432
          %v2489 = vpop.f32.mrb[0].mxu0
          %v2490 = vadd.f32 0.0, %v2489
          %v2491 = vpop.f32.mrb[0].mxu0
          %v2492 = vpop.f32.mrb[0].mxu0
          %v2493 = vadd.f32 0.0, %v2492
          %v2494 = vpop.f32.mrb[0].mxu0
          %2495 = vmatprep.mubr.bf16.mxu0 0
          %2496 = vmatmul.mubr.bf16.gmra.mrb[0].mxu0 %v2435
          %v2497 = vpop.f32.mrb[0].mxu0
          %v2498 = vadd.f32 0.0, %v2497
          %v2499 = vpop.f32.mrb[0].mxu0
          %v2500 = vpop.f32.mrb[0].mxu0
          %v2501 = vadd.f32 0.0, %v2500
          %v2502 = vpop.f32.mrb[0].mxu0
          %2503 = vmatprep.mubr.bf16.mxu0 0
          %2504 = vmatmul.mubr.bf16.gmra.mrb[0].mxu0 %v2438
          %v2505 = vpop.f32.mrb[0].mxu0
          %v2506 = vadd.f32 0.0, %v2505
          %v2507 = vpop.f32.mrb[0].mxu0
          %v2508 = vpop.f32.mrb[0].mxu0
          %v2509 = vadd.f32 0.0, %v2508
          %v2510 = vpop.f32.mrb[0].mxu0
          %2511 = vmatprep.mubr.bf16.mxu0 0
          %2512 = vmatmul.mubr.bf16.gmra.mrb[0].mxu0 %v2441
          %v2513 = vpop.f32.mrb[0].mxu0
          %v2514 = vadd.f32 0.0, %v2513
          %v2515 = vpop.f32.mrb[0].mxu0
          %v2516 = vpop.f32.mrb[0].mxu0
          %v2517 = vadd.f32 0.0, %v2516
          %v2518 = vpop.f32.mrb[0].mxu0
          %2519 = vmatprep.mubr.bf16.mxu0 0
          %2520 = vmatmul.mubr.bf16.gmra.mrb[0].mxu0 %v2444
          %v2521 = vpop.f32.mrb[0].mxu0
          %v2522 = vadd.f32 0.0, %v2521
          %v2523 = vpop.f32.mrb[0].mxu0
          %v2524 = vpop.f32.mrb[0].mxu0
          %v2525 = vadd.f32 0.0, %v2524
          %v2526 = vpop.f32.mrb[0].mxu0
          %2527 = vmatprep.mubr.bf16.mxu0 0
          %2528 = vmatmul.mubr.bf16.gmra.mrb[0].mxu0 %v2447
          %v2529 = vpop.f32.mrb[0].mxu0
          %v2530 = vadd.f32 0.0, %v2529
          %v2531 = vpop.f32.mrb[0].mxu0
          %v2532 = vpop.f32.mrb[0].mxu0
          %v2533 = vadd.f32 0.0, %v2532
          %v2534 = vpop.f32.mrb[0].mxu0
          %2535 = vmatprep.mubr.bf16.mxu0 0
          %2536 = vmatmul.mubr.bf16.gmra.mrb[0].mxu0 %v2450
          %v2537 = vpop.f32.mrb[0].mxu0
          %v2538 = vadd.f32 0.0, %v2537
          %v2539 = vpop.f32.mrb[0].mxu0
          %v2540 = vpop.f32.mrb[0].mxu0
          %v2541 = vadd.f32 0.0, %v2540
          %v2542 = vpop.f32.mrb[0].mxu0
          %2543 = vmatprep.mubr.bf16.mxu0 0
          %2544 = vmatmul.mubr.bf16.gmra.mrb[0].mxu0 %v2453
          %v2545 = vpop.f32.mrb[0].mxu0
          %v2546 = vadd.f32 0.0, %v2545
          %v2547 = vpop.f32.mrb[0].mxu0
          %v2548 = vpop.f32.mrb[0].mxu0
          %v2549 = vadd.f32 0.0, %v2548
          %v2550 = vpop.f32.mrb[0].mxu0
          %2551 = vdwg.mxu0
          %v2552 = vadd.f32 %v2374, %v2490
          %v2553 = vadd.f32 %v2375, %v2493
          %v2554 = vadd.f32 %v2376, %v2498
          %v2555 = vadd.f32 %v2377, %v2501
          %v2556 = vadd.f32 %v2378, %v2506
          %v2557 = vadd.f32 %v2379, %v2509
          %v2558 = vadd.f32 %v2380, %v2514
          %v2559 = vadd.f32 %v2381, %v2517
          %v2560 = vadd.f32 %v2382, %v2522
          %v2561 = vadd.f32 %v2383, %v2525
          %v2562 = vadd.f32 %v2384, %v2530
          %v2563 = vadd.f32 %v2385, %v2533
          %v2564 = vadd.f32 %v2386, %v2538
          %v2565 = vadd.f32 %v2387, %v2541
          %v2566 = vadd.f32 %v2388, %v2546
          %v2567 = vadd.f32 %v2389, %v2549
          %v2568 = vld [vmem:[#allocation3 + $0x8] sm:$0xff]
          %v2569 = vld [vmem:[#allocation3 + $0x10] sm:$0xff]
          %v2570 = vld [vmem:[#allocation3 + $0x18] sm:$0xff]
          %v2571 = vld [vmem:[#allocation3 + $0x20] sm:$0xff]
          %v2572 = vld [vmem:[#allocation3 + $0x28] sm:$0xff]
          %v2573 = vld [vmem:[#allocation3 + $0x30] sm:$0xff]
          %v2574 = vld [vmem:[#allocation3 + $0x38] sm:$0xff]
          %v2575 = vld [vmem:[#allocation3 + $0x40] sm:$0xff]
          %v2576 = vld [vmem:[#allocation3 + $0x48] sm:$0xff]
          %v2577 = vld [vmem:[#allocation3 + $0x50] sm:$0xff]
          %v2578 = vld [vmem:[#allocation3 + $0x58] sm:$0xff]
          %v2579 = vld [vmem:[#allocation3 + $0x60] sm:$0xff]
          %v2580 = vld [vmem:[#allocation3 + $0x68] sm:$0xff]
          %v2581 = vld [vmem:[#allocation3 + $0x70] sm:$0xff]
          %v2582 = vld [vmem:[#allocation3 + $0x78] sm:$0xff]
          %v2583 = vld [vmem:[#allocation3 + $0x80] sm:$0xff]
          %v2584 = vpack.c.bf16 %v2569, %v2568
          %v2585 = vpack.c.bf16 %v2571, %v2570
          %v2586 = vpack.c.bf16 %v2573, %v2572
          %v2587 = vpack.c.bf16 %v2575, %v2574
          %v2588 = vpack.c.bf16 %v2577, %v2576
          %v2589 = vpack.c.bf16 %v2579, %v2578
          %v2590 = vpack.c.bf16 %v2581, %v2580
          %v2591 = vpack.c.bf16 %v2583, %v2582
          %s2592 = scalar_lea.vmem %s8, 64
          %v2593 = vld [vmem:[%s2592] sm:$0xf]
          %v2594 = vld [vmem:[%s2592 + $0x4] sm:$0xf]
          %v2595 = vld [vmem:[%s2592 + $0x8] sm:$0xf]
          %v2596 = vld [vmem:[%s2592 + $0xc] sm:$0xf]
          %v2601 = vunpack.c.l.b16 %v2593
          %v2602 = vunpack.c.l.b16 %v2594
          %v2603 = vunpack.c.l.b16 %v2595
          %v2604 = vunpack.c.l.b16 %v2596
          %v2605 = vpack.c.b16 %v2602, %v2601
          %v2606 = vpack.c.b16 %v2604, %v2603
          %v2610 = vsel %vm609, %v2584, 0
          %v2613 = vsel %vm609, %v2585, 0
          %v2616 = vsel %vm609, %v2586, 0
          %v2619 = vsel %vm609, %v2587, 0
          %v2622 = vsel %vm609, %v2588, 0
          %v2625 = vsel %vm609, %v2589, 0
          %v2628 = vsel %vm609, %v2590, 0
          %v2631 = vsel %vm609, %v2591, 0
          %2633 = vmatprep.subr.bf16.mxu0 0
          %2634 = vmatpush1.bf16.msra.mxu0 %v2605
          %2635 = vmatprep.subr.bf16.mxu0 0
          %2636 = vmatpush1.bf16.msra.mxu0 %v2606
          %2637 = vmatprep.subr.bf16.mxu0 0
          %2638 = vmatpush1.bf16.msra.mxu0 0
          %2639 = vmatprep.subr.bf16.mxu0 0
          %2640 = vmatpush1.bf16.msra.mxu0 0
          %2641 = vmatprep.subr.bf16.mxu0 0
          %2642 = vmatpush1.bf16.msra.mxu0 0
          %2643 = vmatprep.subr.bf16.mxu0 0
          %2644 = vmatpush1.bf16.msra.mxu0 0
          %2645 = vmatprep.subr.bf16.mxu0 0
          %2646 = vmatpush1.bf16.msra.mxu0 0
          %2647 = vmatprep.subr.bf16.mxu0 0
          %2648 = vmatpush1.bf16.msra.mxu0 0
          %2649 = vmatprep.subr.bf16.mxu0 0
          %2650 = vmatpush1.bf16.msra.mxu0 0
          %2651 = vmatprep.subr.bf16.mxu0 0
          %2652 = vmatpush1.bf16.msra.mxu0 0
          %2653 = vmatprep.subr.bf16.mxu0 0
          %2654 = vmatpush1.bf16.msra.mxu0 0
          %2655 = vmatprep.subr.bf16.mxu0 0
          %2656 = vmatpush1.bf16.msra.mxu0 0
          %2657 = vmatprep.subr.bf16.mxu0 0
          %2658 = vmatpush1.bf16.msra.mxu0 0
          %2659 = vmatprep.subr.bf16.mxu0 0
          %2660 = vmatpush1.bf16.msra.mxu0 0
          %2661 = vmatprep.subr.bf16.mxu0 0
          %2662 = vmatpush1.bf16.msra.mxu0 0
          %2663 = vmatprep.subr.bf16.mxu0 0
          %2664 = vmatpush1.bf16.msra.mxu0 0
          %2665 = vmatprep.mubr.bf16.mxu0 0
          %2666 = vmatmul.mubr.bf16.gmra.mrb[0].mxu0 %v2610
          %v2667 = vpop.f32.mrb[0].mxu0
          %v2668 = vadd.f32 0.0, %v2667
          %v2669 = vpop.f32.mrb[0].mxu0
          %v2670 = vpop.f32.mrb[0].mxu0
          %v2671 = vadd.f32 0.0, %v2670
          %v2672 = vpop.f32.mrb[0].mxu0
          %2673 = vmatprep.mubr.bf16.mxu0 0
          %2674 = vmatmul.mubr.bf16.gmra.mrb[0].mxu0 %v2613
          %v2675 = vpop.f32.mrb[0].mxu0
          %v2676 = vadd.f32 0.0, %v2675
          %v2677 = vpop.f32.mrb[0].mxu0
          %v2678 = vpop.f32.mrb[0].mxu0
          %v2679 = vadd.f32 0.0, %v2678
          %v2680 = vpop.f32.mrb[0].mxu0
          %2681 = vmatprep.mubr.bf16.mxu0 0
          %2682 = vmatmul.mubr.bf16.gmra.mrb[0].mxu0 %v2616
          %v2683 = vpop.f32.mrb[0].mxu0
          %v2684 = vadd.f32 0.0, %v2683
          %v2685 = vpop.f32.mrb[0].mxu0
          %v2686 = vpop.f32.mrb[0].mxu0
          %v2687 = vadd.f32 0.0, %v2686
          %v2688 = vpop.f32.mrb[0].mxu0
          %2689 = vmatprep.mubr.bf16.mxu0 0
          %2690 = vmatmul.mubr.bf16.gmra.mrb[0].mxu0 %v2619
          %v2691 = vpop.f32.mrb[0].mxu0
          %v2692 = vadd.f32 0.0, %v2691
          %v2693 = vpop.f32.mrb[0].mxu0
          %v2694 = vpop.f32.mrb[0].mxu0
          %v2695 = vadd.f32 0.0, %v2694
          %v2696 = vpop.f32.mrb[0].mxu0
          %2697 = vmatprep.mubr.bf16.mxu0 0
          %2698 = vmatmul.mubr.bf16.gmra.mrb[0].mxu0 %v2622
          %v2699 = vpop.f32.mrb[0].mxu0
          %v2700 = vadd.f32 0.0, %v2699
          %v2701 = vpop.f32.mrb[0].mxu0
          %v2702 = vpop.f32.mrb[0].mxu0
          %v2703 = vadd.f32 0.0, %v2702
          %v2704 = vpop.f32.mrb[0].mxu0
          %2705 = vmatprep.mubr.bf16.mxu0 0
          %2706 = vmatmul.mubr.bf16.gmra.mrb[0].mxu0 %v2625
          %v2707 = vpop.f32.mrb[0].mxu0
          %v2708 = vadd.f32 0.0, %v2707
          %v2709 = vpop.f32.mrb[0].mxu0
          %v2710 = vpop.f32.mrb[0].mxu0
          %v2711 = vadd.f32 0.0, %v2710
          %v2712 = vpop.f32.mrb[0].mxu0
          %2713 = vmatprep.mubr.bf16.mxu0 0
          %2714 = vmatmul.mubr.bf16.gmra.mrb[0].mxu0 %v2628
          %v2715 = vpop.f32.mrb[0].mxu0
          %v2716 = vadd.f32 0.0, %v2715
          %v2717 = vpop.f32.mrb[0].mxu0
          %v2718 = vpop.f32.mrb[0].mxu0
          %v2719 = vadd.f32 0.0, %v2718
          %v2720 = vpop.f32.mrb[0].mxu0
          %2721 = vmatprep.mubr.bf16.mxu0 0
          %2722 = vmatmul.mubr.bf16.gmra.mrb[0].mxu0 %v2631
          %v2723 = vpop.f32.mrb[0].mxu0
          %v2724 = vadd.f32 0.0, %v2723
          %v2725 = vpop.f32.mrb[0].mxu0
          %v2726 = vpop.f32.mrb[0].mxu0
          %v2727 = vadd.f32 0.0, %v2726
          %v2728 = vpop.f32.mrb[0].mxu0
          %2729 = vdwg.mxu0
          %v2730 = vadd.f32 %v2552, %v2668
          %v2731 = vadd.f32 %v2553, %v2671
          %v2732 = vadd.f32 %v2554, %v2676
          %v2733 = vadd.f32 %v2555, %v2679
          %v2734 = vadd.f32 %v2556, %v2684
          %v2735 = vadd.f32 %v2557, %v2687
          %v2736 = vadd.f32 %v2558, %v2692
          %v2737 = vadd.f32 %v2559, %v2695
          %v2738 = vadd.f32 %v2560, %v2700
          %v2739 = vadd.f32 %v2561, %v2703
          %v2740 = vadd.f32 %v2562, %v2708
          %v2741 = vadd.f32 %v2563, %v2711
          %v2742 = vadd.f32 %v2564, %v2716
          %v2743 = vadd.f32 %v2565, %v2719
          %v2744 = vadd.f32 %v2566, %v2724
          %v2745 = vadd.f32 %v2567, %v2727
          %v2746 = vld [vmem:[#allocation3 + $0x9] sm:$0xff]
          %v2747 = vld [vmem:[#allocation3 + $0x11] sm:$0xff]
          %v2748 = vld [vmem:[#allocation3 + $0x19] sm:$0xff]
          %v2749 = vld [vmem:[#allocation3 + $0x21] sm:$0xff]
          %v2750 = vld [vmem:[#allocation3 + $0x29] sm:$0xff]
          %v2751 = vld [vmem:[#allocation3 + $0x31] sm:$0xff]
          %v2752 = vld [vmem:[#allocation3 + $0x39] sm:$0xff]
          %v2753 = vld [vmem:[#allocation3 + $0x41] sm:$0xff]
          %v2754 = vld [vmem:[#allocation3 + $0x49] sm:$0xff]
          %v2755 = vld [vmem:[#allocation3 + $0x51] sm:$0xff]
          %v2756 = vld [vmem:[#allocation3 + $0x59] sm:$0xff]
          %v2757 = vld [vmem:[#allocation3 + $0x61] sm:$0xff]
          %v2758 = vld [vmem:[#allocation3 + $0x69] sm:$0xff]
          %v2759 = vld [vmem:[#allocation3 + $0x71] sm:$0xff]
          %v2760 = vld [vmem:[#allocation3 + $0x79] sm:$0xff]
          %v2761 = vld [vmem:[#allocation3 + $0x81] sm:$0xff]
          %v2762 = vpack.c.bf16 %v2747, %v2746
          %v2763 = vpack.c.bf16 %v2749, %v2748
          %v2764 = vpack.c.bf16 %v2751, %v2750
          %v2765 = vpack.c.bf16 %v2753, %v2752
          %v2766 = vpack.c.bf16 %v2755, %v2754
          %v2767 = vpack.c.bf16 %v2757, %v2756
          %v2768 = vpack.c.bf16 %v2759, %v2758
          %v2769 = vpack.c.bf16 %v2761, %v2760
          %s2770 = scalar_lea.vmem %s8, 80
          %v2771 = vld [vmem:[%s2770] sm:$0xf]
          %v2772 = vld [vmem:[%s2770 + $0x4] sm:$0xf]
          %v2773 = vld [vmem:[%s2770 + $0x8] sm:$0xf]
          %v2774 = vld [vmem:[%s2770 + $0xc] sm:$0xf]
          %v2779 = vunpack.c.l.b16 %v2771
          %v2780 = vunpack.c.l.b16 %v2772
          %v2781 = vunpack.c.l.b16 %v2773
          %v2782 = vunpack.c.l.b16 %v2774
          %v2783 = vpack.c.b16 %v2780, %v2779
          %v2784 = vpack.c.b16 %v2782, %v2781
          %v2788 = vsel %vm609, %v2762, 0
          %v2791 = vsel %vm609, %v2763, 0
          %v2794 = vsel %vm609, %v2764, 0
          %v2797 = vsel %vm609, %v2765, 0
          %v2800 = vsel %vm609, %v2766, 0
          %v2803 = vsel %vm609, %v2767, 0
          %v2806 = vsel %vm609, %v2768, 0
          %v2809 = vsel %vm609, %v2769, 0
          %2811 = vmatprep.subr.bf16.mxu0 0
          %2812 = vmatpush1.bf16.msra.mxu0 %v2783
          %2813 = vmatprep.subr.bf16.mxu0 0
          %2814 = vmatpush1.bf16.msra.mxu0 %v2784
          %2815 = vmatprep.subr.bf16.mxu0 0
          %2816 = vmatpush1.bf16.msra.mxu0 0
          %2817 = vmatprep.subr.bf16.mxu0 0
          %2818 = vmatpush1.bf16.msra.mxu0 0
          %2819 = vmatprep.subr.bf16.mxu0 0
          %2820 = vmatpush1.bf16.msra.mxu0 0
          %2821 = vmatprep.subr.bf16.mxu0 0
          %2822 = vmatpush1.bf16.msra.mxu0 0
          %2823 = vmatprep.subr.bf16.mxu0 0
          %2824 = vmatpush1.bf16.msra.mxu0 0
          %2825 = vmatprep.subr.bf16.mxu0 0
          %2826 = vmatpush1.bf16.msra.mxu0 0
          %2827 = vmatprep.subr.bf16.mxu0 0
          %2828 = vmatpush1.bf16.msra.mxu0 0
          %2829 = vmatprep.subr.bf16.mxu0 0
          %2830 = vmatpush1.bf16.msra.mxu0 0
          %2831 = vmatprep.subr.bf16.mxu0 0
          %2832 = vmatpush1.bf16.msra.mxu0 0
          %2833 = vmatprep.subr.bf16.mxu0 0
          %2834 = vmatpush1.bf16.msra.mxu0 0
          %2835 = vmatprep.subr.bf16.mxu0 0
          %2836 = vmatpush1.bf16.msra.mxu0 0
          %2837 = vmatprep.subr.bf16.mxu0 0
          %2838 = vmatpush1.bf16.msra.mxu0 0
          %2839 = vmatprep.subr.bf16.mxu0 0
          %2840 = vmatpush1.bf16.msra.mxu0 0
          %2841 = vmatprep.subr.bf16.mxu0 0
          %2842 = vmatpush1.bf16.msra.mxu0 0
          %2843 = vmatprep.mubr.bf16.mxu0 0
          %2844 = vmatmul.mubr.bf16.gmra.mrb[0].mxu0 %v2788
          %v2845 = vpop.f32.mrb[0].mxu0
          %v2846 = vadd.f32 0.0, %v2845
          %v2847 = vpop.f32.mrb[0].mxu0
          %v2848 = vpop.f32.mrb[0].mxu0
          %v2849 = vadd.f32 0.0, %v2848
          %v2850 = vpop.f32.mrb[0].mxu0
          %2851 = vmatprep.mubr.bf16.mxu0 0
          %2852 = vmatmul.mubr.bf16.gmra.mrb[0].mxu0 %v2791
          %v2853 = vpop.f32.mrb[0].mxu0
          %v2854 = vadd.f32 0.0, %v2853
          %v2855 = vpop.f32.mrb[0].mxu0
          %v2856 = vpop.f32.mrb[0].mxu0
          %v2857 = vadd.f32 0.0, %v2856
          %v2858 = vpop.f32.mrb[0].mxu0
          %2859 = vmatprep.mubr.bf16.mxu0 0
          %2860 = vmatmul.mubr.bf16.gmra.mrb[0].mxu0 %v2794
          %v2861 = vpop.f32.mrb[0].mxu0
          %v2862 = vadd.f32 0.0, %v2861
          %v2863 = vpop.f32.mrb[0].mxu0
          %v2864 = vpop.f32.mrb[0].mxu0
          %v2865 = vadd.f32 0.0, %v2864
          %v2866 = vpop.f32.mrb[0].mxu0
          %2867 = vmatprep.mubr.bf16.mxu0 0
          %2868 = vmatmul.mubr.bf16.gmra.mrb[0].mxu0 %v2797
          %v2869 = vpop.f32.mrb[0].mxu0
          %v2870 = vadd.f32 0.0, %v2869
          %v2871 = vpop.f32.mrb[0].mxu0
          %v2872 = vpop.f32.mrb[0].mxu0
          %v2873 = vadd.f32 0.0, %v2872
          %v2874 = vpop.f32.mrb[0].mxu0
          %2875 = vmatprep.mubr.bf16.mxu0 0
          %2876 = vmatmul.mubr.bf16.gmra.mrb[0].mxu0 %v2800
          %v2877 = vpop.f32.mrb[0].mxu0
          %v2878 = vadd.f32 0.0, %v2877
          %v2879 = vpop.f32.mrb[0].mxu0
          %v2880 = vpop.f32.mrb[0].mxu0
          %v2881 = vadd.f32 0.0, %v2880
          %v2882 = vpop.f32.mrb[0].mxu0
          %2883 = vmatprep.mubr.bf16.mxu0 0
          %2884 = vmatmul.mubr.bf16.gmra.mrb[0].mxu0 %v2803
          %v2885 = vpop.f32.mrb[0].mxu0
          %v2886 = vadd.f32 0.0, %v2885
          %v2887 = vpop.f32.mrb[0].mxu0
          %v2888 = vpop.f32.mrb[0].mxu0
          %v2889 = vadd.f32 0.0, %v2888
          %v2890 = vpop.f32.mrb[0].mxu0
          %2891 = vmatprep.mubr.bf16.mxu0 0
          %2892 = vmatmul.mubr.bf16.gmra.mrb[0].mxu0 %v2806
          %v2893 = vpop.f32.mrb[0].mxu0
          %v2894 = vadd.f32 0.0, %v2893
          %v2895 = vpop.f32.mrb[0].mxu0
          %v2896 = vpop.f32.mrb[0].mxu0
          %v2897 = vadd.f32 0.0, %v2896
          %v2898 = vpop.f32.mrb[0].mxu0
          %2899 = vmatprep.mubr.bf16.mxu0 0
          %2900 = vmatmul.mubr.bf16.gmra.mrb[0].mxu0 %v2809
          %v2901 = vpop.f32.mrb[0].mxu0
          %v2902 = vadd.f32 0.0, %v2901
          %v2903 = vpop.f32.mrb[0].mxu0
          %v2904 = vpop.f32.mrb[0].mxu0
          %v2905 = vadd.f32 0.0, %v2904
          %v2906 = vpop.f32.mrb[0].mxu0
          %2907 = vdwg.mxu0
          %v2908 = vadd.f32 %v2730, %v2846
          %v2909 = vadd.f32 %v2731, %v2849
          %v2910 = vadd.f32 %v2732, %v2854
          %v2911 = vadd.f32 %v2733, %v2857
          %v2912 = vadd.f32 %v2734, %v2862
          %v2913 = vadd.f32 %v2735, %v2865
          %v2914 = vadd.f32 %v2736, %v2870
          %v2915 = vadd.f32 %v2737, %v2873
          %v2916 = vadd.f32 %v2738, %v2878
          %v2917 = vadd.f32 %v2739, %v2881
          %v2918 = vadd.f32 %v2740, %v2886
          %v2919 = vadd.f32 %v2741, %v2889
          %v2920 = vadd.f32 %v2742, %v2894
          %v2921 = vadd.f32 %v2743, %v2897
          %v2922 = vadd.f32 %v2744, %v2902
          %v2923 = vadd.f32 %v2745, %v2905
          %v2924 = vld [vmem:[#allocation3 + $0xa] sm:$0xff]
          %v2925 = vld [vmem:[#allocation3 + $0x12] sm:$0xff]
          %v2926 = vld [vmem:[#allocation3 + $0x1a] sm:$0xff]
          %v2927 = vld [vmem:[#allocation3 + $0x22] sm:$0xff]
          %v2928 = vld [vmem:[#allocation3 + $0x2a] sm:$0xff]
          %v2929 = vld [vmem:[#allocation3 + $0x32] sm:$0xff]
          %v2930 = vld [vmem:[#allocation3 + $0x3a] sm:$0xff]
          %v2931 = vld [vmem:[#allocation3 + $0x42] sm:$0xff]
          %v2932 = vld [vmem:[#allocation3 + $0x4a] sm:$0xff]
          %v2933 = vld [vmem:[#allocation3 + $0x52] sm:$0xff]
          %v2934 = vld [vmem:[#allocation3 + $0x5a] sm:$0xff]
          %v2935 = vld [vmem:[#allocation3 + $0x62] sm:$0xff]
          %v2936 = vld [vmem:[#allocation3 + $0x6a] sm:$0xff]
          %v2937 = vld [vmem:[#allocation3 + $0x72] sm:$0xff]
          %v2938 = vld [vmem:[#allocation3 + $0x7a] sm:$0xff]
          %v2939 = vld [vmem:[#allocation3 + $0x82] sm:$0xff]
          %v2940 = vpack.c.bf16 %v2925, %v2924
          %v2941 = vpack.c.bf16 %v2927, %v2926
          %v2942 = vpack.c.bf16 %v2929, %v2928
          %v2943 = vpack.c.bf16 %v2931, %v2930
          %v2944 = vpack.c.bf16 %v2933, %v2932
          %v2945 = vpack.c.bf16 %v2935, %v2934
          %v2946 = vpack.c.bf16 %v2937, %v2936
          %v2947 = vpack.c.bf16 %v2939, %v2938
          %s2948 = scalar_lea.vmem %s8, 96
          %v2949 = vld [vmem:[%s2948] sm:$0xf]
          %v2950 = vld [vmem:[%s2948 + $0x4] sm:$0xf]
          %v2951 = vld [vmem:[%s2948 + $0x8] sm:$0xf]
          %v2952 = vld [vmem:[%s2948 + $0xc] sm:$0xf]
          %v2957 = vunpack.c.l.b16 %v2949
          %v2958 = vunpack.c.l.b16 %v2950
          %v2959 = vunpack.c.l.b16 %v2951
          %v2960 = vunpack.c.l.b16 %v2952
          %v2961 = vpack.c.b16 %v2958, %v2957
          %v2962 = vpack.c.b16 %v2960, %v2959
          %v2966 = vsel %vm609, %v2940, 0
          %v2969 = vsel %vm609, %v2941, 0
          %v2972 = vsel %vm609, %v2942, 0
          %v2975 = vsel %vm609, %v2943, 0
          %v2978 = vsel %vm609, %v2944, 0
          %v2981 = vsel %vm609, %v2945, 0
          %v2984 = vsel %vm609, %v2946, 0
          %v2987 = vsel %vm609, %v2947, 0
          %2989 = vmatprep.subr.bf16.mxu0 0
          %2990 = vmatpush1.bf16.msra.mxu0 %v2961
          %2991 = vmatprep.subr.bf16.mxu0 0
          %2992 = vmatpush1.bf16.msra.mxu0 %v2962
          %2993 = vmatprep.subr.bf16.mxu0 0
          %2994 = vmatpush1.bf16.msra.mxu0 0
          %2995 = vmatprep.subr.bf16.mxu0 0
          %2996 = vmatpush1.bf16.msra.mxu0 0
          %2997 = vmatprep.subr.bf16.mxu0 0
          %2998 = vmatpush1.bf16.msra.mxu0 0
          %2999 = vmatprep.subr.bf16.mxu0 0
          %3000 = vmatpush1.bf16.msra.mxu0 0
          %3001 = vmatprep.subr.bf16.mxu0 0
          %3002 = vmatpush1.bf16.msra.mxu0 0
          %3003 = vmatprep.subr.bf16.mxu0 0
          %3004 = vmatpush1.bf16.msra.mxu0 0
          %3005 = vmatprep.subr.bf16.mxu0 0
          %3006 = vmatpush1.bf16.msra.mxu0 0
          %3007 = vmatprep.subr.bf16.mxu0 0
          %3008 = vmatpush1.bf16.msra.mxu0 0
          %3009 = vmatprep.subr.bf16.mxu0 0
          %3010 = vmatpush1.bf16.msra.mxu0 0
          %3011 = vmatprep.subr.bf16.mxu0 0
          %3012 = vmatpush1.bf16.msra.mxu0 0
          %3013 = vmatprep.subr.bf16.mxu0 0
          %3014 = vmatpush1.bf16.msra.mxu0 0
          %3015 = vmatprep.subr.bf16.mxu0 0
          %3016 = vmatpush1.bf16.msra.mxu0 0
          %3017 = vmatprep.subr.bf16.mxu0 0
          %3018 = vmatpush1.bf16.msra.mxu0 0
          %3019 = vmatprep.subr.bf16.mxu0 0
          %3020 = vmatpush1.bf16.msra.mxu0 0
          %3021 = vmatprep.mubr.bf16.mxu0 0
          %3022 = vmatmul.mubr.bf16.gmra.mrb[0].mxu0 %v2966
          %v3023 = vpop.f32.mrb[0].mxu0
          %v3024 = vadd.f32 0.0, %v3023
          %v3025 = vpop.f32.mrb[0].mxu0
          %v3026 = vpop.f32.mrb[0].mxu0
          %v3027 = vadd.f32 0.0, %v3026
          %v3028 = vpop.f32.mrb[0].mxu0
          %3029 = vmatprep.mubr.bf16.mxu0 0
          %3030 = vmatmul.mubr.bf16.gmra.mrb[0].mxu0 %v2969
          %v3031 = vpop.f32.mrb[0].mxu0
          %v3032 = vadd.f32 0.0, %v3031
          %v3033 = vpop.f32.mrb[0].mxu0
          %v3034 = vpop.f32.mrb[0].mxu0
          %v3035 = vadd.f32 0.0, %v3034
          %v3036 = vpop.f32.mrb[0].mxu0
          %3037 = vmatprep.mubr.bf16.mxu0 0
          %3038 = vmatmul.mubr.bf16.gmra.mrb[0].mxu0 %v2972
          %v3039 = vpop.f32.mrb[0].mxu0
          %v3040 = vadd.f32 0.0, %v3039
          %v3041 = vpop.f32.mrb[0].mxu0
          %v3042 = vpop.f32.mrb[0].mxu0
          %v3043 = vadd.f32 0.0, %v3042
          %v3044 = vpop.f32.mrb[0].mxu0
          %3045 = vmatprep.mubr.bf16.mxu0 0
          %3046 = vmatmul.mubr.bf16.gmra.mrb[0].mxu0 %v2975
          %v3047 = vpop.f32.mrb[0].mxu0
          %v3048 = vadd.f32 0.0, %v3047
          %v3049 = vpop.f32.mrb[0].mxu0
          %v3050 = vpop.f32.mrb[0].mxu0
          %v3051 = vadd.f32 0.0, %v3050
          %v3052 = vpop.f32.mrb[0].mxu0
          %3053 = vmatprep.mubr.bf16.mxu0 0
          %3054 = vmatmul.mubr.bf16.gmra.mrb[0].mxu0 %v2978
          %v3055 = vpop.f32.mrb[0].mxu0
          %v3056 = vadd.f32 0.0, %v3055
          %v3057 = vpop.f32.mrb[0].mxu0
          %v3058 = vpop.f32.mrb[0].mxu0
          %v3059 = vadd.f32 0.0, %v3058
          %v3060 = vpop.f32.mrb[0].mxu0
          %3061 = vmatprep.mubr.bf16.mxu0 0
          %3062 = vmatmul.mubr.bf16.gmra.mrb[0].mxu0 %v2981
          %v3063 = vpop.f32.mrb[0].mxu0
          %v3064 = vadd.f32 0.0, %v3063
          %v3065 = vpop.f32.mrb[0].mxu0
          %v3066 = vpop.f32.mrb[0].mxu0
          %v3067 = vadd.f32 0.0, %v3066
          %v3068 = vpop.f32.mrb[0].mxu0
          %3069 = vmatprep.mubr.bf16.mxu0 0
          %3070 = vmatmul.mubr.bf16.gmra.mrb[0].mxu0 %v2984
          %v3071 = vpop.f32.mrb[0].mxu0
          %v3072 = vadd.f32 0.0, %v3071
          %v3073 = vpop.f32.mrb[0].mxu0
          %v3074 = vpop.f32.mrb[0].mxu0
          %v3075 = vadd.f32 0.0, %v3074
          %v3076 = vpop.f32.mrb[0].mxu0
          %3077 = vmatprep.mubr.bf16.mxu0 0
          %3078 = vmatmul.mubr.bf16.gmra.mrb[0].mxu0 %v2987
          %v3079 = vpop.f32.mrb[0].mxu0
          %v3080 = vadd.f32 0.0, %v3079
          %v3081 = vpop.f32.mrb[0].mxu0
          %v3082 = vpop.f32.mrb[0].mxu0
          %v3083 = vadd.f32 0.0, %v3082
          %v3084 = vpop.f32.mrb[0].mxu0
          %3085 = vdwg.mxu0
          %v3086 = vadd.f32 %v2908, %v3024
          %v3087 = vadd.f32 %v2909, %v3027
          %v3088 = vadd.f32 %v2910, %v3032
          %v3089 = vadd.f32 %v2911, %v3035
          %v3090 = vadd.f32 %v2912, %v3040
          %v3091 = vadd.f32 %v2913, %v3043
          %v3092 = vadd.f32 %v2914, %v3048
          %v3093 = vadd.f32 %v2915, %v3051
          %v3094 = vadd.f32 %v2916, %v3056
          %v3095 = vadd.f32 %v2917, %v3059
          %v3096 = vadd.f32 %v2918, %v3064
          %v3097 = vadd.f32 %v2919, %v3067
          %v3098 = vadd.f32 %v2920, %v3072
          %v3099 = vadd.f32 %v2921, %v3075
          %v3100 = vadd.f32 %v2922, %v3080
          %v3101 = vadd.f32 %v2923, %v3083
          %v3102 = vld [vmem:[#allocation3 + $0xb] sm:$0xff]
          %v3103 = vld [vmem:[#allocation3 + $0x13] sm:$0xff]
          %v3104 = vld [vmem:[#allocation3 + $0x1b] sm:$0xff]
          %v3105 = vld [vmem:[#allocation3 + $0x23] sm:$0xff]
          %v3106 = vld [vmem:[#allocation3 + $0x2b] sm:$0xff]
          %v3107 = vld [vmem:[#allocation3 + $0x33] sm:$0xff]
          %v3108 = vld [vmem:[#allocation3 + $0x3b] sm:$0xff]
          %v3109 = vld [vmem:[#allocation3 + $0x43] sm:$0xff]
          %v3110 = vld [vmem:[#allocation3 + $0x4b] sm:$0xff]
          %v3111 = vld [vmem:[#allocation3 + $0x53] sm:$0xff]
          %v3112 = vld [vmem:[#allocation3 + $0x5b] sm:$0xff]
          %v3113 = vld [vmem:[#allocation3 + $0x63] sm:$0xff]
          %v3114 = vld [vmem:[#allocation3 + $0x6b] sm:$0xff]
          %v3115 = vld [vmem:[#allocation3 + $0x73] sm:$0xff]
          %v3116 = vld [vmem:[#allocation3 + $0x7b] sm:$0xff]
          %v3117 = vld [vmem:[#allocation3 + $0x83] sm:$0xff]
          %v3118 = vpack.c.bf16 %v3103, %v3102
          %v3119 = vpack.c.bf16 %v3105, %v3104
          %v3120 = vpack.c.bf16 %v3107, %v3106
          %v3121 = vpack.c.bf16 %v3109, %v3108
          %v3122 = vpack.c.bf16 %v3111, %v3110
          %v3123 = vpack.c.bf16 %v3113, %v3112
          %v3124 = vpack.c.bf16 %v3115, %v3114
          %v3125 = vpack.c.bf16 %v3117, %v3116
          %s3126 = scalar_lea.vmem %s8, 112
          %v3127 = vld [vmem:[%s3126] sm:$0xf]
          %v3128 = vld [vmem:[%s3126 + $0x4] sm:$0xf]
          %v3129 = vld [vmem:[%s3126 + $0x8] sm:$0xf]
          %v3130 = vld [vmem:[%s3126 + $0xc] sm:$0xf]
          %v3135 = vunpack.c.l.b16 %v3127
          %v3136 = vunpack.c.l.b16 %v3128
          %v3137 = vunpack.c.l.b16 %v3129
          %v3138 = vunpack.c.l.b16 %v3130
          %v3139 = vpack.c.b16 %v3136, %v3135
          %v3140 = vpack.c.b16 %v3138, %v3137
          %v3144 = vsel %vm609, %v3118, 0
          %v3147 = vsel %vm609, %v3119, 0
          %v3150 = vsel %vm609, %v3120, 0
          %v3153 = vsel %vm609, %v3121, 0
          %v3156 = vsel %vm609, %v3122, 0
          %v3159 = vsel %vm609, %v3123, 0
          %v3162 = vsel %vm609, %v3124, 0
          %v3165 = vsel %vm609, %v3125, 0
          %3167 = vmatprep.subr.bf16.mxu0 0
          %3168 = vmatpush1.bf16.msra.mxu0 %v3139
          %3169 = vmatprep.subr.bf16.mxu0 0
          %3170 = vmatpush1.bf16.msra.mxu0 %v3140
          %3171 = vmatprep.subr.bf16.mxu0 0
          %3172 = vmatpush1.bf16.msra.mxu0 0
          %3173 = vmatprep.subr.bf16.mxu0 0
          %3174 = vmatpush1.bf16.msra.mxu0 0
          %3175 = vmatprep.subr.bf16.mxu0 0
          %3176 = vmatpush1.bf16.msra.mxu0 0
          %3177 = vmatprep.subr.bf16.mxu0 0
          %3178 = vmatpush1.bf16.msra.mxu0 0
          %3179 = vmatprep.subr.bf16.mxu0 0
          %3180 = vmatpush1.bf16.msra.mxu0 0
          %3181 = vmatprep.subr.bf16.mxu0 0
          %3182 = vmatpush1.bf16.msra.mxu0 0
          %3183 = vmatprep.subr.bf16.mxu0 0
          %3184 = vmatpush1.bf16.msra.mxu0 0
          %3185 = vmatprep.subr.bf16.mxu0 0
          %3186 = vmatpush1.bf16.msra.mxu0 0
          %3187 = vmatprep.subr.bf16.mxu0 0
          %3188 = vmatpush1.bf16.msra.mxu0 0
          %3189 = vmatprep.subr.bf16.mxu0 0
          %3190 = vmatpush1.bf16.msra.mxu0 0
          %3191 = vmatprep.subr.bf16.mxu0 0
          %3192 = vmatpush1.bf16.msra.mxu0 0
          %3193 = vmatprep.subr.bf16.mxu0 0
          %3194 = vmatpush1.bf16.msra.mxu0 0
          %3195 = vmatprep.subr.bf16.mxu0 0
          %3196 = vmatpush1.bf16.msra.mxu0 0
          %3197 = vmatprep.subr.bf16.mxu0 0
          %3198 = vmatpush1.bf16.msra.mxu0 0
          %3199 = vmatprep.mubr.bf16.mxu0 0
          %3200 = vmatmul.mubr.bf16.gmra.mrb[0].mxu0 %v3144
          %v3201 = vpop.f32.mrb[0].mxu0
          %v3202 = vadd.f32 0.0, %v3201
          %v3203 = vpop.f32.mrb[0].mxu0
          %v3204 = vpop.f32.mrb[0].mxu0
          %v3205 = vadd.f32 0.0, %v3204
          %v3206 = vpop.f32.mrb[0].mxu0
          %3207 = vmatprep.mubr.bf16.mxu0 0
          %3208 = vmatmul.mubr.bf16.gmra.mrb[0].mxu0 %v3147
          %v3209 = vpop.f32.mrb[0].mxu0
          %v3210 = vadd.f32 0.0, %v3209
          %v3211 = vpop.f32.mrb[0].mxu0
          %v3212 = vpop.f32.mrb[0].mxu0
          %v3213 = vadd.f32 0.0, %v3212
          %v3214 = vpop.f32.mrb[0].mxu0
          %3215 = vmatprep.mubr.bf16.mxu0 0
          %3216 = vmatmul.mubr.bf16.gmra.mrb[0].mxu0 %v3150
          %v3217 = vpop.f32.mrb[0].mxu0
          %v3218 = vadd.f32 0.0, %v3217
          %v3219 = vpop.f32.mrb[0].mxu0
          %v3220 = vpop.f32.mrb[0].mxu0
          %v3221 = vadd.f32 0.0, %v3220
          %v3222 = vpop.f32.mrb[0].mxu0
          %3223 = vmatprep.mubr.bf16.mxu0 0
          %3224 = vmatmul.mubr.bf16.gmra.mrb[0].mxu0 %v3153
          %v3225 = vpop.f32.mrb[0].mxu0
          %v3226 = vadd.f32 0.0, %v3225
          %v3227 = vpop.f32.mrb[0].mxu0
          %v3228 = vpop.f32.mrb[0].mxu0
          %v3229 = vadd.f32 0.0, %v3228
          %v3230 = vpop.f32.mrb[0].mxu0
          %3231 = vmatprep.mubr.bf16.mxu0 0
          %3232 = vmatmul.mubr.bf16.gmra.mrb[0].mxu0 %v3156
          %v3233 = vpop.f32.mrb[0].mxu0
          %v3234 = vadd.f32 0.0, %v3233
          %v3235 = vpop.f32.mrb[0].mxu0
          %v3236 = vpop.f32.mrb[0].mxu0
          %v3237 = vadd.f32 0.0, %v3236
          %v3238 = vpop.f32.mrb[0].mxu0
          %3239 = vmatprep.mubr.bf16.mxu0 0
          %3240 = vmatmul.mubr.bf16.gmra.mrb[0].mxu0 %v3159
          %v3241 = vpop.f32.mrb[0].mxu0
          %v3242 = vadd.f32 0.0, %v3241
          %v3243 = vpop.f32.mrb[0].mxu0
          %v3244 = vpop.f32.mrb[0].mxu0
          %v3245 = vadd.f32 0.0, %v3244
          %v3246 = vpop.f32.mrb[0].mxu0
          %3247 = vmatprep.mubr.bf16.mxu0 0
          %3248 = vmatmul.mubr.bf16.gmra.mrb[0].mxu0 %v3162
          %v3249 = vpop.f32.mrb[0].mxu0
          %v3250 = vadd.f32 0.0, %v3249
          %v3251 = vpop.f32.mrb[0].mxu0
          %v3252 = vpop.f32.mrb[0].mxu0
          %v3253 = vadd.f32 0.0, %v3252
          %v3254 = vpop.f32.mrb[0].mxu0
          %3255 = vmatprep.mubr.bf16.mxu0 0
          %3256 = vmatmul.mubr.bf16.gmra.mrb[0].mxu0 %v3165
          %v3257 = vpop.f32.mrb[0].mxu0
          %v3258 = vadd.f32 0.0, %v3257
          %v3259 = vpop.f32.mrb[0].mxu0
          %v3260 = vpop.f32.mrb[0].mxu0
          %v3261 = vadd.f32 0.0, %v3260
          %v3262 = vpop.f32.mrb[0].mxu0
          %3263 = vdwg.mxu0
          %v3264 = vadd.f32 %v3086, %v3202
          %v3265 = vadd.f32 %v3087, %v3205
          %v3266 = vadd.f32 %v3088, %v3210
          %v3267 = vadd.f32 %v3089, %v3213
          %v3268 = vadd.f32 %v3090, %v3218
          %v3269 = vadd.f32 %v3091, %v3221
          %v3270 = vadd.f32 %v3092, %v3226
          %v3271 = vadd.f32 %v3093, %v3229
          %v3272 = vadd.f32 %v3094, %v3234
          %v3273 = vadd.f32 %v3095, %v3237
          %v3274 = vadd.f32 %v3096, %v3242
          %v3275 = vadd.f32 %v3097, %v3245
          %v3276 = vadd.f32 %v3098, %v3250
          %v3277 = vadd.f32 %v3099, %v3253
          %v3278 = vadd.f32 %v3100, %v3258
          %v3279 = vadd.f32 %v3101, %v3261
          %v3280 = vld [vmem:[#allocation3 + $0xc] sm:$0xff]
          %v3281 = vld [vmem:[#allocation3 + $0x14] sm:$0xff]
          %v3282 = vld [vmem:[#allocation3 + $0x1c] sm:$0xff]
          %v3283 = vld [vmem:[#allocation3 + $0x24] sm:$0xff]
          %v3284 = vld [vmem:[#allocation3 + $0x2c] sm:$0xff]
          %v3285 = vld [vmem:[#allocation3 + $0x34] sm:$0xff]
          %v3286 = vld [vmem:[#allocation3 + $0x3c] sm:$0xff]
          %v3287 = vld [vmem:[#allocation3 + $0x44] sm:$0xff]
          %v3288 = vld [vmem:[#allocation3 + $0x4c] sm:$0xff]
          %v3289 = vld [vmem:[#allocation3 + $0x54] sm:$0xff]
          %v3290 = vld [vmem:[#allocation3 + $0x5c] sm:$0xff]
          %v3291 = vld [vmem:[#allocation3 + $0x64] sm:$0xff]
          %v3292 = vld [vmem:[#allocation3 + $0x6c] sm:$0xff]
          %v3293 = vld [vmem:[#allocation3 + $0x74] sm:$0xff]
          %v3294 = vld [vmem:[#allocation3 + $0x7c] sm:$0xff]
          %v3295 = vld [vmem:[#allocation3 + $0x84] sm:$0xff]
          %v3296 = vpack.c.bf16 %v3281, %v3280
          %v3297 = vpack.c.bf16 %v3283, %v3282
          %v3298 = vpack.c.bf16 %v3285, %v3284
          %v3299 = vpack.c.bf16 %v3287, %v3286
          %v3300 = vpack.c.bf16 %v3289, %v3288
          %v3301 = vpack.c.bf16 %v3291, %v3290
          %v3302 = vpack.c.bf16 %v3293, %v3292
          %v3303 = vpack.c.bf16 %v3295, %v3294
          %s3304 = scalar_lea.vmem %s8, 128
          %v3305 = vld [vmem:[%s3304] sm:$0xf]
          %v3306 = vld [vmem:[%s3304 + $0x4] sm:$0xf]
          %v3307 = vld [vmem:[%s3304 + $0x8] sm:$0xf]
          %v3308 = vld [vmem:[%s3304 + $0xc] sm:$0xf]
          %v3313 = vunpack.c.l.b16 %v3305
          %v3314 = vunpack.c.l.b16 %v3306
          %v3315 = vunpack.c.l.b16 %v3307
          %v3316 = vunpack.c.l.b16 %v3308
          %v3317 = vpack.c.b16 %v3314, %v3313
          %v3318 = vpack.c.b16 %v3316, %v3315
          %v3322 = vsel %vm609, %v3296, 0
          %v3325 = vsel %vm609, %v3297, 0
          %v3328 = vsel %vm609, %v3298, 0
          %v3331 = vsel %vm609, %v3299, 0
          %v3334 = vsel %vm609, %v3300, 0
          %v3337 = vsel %vm609, %v3301, 0
          %v3340 = vsel %vm609, %v3302, 0
          %v3343 = vsel %vm609, %v3303, 0
          %3345 = vmatprep.subr.bf16.mxu0 0
          %3346 = vmatpush1.bf16.msra.mxu0 %v3317
          %3347 = vmatprep.subr.bf16.mxu0 0
          %3348 = vmatpush1.bf16.msra.mxu0 %v3318
          %3349 = vmatprep.subr.bf16.mxu0 0
          %3350 = vmatpush1.bf16.msra.mxu0 0
          %3351 = vmatprep.subr.bf16.mxu0 0
          %3352 = vmatpush1.bf16.msra.mxu0 0
          %3353 = vmatprep.subr.bf16.mxu0 0
          %3354 = vmatpush1.bf16.msra.mxu0 0
          %3355 = vmatprep.subr.bf16.mxu0 0
          %3356 = vmatpush1.bf16.msra.mxu0 0
          %3357 = vmatprep.subr.bf16.mxu0 0
          %3358 = vmatpush1.bf16.msra.mxu0 0
          %3359 = vmatprep.subr.bf16.mxu0 0
          %3360 = vmatpush1.bf16.msra.mxu0 0
          %3361 = vmatprep.subr.bf16.mxu0 0
          %3362 = vmatpush1.bf16.msra.mxu0 0
          %3363 = vmatprep.subr.bf16.mxu0 0
          %3364 = vmatpush1.bf16.msra.mxu0 0
          %3365 = vmatprep.subr.bf16.mxu0 0
          %3366 = vmatpush1.bf16.msra.mxu0 0
          %3367 = vmatprep.subr.bf16.mxu0 0
          %3368 = vmatpush1.bf16.msra.mxu0 0
          %3369 = vmatprep.subr.bf16.mxu0 0
          %3370 = vmatpush1.bf16.msra.mxu0 0
          %3371 = vmatprep.subr.bf16.mxu0 0
          %3372 = vmatpush1.bf16.msra.mxu0 0
          %3373 = vmatprep.subr.bf16.mxu0 0
          %3374 = vmatpush1.bf16.msra.mxu0 0
          %3375 = vmatprep.subr.bf16.mxu0 0
          %3376 = vmatpush1.bf16.msra.mxu0 0
          %3377 = vmatprep.mubr.bf16.mxu0 0
          %3378 = vmatmul.mubr.bf16.gmra.mrb[0].mxu0 %v3322
          %v3379 = vpop.f32.mrb[0].mxu0
          %v3380 = vadd.f32 0.0, %v3379
          %v3381 = vpop.f32.mrb[0].mxu0
          %v3382 = vpop.f32.mrb[0].mxu0
          %v3383 = vadd.f32 0.0, %v3382
          %v3384 = vpop.f32.mrb[0].mxu0
          %3385 = vmatprep.mubr.bf16.mxu0 0
          %3386 = vmatmul.mubr.bf16.gmra.mrb[0].mxu0 %v3325
          %v3387 = vpop.f32.mrb[0].mxu0
          %v3388 = vadd.f32 0.0, %v3387
          %v3389 = vpop.f32.mrb[0].mxu0
          %v3390 = vpop.f32.mrb[0].mxu0
          %v3391 = vadd.f32 0.0, %v3390
          %v3392 = vpop.f32.mrb[0].mxu0
          %3393 = vmatprep.mubr.bf16.mxu0 0
          %3394 = vmatmul.mubr.bf16.gmra.mrb[0].mxu0 %v3328
          %v3395 = vpop.f32.mrb[0].mxu0
          %v3396 = vadd.f32 0.0, %v3395
          %v3397 = vpop.f32.mrb[0].mxu0
          %v3398 = vpop.f32.mrb[0].mxu0
          %v3399 = vadd.f32 0.0, %v3398
          %v3400 = vpop.f32.mrb[0].mxu0
          %3401 = vmatprep.mubr.bf16.mxu0 0
          %3402 = vmatmul.mubr.bf16.gmra.mrb[0].mxu0 %v3331
          %v3403 = vpop.f32.mrb[0].mxu0
          %v3404 = vadd.f32 0.0, %v3403
          %v3405 = vpop.f32.mrb[0].mxu0
          %v3406 = vpop.f32.mrb[0].mxu0
          %v3407 = vadd.f32 0.0, %v3406
          %v3408 = vpop.f32.mrb[0].mxu0
          %3409 = vmatprep.mubr.bf16.mxu0 0
          %3410 = vmatmul.mubr.bf16.gmra.mrb[0].mxu0 %v3334
          %v3411 = vpop.f32.mrb[0].mxu0
          %v3412 = vadd.f32 0.0, %v3411
          %v3413 = vpop.f32.mrb[0].mxu0
          %v3414 = vpop.f32.mrb[0].mxu0
          %v3415 = vadd.f32 0.0, %v3414
          %v3416 = vpop.f32.mrb[0].mxu0
          %3417 = vmatprep.mubr.bf16.mxu0 0
          %3418 = vmatmul.mubr.bf16.gmra.mrb[0].mxu0 %v3337
          %v3419 = vpop.f32.mrb[0].mxu0
          %v3420 = vadd.f32 0.0, %v3419
          %v3421 = vpop.f32.mrb[0].mxu0
          %v3422 = vpop.f32.mrb[0].mxu0
          %v3423 = vadd.f32 0.0, %v3422
          %v3424 = vpop.f32.mrb[0].mxu0
          %3425 = vmatprep.mubr.bf16.mxu0 0
          %3426 = vmatmul.mubr.bf16.gmra.mrb[0].mxu0 %v3340
          %v3427 = vpop.f32.mrb[0].mxu0
          %v3428 = vadd.f32 0.0, %v3427
          %v3429 = vpop.f32.mrb[0].mxu0
          %v3430 = vpop.f32.mrb[0].mxu0
          %v3431 = vadd.f32 0.0, %v3430
          %v3432 = vpop.f32.mrb[0].mxu0
          %3433 = vmatprep.mubr.bf16.mxu0 0
          %3434 = vmatmul.mubr.bf16.gmra.mrb[0].mxu0 %v3343
          %v3435 = vpop.f32.mrb[0].mxu0
          %v3436 = vadd.f32 0.0, %v3435
          %v3437 = vpop.f32.mrb[0].mxu0
          %v3438 = vpop.f32.mrb[0].mxu0
          %v3439 = vadd.f32 0.0, %v3438
          %v3440 = vpop.f32.mrb[0].mxu0
          %3441 = vdwg.mxu0
          %v3442 = vadd.f32 %v3264, %v3380
          %v3443 = vadd.f32 %v3265, %v3383
          %v3444 = vadd.f32 %v3266, %v3388
          %v3445 = vadd.f32 %v3267, %v3391
          %v3446 = vadd.f32 %v3268, %v3396
          %v3447 = vadd.f32 %v3269, %v3399
          %v3448 = vadd.f32 %v3270, %v3404
          %v3449 = vadd.f32 %v3271, %v3407
          %v3450 = vadd.f32 %v3272, %v3412
          %v3451 = vadd.f32 %v3273, %v3415
          %v3452 = vadd.f32 %v3274, %v3420
          %v3453 = vadd.f32 %v3275, %v3423
          %v3454 = vadd.f32 %v3276, %v3428
          %v3455 = vadd.f32 %v3277, %v3431
          %v3456 = vadd.f32 %v3278, %v3436
          %v3457 = vadd.f32 %v3279, %v3439
          %v3458 = vld [vmem:[%s9] sm:$0x1]
          %v3460 = vlaneseq
          %v3461 = vshrl.u32 %v3460, 7
          %v3462 = vsub.s32 0, %v3461
          %v3463 = vrot.slane %v3458, %v3462
          %v3465 = vadd.f32 %v3442, %v3463
          %v3466 = vadd.f32 %v3443, %v3463
          %v3467 = vadd.f32 %v3444, %v3463
          %v3468 = vadd.f32 %v3445, %v3463
          %v3469 = vadd.f32 %v3446, %v3463
          %v3470 = vadd.f32 %v3447, %v3463
          %v3471 = vadd.f32 %v3448, %v3463
          %v3472 = vadd.f32 %v3449, %v3463
          %v3473 = vadd.f32 %v3450, %v3463
          %v3474 = vadd.f32 %v3451, %v3463
          %v3475 = vadd.f32 %v3452, %v3463
          %v3476 = vadd.f32 %v3453, %v3463
          %v3477 = vadd.f32 %v3454, %v3463
          %v3478 = vadd.f32 %v3455, %v3463
          %v3479 = vadd.f32 %v3456, %v3463
          %v3480 = vadd.f32 %v3457, %v3463
          %v3481 = vmax.f32 %v3465, 0.0
          %v3482 = vmax.f32 %v3466, 0.0
          %v3483 = vmax.f32 %v3467, 0.0
          %v3484 = vmax.f32 %v3468, 0.0
          %v3485 = vmax.f32 %v3469, 0.0
          %v3486 = vmax.f32 %v3470, 0.0
          %v3487 = vmax.f32 %v3471, 0.0
          %v3488 = vmax.f32 %v3472, 0.0
          %v3489 = vmax.f32 %v3473, 0.0
          %v3490 = vmax.f32 %v3474, 0.0
          %v3491 = vmax.f32 %v3475, 0.0
          %v3492 = vmax.f32 %v3476, 0.0
          %v3493 = vmax.f32 %v3477, 0.0
          %v3494 = vmax.f32 %v3478, 0.0
          %v3495 = vmax.f32 %v3479, 0.0
          %v3496 = vmax.f32 %v3480, 0.0
          %v3497 = vpack.c.bf16 %v3482, %v3481
          %v3498 = vpack.c.bf16 %v3484, %v3483
          %v3499 = vpack.c.bf16 %v3486, %v3485
          %v3500 = vpack.c.bf16 %v3488, %v3487
          %v3501 = vpack.c.bf16 %v3490, %v3489
          %v3502 = vpack.c.bf16 %v3492, %v3491
          %v3503 = vpack.c.bf16 %v3494, %v3493
          %v3504 = vpack.c.bf16 %v3496, %v3495
          %v3505 = vld [vmem:[%s10] sm:$0xf]
          %v3506 = vld [vmem:[%s10 + $0x4] sm:$0xf]
          %v3507 = vld [vmem:[%s10 + $0x8] sm:$0xf]
          %v3508 = vld [vmem:[%s10 + $0xc] sm:$0xf]
          %v3509 = vld [vmem:[%s10 + $0x10] sm:$0xf]
          %v3510 = vld [vmem:[%s10 + $0x14] sm:$0xf]
          %v3511 = vld [vmem:[%s10 + $0x18] sm:$0xf]
          %v3512 = vld [vmem:[%s10 + $0x1c] sm:$0xf]
          %v3513 = vld [vmem:[%s11] sm:$0x1]
          %v3515 = vlaneseq
          %v3516 = vshrl.u32 %v3515, 7
          %v3517 = vsub.s32 0, %v3516
          %v3518 = vrot.slane %v3513, %v3517
          %v3528 = vunpack.c.l.b16 %v3505
          %v3529 = vunpack.c.l.b16 %v3506
          %v3530 = vunpack.c.l.b16 %v3507
          %v3531 = vunpack.c.l.b16 %v3508
          %v3532 = vunpack.c.l.b16 %v3509
          %v3533 = vunpack.c.l.b16 %v3510
          %v3534 = vunpack.c.l.b16 %v3511
          %v3535 = vunpack.c.l.b16 %v3512
          %v3536 = vpack.c.b16 %v3529, %v3528
          %v3537 = vpack.c.b16 %v3531, %v3530
          %v3538 = vpack.c.b16 %v3533, %v3532
          %v3539 = vpack.c.b16 %v3535, %v3534
          %vm3544 = vcmask 523264
          %v3546 = vsel %vm3544, %v3497, 0
          %v3549 = vsel %vm3544, %v3498, 0
          %v3552 = vsel %vm3544, %v3499, 0
          %v3555 = vsel %vm3544, %v3500, 0
          %v3558 = vsel %vm3544, %v3501, 0
          %v3561 = vsel %vm3544, %v3502, 0
          %v3564 = vsel %vm3544, %v3503, 0
          %v3567 = vsel %vm3544, %v3504, 0
          %3569 = vmatprep.subr.bf16.mxu0 0
          %3570 = vmatpush1.bf16.msra.mxu0 %v3536
          %3571 = vmatprep.subr.bf16.mxu0 0
          %3572 = vmatpush1.bf16.msra.mxu0 %v3537
          %3573 = vmatprep.subr.bf16.mxu0 0
          %3574 = vmatpush1.bf16.msra.mxu0 %v3538
          %3575 = vmatprep.subr.bf16.mxu0 0
          %3576 = vmatpush1.bf16.msra.mxu0 %v3539
          %3577 = vmatprep.subr.bf16.mxu0 0
          %3578 = vmatpush1.bf16.msra.mxu0 0
          %3579 = vmatprep.subr.bf16.mxu0 0
          %3580 = vmatpush1.bf16.msra.mxu0 0
          %3581 = vmatprep.subr.bf16.mxu0 0
          %3582 = vmatpush1.bf16.msra.mxu0 0
          %3583 = vmatprep.subr.bf16.mxu0 0
          %3584 = vmatpush1.bf16.msra.mxu0 0
          %3585 = vmatprep.subr.bf16.mxu0 0
          %3586 = vmatpush1.bf16.msra.mxu0 0
          %3587 = vmatprep.subr.bf16.mxu0 0
          %3588 = vmatpush1.bf16.msra.mxu0 0
          %3589 = vmatprep.subr.bf16.mxu0 0
          %3590 = vmatpush1.bf16.msra.mxu0 0
          %3591 = vmatprep.subr.bf16.mxu0 0
          %3592 = vmatpush1.bf16.msra.mxu0 0
          %3593 = vmatprep.subr.bf16.mxu0 0
          %3594 = vmatpush1.bf16.msra.mxu0 0
          %3595 = vmatprep.subr.bf16.mxu0 0
          %3596 = vmatpush1.bf16.msra.mxu0 0
          %3597 = vmatprep.subr.bf16.mxu0 0
          %3598 = vmatpush1.bf16.msra.mxu0 0
          %3599 = vmatprep.subr.bf16.mxu0 0
          %3600 = vmatpush1.bf16.msra.mxu0 0
          %3601 = vmatprep.mubr.bf16.mxu0 0
          %3602 = vmatmul.mubr.bf16.gmra.mrb[0].mxu0 %v3546
          %v3603 = vpop.f32.mrb[0].mxu0
          %v3604 = vadd.f32 %v3518, %v3603
          %v3605 = vpop.f32.mrb[0].mxu0
          %v3606 = vpop.f32.mrb[0].mxu0
          %v3607 = vadd.f32 %v3518, %v3606
          %v3608 = vpop.f32.mrb[0].mxu0
          %3609 = vmatprep.mubr.bf16.mxu0 0
          %3610 = vmatmul.mubr.bf16.gmra.mrb[0].mxu0 %v3549
          %v3611 = vpop.f32.mrb[0].mxu0
          %v3612 = vadd.f32 %v3518, %v3611
          %v3613 = vpop.f32.mrb[0].mxu0
          %v3614 = vpop.f32.mrb[0].mxu0
          %v3615 = vadd.f32 %v3518, %v3614
          %v3616 = vpop.f32.mrb[0].mxu0
          %3617 = vmatprep.mubr.bf16.mxu0 0
          %3618 = vmatmul.mubr.bf16.gmra.mrb[0].mxu0 %v3552
          %v3619 = vpop.f32.mrb[0].mxu0
          %v3620 = vadd.f32 %v3518, %v3619
          %v3621 = vpop.f32.mrb[0].mxu0
          %v3622 = vpop.f32.mrb[0].mxu0
          %v3623 = vadd.f32 %v3518, %v3622
          %v3624 = vpop.f32.mrb[0].mxu0
          %3625 = vmatprep.mubr.bf16.mxu0 0
          %3626 = vmatmul.mubr.bf16.gmra.mrb[0].mxu0 %v3555
          %v3627 = vpop.f32.mrb[0].mxu0
          %v3628 = vadd.f32 %v3518, %v3627
          %v3629 = vpop.f32.mrb[0].mxu0
          %v3630 = vpop.f32.mrb[0].mxu0
          %v3631 = vadd.f32 %v3518, %v3630
          %v3632 = vpop.f32.mrb[0].mxu0
          %3633 = vmatprep.mubr.bf16.mxu0 0
          %3634 = vmatmul.mubr.bf16.gmra.mrb[0].mxu0 %v3558
          %v3635 = vpop.f32.mrb[0].mxu0
          %v3636 = vadd.f32 %v3518, %v3635
          %v3637 = vpop.f32.mrb[0].mxu0
          %v3638 = vpop.f32.mrb[0].mxu0
          %v3639 = vadd.f32 %v3518, %v3638
          %v3640 = vpop.f32.mrb[0].mxu0
          %3641 = vmatprep.mubr.bf16.mxu0 0
          %3642 = vmatmul.mubr.bf16.gmra.mrb[0].mxu0 %v3561
          %v3643 = vpop.f32.mrb[0].mxu0
          %v3644 = vadd.f32 %v3518, %v3643
          %v3645 = vpop.f32.mrb[0].mxu0
          %v3646 = vpop.f32.mrb[0].mxu0
          %v3647 = vadd.f32 %v3518, %v3646
          %v3648 = vpop.f32.mrb[0].mxu0
          %3649 = vmatprep.mubr.bf16.mxu0 0
          %3650 = vmatmul.mubr.bf16.gmra.mrb[0].mxu0 %v3564
          %v3651 = vpop.f32.mrb[0].mxu0
          %v3652 = vadd.f32 %v3518, %v3651
          %v3653 = vpop.f32.mrb[0].mxu0
          %v3654 = vpop.f32.mrb[0].mxu0
          %v3655 = vadd.f32 %v3518, %v3654
          %v3656 = vpop.f32.mrb[0].mxu0
          %3657 = vmatprep.mubr.bf16.mxu0 0
          %3658 = vmatmul.mubr.bf16.gmra.mrb[0].mxu0 %v3567
          %v3659 = vpop.f32.mrb[0].mxu0
          %v3660 = vadd.f32 %v3518, %v3659
          %v3661 = vpop.f32.mrb[0].mxu0
          %v3662 = vpop.f32.mrb[0].mxu0
          %v3663 = vadd.f32 %v3518, %v3662
          %v3664 = vpop.f32.mrb[0].mxu0
          %3665 = vdwg.mxu0
          %v3666 = vadd.f32 %v3604, %v1855
          %v3667 = vadd.f32 %v3607, %v1856
          %v3668 = vadd.f32 %v3612, %v1857
          %v3669 = vadd.f32 %v3615, %v1858
          %v3670 = vadd.f32 %v3620, %v1859
          %v3671 = vadd.f32 %v3623, %v1860
          %v3672 = vadd.f32 %v3628, %v1861
          %v3673 = vadd.f32 %v3631, %v1862
          %v3674 = vadd.f32 %v3636, %v1863
          %v3675 = vadd.f32 %v3639, %v1864
          %v3676 = vadd.f32 %v3644, %v1865
          %v3677 = vadd.f32 %v3647, %v1866
          %v3678 = vadd.f32 %v3652, %v1867
          %v3679 = vadd.f32 %v3655, %v1868
          %v3680 = vadd.f32 %v3660, %v1869
          %v3681 = vadd.f32 %v3663, %v1870
          %v3682 = vld [vmem:[%s12] sm:$0x1]
          %v3683 = vld [vmem:[%s13] sm:$0x1]
          %v3684 = vsel %vm609, %v3666, 0.0
          %3685 = vadd.xlane.f32.xlu0 %v3684
          %v3686 = vpop.xlane.xlu0 %3685
          %v3687 = vsel %vm609, %v3667, 0.0
          %3688 = vadd.xlane.f32.xlu0 %v3687
          %v3689 = vpop.xlane.xlu0 %3688
          %v3690 = vsel %vm609, %v3668, 0.0
          %3691 = vadd.xlane.f32.xlu0 %v3690
          %v3692 = vpop.xlane.xlu0 %3691
          %v3693 = vsel %vm609, %v3669, 0.0
          %3694 = vadd.xlane.f32.xlu0 %v3693
          %v3695 = vpop.xlane.xlu0 %3694
          %v3696 = vsel %vm609, %v3670, 0.0
          %3697 = vadd.xlane.f32.xlu0 %v3696
          %v3698 = vpop.xlane.xlu0 %3697
          %v3699 = vsel %vm609, %v3671, 0.0
          %3700 = vadd.xlane.f32.xlu0 %v3699
          %v3701 = vpop.xlane.xlu0 %3700
          %v3702 = vsel %vm609, %v3672, 0.0
          %3703 = vadd.xlane.f32.xlu0 %v3702
          %v3704 = vpop.xlane.xlu0 %3703
          %v3705 = vsel %vm609, %v3673, 0.0
          %3706 = vadd.xlane.f32.xlu0 %v3705
          %v3707 = vpop.xlane.xlu0 %3706
          %v3708 = vsel %vm609, %v3674, 0.0
          %3709 = vadd.xlane.f32.xlu0 %v3708
          %v3710 = vpop.xlane.xlu0 %3709
          %v3711 = vsel %vm609, %v3675, 0.0
          %3712 = vadd.xlane.f32.xlu0 %v3711
          %v3713 = vpop.xlane.xlu0 %3712
          %v3714 = vsel %vm609, %v3676, 0.0
          %3715 = vadd.xlane.f32.xlu0 %v3714
          %v3716 = vpop.xlane.xlu0 %3715
          %v3717 = vsel %vm609, %v3677, 0.0
          %3718 = vadd.xlane.f32.xlu0 %v3717
          %v3719 = vpop.xlane.xlu0 %3718
          %v3720 = vsel %vm609, %v3678, 0.0
          %3721 = vadd.xlane.f32.xlu0 %v3720
          %v3722 = vpop.xlane.xlu0 %3721
          %v3723 = vsel %vm609, %v3679, 0.0
          %3724 = vadd.xlane.f32.xlu0 %v3723
          %v3725 = vpop.xlane.xlu0 %3724
          %v3726 = vsel %vm609, %v3680, 0.0
          %3727 = vadd.xlane.f32.xlu0 %v3726
          %v3728 = vpop.xlane.xlu0 %3727
          %v3729 = vsel %vm609, %v3681, 0.0
          %3730 = vadd.xlane.f32.xlu0 %v3729
          %v3731 = vpop.xlane.xlu0 %3730
          %v3732 = vmul.f32 %v3686, %v1650
          %v3733 = vmul.f32 %v3689, %v1650
          %v3734 = vmul.f32 %v3692, %v1650
          %v3735 = vmul.f32 %v3695, %v1650
          %v3736 = vmul.f32 %v3698, %v1650
          %v3737 = vmul.f32 %v3701, %v1650
          %v3738 = vmul.f32 %v3704, %v1650
          %v3739 = vmul.f32 %v3707, %v1650
          %v3740 = vmul.f32 %v3710, %v1650
          %v3741 = vmul.f32 %v3713, %v1650
          %v3742 = vmul.f32 %v3716, %v1650
          %v3743 = vmul.f32 %v3719, %v1650
          %v3744 = vmul.f32 %v3722, %v1650
          %v3745 = vmul.f32 %v3725, %v1650
          %v3746 = vmul.f32 %v3728, %v1650
          %v3747 = vmul.f32 %v3731, %v1650
          %v3748 = vsub.f32 %v3666, %v3732
          %v3749 = vsub.f32 %v3667, %v3733
          %v3750 = vsub.f32 %v3668, %v3734
          %v3751 = vsub.f32 %v3669, %v3735
          %v3752 = vsub.f32 %v3670, %v3736
          %v3753 = vsub.f32 %v3671, %v3737
          %v3754 = vsub.f32 %v3672, %v3738
          %v3755 = vsub.f32 %v3673, %v3739
          %v3756 = vsub.f32 %v3674, %v3740
          %v3757 = vsub.f32 %v3675, %v3741
          %v3758 = vsub.f32 %v3676, %v3742
          %v3759 = vsub.f32 %v3677, %v3743
          %v3760 = vsub.f32 %v3678, %v3744
          %v3761 = vsub.f32 %v3679, %v3745
          %v3762 = vsub.f32 %v3680, %v3746
          %v3763 = vsub.f32 %v3681, %v3747
          %v3764 = vmul.f32 %v3748, %v3748
          %v3765 = vmul.f32 %v3749, %v3749
          %v3766 = vmul.f32 %v3750, %v3750
          %v3767 = vmul.f32 %v3751, %v3751
          %v3768 = vmul.f32 %v3752, %v3752
          %v3769 = vmul.f32 %v3753, %v3753
          %v3770 = vmul.f32 %v3754, %v3754
          %v3771 = vmul.f32 %v3755, %v3755
          %v3772 = vmul.f32 %v3756, %v3756
          %v3773 = vmul.f32 %v3757, %v3757
          %v3774 = vmul.f32 %v3758, %v3758
          %v3775 = vmul.f32 %v3759, %v3759
          %v3776 = vmul.f32 %v3760, %v3760
          %v3777 = vmul.f32 %v3761, %v3761
          %v3778 = vmul.f32 %v3762, %v3762
          %v3779 = vmul.f32 %v3763, %v3763
          %v3780 = vsel %vm609, %v3764, 0.0
          %3781 = vadd.xlane.f32.xlu0 %v3780
          %v3782 = vpop.xlane.xlu0 %3781
          %v3783 = vsel %vm609, %v3765, 0.0
          %3784 = vadd.xlane.f32.xlu0 %v3783
          %v3785 = vpop.xlane.xlu0 %3784
          %v3786 = vsel %vm609, %v3766, 0.0
          %3787 = vadd.xlane.f32.xlu0 %v3786
          %v3788 = vpop.xlane.xlu0 %3787
          %v3789 = vsel %vm609, %v3767, 0.0
          %3790 = vadd.xlane.f32.xlu0 %v3789
          %v3791 = vpop.xlane.xlu0 %3790
          %v3792 = vsel %vm609, %v3768, 0.0
          %3793 = vadd.xlane.f32.xlu0 %v3792
          %v3794 = vpop.xlane.xlu0 %3793
          %v3795 = vsel %vm609, %v3769, 0.0
          %3796 = vadd.xlane.f32.xlu0 %v3795
          %v3797 = vpop.xlane.xlu0 %3796
          %v3798 = vsel %vm609, %v3770, 0.0
          %3799 = vadd.xlane.f32.xlu0 %v3798
          %v3800 = vpop.xlane.xlu0 %3799
          %v3801 = vsel %vm609, %v3771, 0.0
          %3802 = vadd.xlane.f32.xlu0 %v3801
          %v3803 = vpop.xlane.xlu0 %3802
          %v3804 = vsel %vm609, %v3772, 0.0
          %3805 = vadd.xlane.f32.xlu0 %v3804
          %v3806 = vpop.xlane.xlu0 %3805
          %v3807 = vsel %vm609, %v3773, 0.0
          %3808 = vadd.xlane.f32.xlu0 %v3807
          %v3809 = vpop.xlane.xlu0 %3808
          %v3810 = vsel %vm609, %v3774, 0.0
          %3811 = vadd.xlane.f32.xlu0 %v3810
          %v3812 = vpop.xlane.xlu0 %3811
          %v3813 = vsel %vm609, %v3775, 0.0
          %3814 = vadd.xlane.f32.xlu0 %v3813
          %v3815 = vpop.xlane.xlu0 %3814
          %v3816 = vsel %vm609, %v3776, 0.0
          %3817 = vadd.xlane.f32.xlu0 %v3816
          %v3818 = vpop.xlane.xlu0 %3817
          %v3819 = vsel %vm609, %v3777, 0.0
          %3820 = vadd.xlane.f32.xlu0 %v3819
          %v3821 = vpop.xlane.xlu0 %3820
          %v3822 = vsel %vm609, %v3778, 0.0
          %3823 = vadd.xlane.f32.xlu0 %v3822
          %v3824 = vpop.xlane.xlu0 %3823
          %v3825 = vsel %vm609, %v3779, 0.0
          %3826 = vadd.xlane.f32.xlu0 %v3825
          %v3827 = vpop.xlane.xlu0 %3826
          %v3828 = vmul.f32 %v3782, %v1650
          %v3829 = vmul.f32 %v3785, %v1650
          %v3830 = vmul.f32 %v3788, %v1650
          %v3831 = vmul.f32 %v3791, %v1650
          %v3832 = vmul.f32 %v3794, %v1650
          %v3833 = vmul.f32 %v3797, %v1650
          %v3834 = vmul.f32 %v3800, %v1650
          %v3835 = vmul.f32 %v3803, %v1650
          %v3836 = vmul.f32 %v3806, %v1650
          %v3837 = vmul.f32 %v3809, %v1650
          %v3838 = vmul.f32 %v3812, %v1650
          %v3839 = vmul.f32 %v3815, %v1650
          %v3840 = vmul.f32 %v3818, %v1650
          %v3841 = vmul.f32 %v3821, %v1650
          %v3842 = vmul.f32 %v3824, %v1650
          %v3843 = vmul.f32 %v3827, %v1650
          %v3844 = vadd.f32 %v3828, 1e-05
          %v3845 = vadd.f32 %v3829, 1e-05
          %v3846 = vadd.f32 %v3830, 1e-05
          %v3847 = vadd.f32 %v3831, 1e-05
          %v3848 = vadd.f32 %v3832, 1e-05
          %v3849 = vadd.f32 %v3833, 1e-05
          %v3850 = vadd.f32 %v3834, 1e-05
          %v3851 = vadd.f32 %v3835, 1e-05
          %v3852 = vadd.f32 %v3836, 1e-05
          %v3853 = vadd.f32 %v3837, 1e-05
          %v3854 = vadd.f32 %v3838, 1e-05
          %v3855 = vadd.f32 %v3839, 1e-05
          %v3856 = vadd.f32 %v3840, 1e-05
          %v3857 = vadd.f32 %v3841, 1e-05
          %v3858 = vadd.f32 %v3842, 1e-05
          %v3859 = vadd.f32 %v3843, 1e-05
          %v3860 = vrsqrt.pop %v3844
          %v3861 = vrsqrt.pop %v3845
          %v3862 = vrsqrt.pop %v3846
          %v3863 = vrsqrt.pop %v3847
          %v3864 = vrsqrt.pop %v3848
          %v3865 = vrsqrt.pop %v3849
          %v3866 = vrsqrt.pop %v3850
          %v3867 = vrsqrt.pop %v3851
          %v3868 = vrsqrt.pop %v3852
          %v3869 = vrsqrt.pop %v3853
          %v3870 = vrsqrt.pop %v3854
          %v3871 = vrsqrt.pop %v3855
          %v3872 = vrsqrt.pop %v3856
          %v3873 = vrsqrt.pop %v3857
          %v3874 = vrsqrt.pop %v3858
          %v3875 = vrsqrt.pop %v3859
          %v3876 = vmul.f32 %v3748, %v3860
          %v3877 = vmul.f32 %v3749, %v3861
          %v3878 = vmul.f32 %v3750, %v3862
          %v3879 = vmul.f32 %v3751, %v3863
          %v3880 = vmul.f32 %v3752, %v3864
          %v3881 = vmul.f32 %v3753, %v3865
          %v3882 = vmul.f32 %v3754, %v3866
          %v3883 = vmul.f32 %v3755, %v3867
          %v3884 = vmul.f32 %v3756, %v3868
          %v3885 = vmul.f32 %v3757, %v3869
          %v3886 = vmul.f32 %v3758, %v3870
          %v3887 = vmul.f32 %v3759, %v3871
          %v3888 = vmul.f32 %v3760, %v3872
          %v3889 = vmul.f32 %v3761, %v3873
          %v3890 = vmul.f32 %v3762, %v3874
          %v3891 = vmul.f32 %v3763, %v3875
          %v3893 = vlaneseq
          %v3894 = vshrl.u32 %v3893, 7
          %v3895 = vsub.s32 0, %v3894
          %v3896 = vrot.slane %v3682, %v3895
          %v3898 = vmul.f32 %v3876, %v3896
          %v3899 = vmul.f32 %v3877, %v3896
          %v3900 = vmul.f32 %v3878, %v3896
          %v3901 = vmul.f32 %v3879, %v3896
          %v3902 = vmul.f32 %v3880, %v3896
          %v3903 = vmul.f32 %v3881, %v3896
          %v3904 = vmul.f32 %v3882, %v3896
          %v3905 = vmul.f32 %v3883, %v3896
          %v3906 = vmul.f32 %v3884, %v3896
          %v3907 = vmul.f32 %v3885, %v3896
          %v3908 = vmul.f32 %v3886, %v3896
          %v3909 = vmul.f32 %v3887, %v3896
          %v3910 = vmul.f32 %v3888, %v3896
          %v3911 = vmul.f32 %v3889, %v3896
          %v3912 = vmul.f32 %v3890, %v3896
          %v3913 = vmul.f32 %v3891, %v3896
          %v3915 = vlaneseq
          %v3916 = vshrl.u32 %v3915, 7
          %v3917 = vsub.s32 0, %v3916
          %v3918 = vrot.slane %v3683, %v3917
          %v3920 = vadd.f32 %v3898, %v3918
          %v3921 = vadd.f32 %v3899, %v3918
          %v3922 = vadd.f32 %v3900, %v3918
          %v3923 = vadd.f32 %v3901, %v3918
          %v3924 = vadd.f32 %v3902, %v3918
          %v3925 = vadd.f32 %v3903, %v3918
          %v3926 = vadd.f32 %v3904, %v3918
          %v3927 = vadd.f32 %v3905, %v3918
          %v3928 = vadd.f32 %v3906, %v3918
          %v3929 = vadd.f32 %v3907, %v3918
          %v3930 = vadd.f32 %v3908, %v3918
          %v3931 = vadd.f32 %v3909, %v3918
          %v3932 = vadd.f32 %v3910, %v3918
          %v3933 = vadd.f32 %v3911, %v3918
          %v3934 = vadd.f32 %v3912, %v3918
          %v3935 = vadd.f32 %v3913, %v3918
          %v3936 = vmul.f32 %v3920, %v1529
          %v3937 = vmul.f32 %v3921, %v1530
          %v3938 = vmul.f32 %v3922, %v1531
          %v3939 = vmul.f32 %v3923, %v1532
          %v3940 = vmul.f32 %v3924, %v1533
          %v3941 = vmul.f32 %v3925, %v1534
          %v3942 = vmul.f32 %v3926, %v1535
          %v3943 = vmul.f32 %v3927, %v1536
          %v3944 = vmul.f32 %v3928, %v1537
          %v3945 = vmul.f32 %v3929, %v1538
          %v3946 = vmul.f32 %v3930, %v1539
          %v3947 = vmul.f32 %v3931, %v1540
          %v3948 = vmul.f32 %v3932, %v1541
          %v3949 = vmul.f32 %v3933, %v1542
          %v3950 = vmul.f32 %v3934, %v1543
          %v3951 = vmul.f32 %v3935, %v1544
          %3952 = vst.msk [vmem:[%s553] sm:$0xff] %vm609, %v3936
          %3953 = vst.msk [vmem:[%s553 + $0x8] sm:$0xff] %vm609, %v3937
          %3954 = vst.msk [vmem:[%s553 + $0x10] sm:$0xff] %vm609, %v3938
          %3955 = vst.msk [vmem:[%s553 + $0x18] sm:$0xff] %vm609, %v3939
          %3956 = vst.msk [vmem:[%s553 + $0x20] sm:$0xff] %vm609, %v3940
          %3957 = vst.msk [vmem:[%s553 + $0x28] sm:$0xff] %vm609, %v3941
          %3958 = vst.msk [vmem:[%s553 + $0x30] sm:$0xff] %vm609, %v3942
          %3959 = vst.msk [vmem:[%s553 + $0x38] sm:$0xff] %vm609, %v3943
          %3960 = vst.msk [vmem:[%s553 + $0x40] sm:$0xff] %vm609, %v3944
          %3961 = vst.msk [vmem:[%s553 + $0x48] sm:$0xff] %vm609, %v3945
          %3962 = vst.msk [vmem:[%s553 + $0x50] sm:$0xff] %vm609, %v3946
          %3963 = vst.msk [vmem:[%s553 + $0x58] sm:$0xff] %vm609, %v3947
          %3964 = vst.msk [vmem:[%s553 + $0x60] sm:$0xff] %vm609, %v3948
          %3965 = vst.msk [vmem:[%s553 + $0x68] sm:$0xff] %vm609, %v3949
          %3966 = vst.msk [vmem:[%s553 + $0x70] sm:$0xff] %vm609, %v3950
          %3967 = vst.msk [vmem:[%s553 + $0x78] sm:$0xff] %vm609, %v3951
        $region80: #{tpu_custom_call.1} parent=71 // pred_fallthru
          _
        %p3968 = scmp.lt.s32.totalorder %s40, 1
        %s3969 = scalar_select %p3968, %s40, 1
        %s3970 = smul.addr %s3969, 16
        %s3971 = smul.addr %s3970, 8
        %s3972 = scalar_lea.vmem %s14, %s3971
        %s3973 = sand.u32 %s377, 1
        %s3974 = scalar_lea.sflag [#allocation7], %s3973
        %s3975 = sand.u32 %s377, 1
        %s3976 = smul.addr %s3975, 64
        %s3977 = scalar_lea.vmem [#allocation6], %s3976
        // Predicated region
        $region81: #{tpu_custom_call.1} parent=71 // pred_check
          %p3978 = pneg %p359
        $region82: #{tpu_custom_call.1} parent=71 // pred_check_branch
          %3980 = sbr.rel (%p3978) target = $region84
        $region83: #{tpu_custom_call.1} parent=71 // pred_region
          _
        $region84: #{tpu_custom_call.1} parent=71 // pred_fallthru
          _
        // Predicated region
        $region85: #{tpu_custom_call.1} parent=71 // pred_check
          %p3981 = pneg %p387
        $region86: #{tpu_custom_call.1} parent=71 // pred_check_branch
          %3983 = sbr.rel (%p3981) target = $region88
        $region87: #{tpu_custom_call.1} parent=71 // pred_region
          %s3985 = ssub.s32 1024, 1024
          %3986 = vsyncadd %s3974, %s3985
          %s3987 = smul.addr %s40, 16
          %s3988 = smul.addr %s41, 32
          %s3989 = sadd.s32 %s3987, %s3988
          %s3990 = smul.addr %s3989, 64
          %s3991 = scalar_lea.hbm %s15, %s3990
          %s3992 = sshll.u32 %s3977, 4
          %s3993 = int_to_ptr.vmem [resolvable:$true] %s3992
          %3998 = dma.vmem_to_hbm [thread:$0]  %s3993, 1024, %s3991, %s3974, 64, 64, 4
        $region88: #{tpu_custom_call.1} parent=71 // pred_fallthru
          _
      $region72: #{tpu_custom_call.1} parent=5 // pred_fallthru
        _
      %p3999 = scmp.le.s32.totalorder 2, %s31
      // Predicated region
      $region89: #{tpu_custom_call.1} parent=5 // pred_check
        %p4000 = pneg %p3999
      $region90: #{tpu_custom_call.1} parent=5 // pred_check_branch
        %4002 = sbr.rel (%p4000) target = $region92
      $region91: #{tpu_custom_call.1} parent=5 // pred_region
        %s4003 = ssub.s32 %s31, 2
        // Predicated region
        $region93: #{tpu_custom_call.1} parent=91 // pred_check
          %p4004 = pneg %p365
        $region94: #{tpu_custom_call.1} parent=91 // pred_check_branch
          %4006 = sbr.rel (%p4004) target = $region96
        $region95: #{tpu_custom_call.1} parent=91 // pred_region
          %p4007 = scmp.lt.s32.totalorder %s42, 1
          %s4008 = scalar_select %p4007, %s42, 1
          %s4009 = smul.addr %s4008, 16
          %s4010 = smul.addr %s4009, 8
          %s4011 = scalar_lea.vmem %s14, %s4010
        $region96: #{tpu_custom_call.1} parent=91 // pred_fallthru
          _
        // Predicated region
        $region97: #{tpu_custom_call.1} parent=91 // pred_check
          %p4012 = pneg %p393
        $region98: #{tpu_custom_call.1} parent=91 // pred_check_branch
          %4014 = sbr.rel (%p4012) target = $region100
        $region99: #{tpu_custom_call.1} parent=91 // pred_region
          %s4015 = sand.u32 %s378, 1
          %s4016 = scalar_lea.sflag [#allocation7], %s4015
          %s4017 = sand.u32 %s378, 1
          %s4018 = smul.addr %s4017, 64
          %s4019 = scalar_lea.vmem [#allocation6], %s4018
          %4020 = dma.done %s4016, 1024
        $region100: #{tpu_custom_call.1} parent=91 // pred_fallthru
          _
      $region92: #{tpu_custom_call.1} parent=5 // pred_fallthru
        _
    $region6: #{tpu_custom_call.1} parent=1 // loop_footer
      %s35 = sadd.s32 1, %s31
    $region7: #{tpu_custom_call.1} parent=1 // loop_footer_branch
      %30 = sbr.rel target = $region3
    $region8: #{tpu_custom_call.1} parent=1 // loop_exit
      _
    %4021 = vsyncpa [#allocation7], 1
    %s4022 = scalar_lea.sflag [#allocation7], 1
    %4023 = vsyncpa %s4022, 1

</llo_original>
